<compile_context>
chip_gen: v5e
topology: v5e:2x2
jax: 0.10.0
libtpu: 0.0.40
codegen_flags: <defaults>
</compile_context>

<pallas_src>
import jax
import jax.numpy as jnp
from jax.experimental import pallas as pl
from jax.experimental.pallas import tpu as pltpu


def se_scale_conv_kernel(se_ref, x_ref, w1_ref, b1_ref, w2_ref, o_ref):
    # se_ref: [48, 1]      f32   (squeezed SE features, column)
    # x_ref:  [1152, 49]   f32   (main feature map, rows = channels, cols = H*W)
    # w1_ref: [1152, 48]   f32   (conv2d63 weight, native [out, in] layout)
    # b1_ref: [1152, 1]    f32
    # w2_ref: [192, 1152]  bf16  (conv2d64 weight, native [out, in] layout)
    # o_ref:  [192, 49]    f32
    #
    # conv2d63 (1x1) + bias + sigmoid  -- kept in f32 (tiny; EUP sigmoid is ~free)
    s = jnp.dot(w1_ref[...], se_ref[...],
                preferred_element_type=jnp.float32) + b1_ref[...]      # [1152, 1]
    gate = jax.nn.sigmoid(s)                                           # [1152, 1] f32

    # broadcast-mul over spatial lanes (f32), then cast for the big bf16 matmul
    scaled = (x_ref[...] * gate).astype(jnp.bfloat16)                  # [1152, 49]

    # conv2d64 (1x1, no bias): bf16 x bf16 -> f32 accumulate on the MXU
    o_ref[...] = jnp.dot(w2_ref[...], scaled,
                         preferred_element_type=jnp.float32)           # [192, 49]


def module_forward(x189, x186, w1, b1, w2_bf16):
    """x189: [1,48,1,1], x186: [1,1152,H,W] (NCHW, N=1).
    w1: [1152,48] f32, b1: [1152] f32, w2_bf16: [192,1152] (bf16 at weight-load)."""
    n, c_mid, h, w = x186.shape
    assert n == 1
    c_in = w1.shape[1]
    c_out = w2_bf16.shape[0]
    hw = h * w

    # All of these are free, layout-preserving reshapes (no transposes).
    x_flat = x186.reshape(c_mid, hw)          # [1152, 49]
    se_col = x189.reshape(c_in, 1)            # [48, 1]
    b1_col = b1.reshape(c_mid, 1)             # [1152, 1]
    w2_bf16 = w2_bf16.astype(jnp.bfloat16)    # no-op if already bf16

    out_flat = pl.pallas_call(
        se_scale_conv_kernel,
        out_shape=jax.ShapeDtypeStruct((c_out, hw), jnp.float32),
        in_specs=[
            pl.BlockSpec(memory_space=pltpu.MemorySpace.VMEM),
            pl.BlockSpec(memory_space=pltpu.MemorySpace.VMEM),
            pl.BlockSpec(memory_space=pltpu.MemorySpace.VMEM),
            pl.BlockSpec(memory_space=pltpu.MemorySpace.VMEM),
            pl.BlockSpec(memory_space=pltpu.MemorySpace.VMEM),
        ],
        out_specs=pl.BlockSpec(memory_space=pltpu.MemorySpace.VMEM),
    )(se_col, x_flat, w1, b1_col, w2_bf16)

    # Free reshape back to NCHW.
    return out_flat.reshape(n, c_out, h, w)


if __name__ == "__main__":
    key = jax.random.PRNGKey(0)
    k1, k2, k3, k4, k5 = jax.random.split(key, 5)

    C_IN, C_MID, C_OUT, H, W = 48, 1152, 192, 7, 7

    # Inputs (match module's forward signature shapes)
    x186 = jax.random.normal(k1, (1, C_MID, H, W), dtype=jnp.float32)
    x189 = jax.random.normal(k2, (1, C_IN, 1, 1), dtype=jnp.float32)

    # Parameters in native conv [out, in] layout (kernel dims squeezed)
    w1 = jax.random.normal(k3, (C_MID, C_IN), dtype=jnp.float32) * 0.05   # conv2d63 weight
    b1 = jax.random.normal(k4, (C_MID,), dtype=jnp.float32) * 0.05        # conv2d63 bias
    w2 = jax.random.normal(k5, (C_OUT, C_MID), dtype=jnp.float32) * 0.05  # conv2d64 weight

    # Cast the big matmul weight once, "at weight load time".
    w2_bf16 = w2.astype(jnp.bfloat16)

    forward = jax.jit(module_forward)
    out = forward(x189, x186, w1, b1, w2_bf16)
    jax.block_until_ready(out)

    # Reference in plain f32 JAX (bf16 second matmul => slightly looser tolerance).
    se = x189.reshape(1, C_IN)
    gate = jax.nn.sigmoid(jnp.einsum('oi,ni->no', w1, se) + b1)            # [1, 1152]
    scaled = x186 * gate.reshape(1, C_MID, 1, 1)                           # [1,1152,7,7]
    ref = jnp.einsum('oc,nchw->nohw', w2, scaled)                          # [1,192,7,7]

    assert out.shape == (1, C_OUT, H, W)
    assert out.dtype == jnp.float32
    assert jnp.allclose(out, ref, atol=3e-2, rtol=3e-2)

    print("KERNEL_OK")
</pallas_src>

<mosaic_0001>
module attributes {stable_mosaic.version = 11 : i64} {
  func.func @se_scale_conv_kernel(%arg0: memref<48x1xf32, #tpu.memory_space<vmem>>, %arg1: memref<1152x49xf32, #tpu.memory_space<vmem>>, %arg2: memref<1152x48xf32, #tpu.memory_space<vmem>>, %arg3: memref<1152x1xf32, #tpu.memory_space<vmem>>, %arg4: memref<192x1152xbf16, #tpu.memory_space<vmem>>, %arg5: memref<192x49xf32, #tpu.memory_space<vmem>>) attributes {dimension_semantics = [], scalar_prefetch = 0 : i64, scratch_operands = 0 : i64, tpu.core_type = #tpu.core_type<tc>} {
    %c0 = arith.constant 0 : index
    %c0_0 = arith.constant 0 : index
    %0 = vector.load %arg2[%c0, %c0_0] : memref<1152x48xf32, #tpu.memory_space<vmem>>, vector<1152x48xf32>
    %c0_1 = arith.constant 0 : index
    %c0_2 = arith.constant 0 : index
    %1 = vector.load %arg0[%c0_1, %c0_2] : memref<48x1xf32, #tpu.memory_space<vmem>>, vector<48x1xf32>
    %cst = arith.constant dense<0.000000e+00> : vector<1152x1xf32>
    %2 = tpu.matmul %0, %1, %cst {dimension_numbers = #tpu.dot_dimension_numbers<[1], [0], [0], [1], [0, 0, 1, 1], [], []>} : vector<1152x48xf32>, vector<48x1xf32>, vector<1152x1xf32> -> vector<1152x1xf32>
    %c0_3 = arith.constant 0 : index
    %c0_4 = arith.constant 0 : index
    %3 = vector.load %arg3[%c0_3, %c0_4] : memref<1152x1xf32, #tpu.memory_space<vmem>>, vector<1152x1xf32>
    %4 = arith.addf %2, %3 : vector<1152x1xf32>
    %5 = arith.negf %4 : vector<1152x1xf32>
    %6 = math.exp %5 : vector<1152x1xf32>
    %cst_5 = arith.constant 1.000000e+00 : f32
    %7 = vector.broadcast %cst_5 : f32 to vector<1152x1xf32>
    %8 = arith.addf %7, %6 : vector<1152x1xf32>
    %9 = arith.divf %7, %8 : vector<1152x1xf32>
    %c0_6 = arith.constant 0 : index
    %c0_7 = arith.constant 0 : index
    %10 = vector.load %arg1[%c0_6, %c0_7] : memref<1152x49xf32, #tpu.memory_space<vmem>>, vector<1152x49xf32>
    %11 = vector.broadcast %9 : vector<1152x1xf32> to vector<1152x49xf32>
    %12 = arith.mulf %10, %11 : vector<1152x49xf32>
    %13 = arith.truncf %12 : vector<1152x49xf32> to vector<1152x49xbf16>
    %c0_8 = arith.constant 0 : index
    %c0_9 = arith.constant 0 : index
    %14 = vector.load %arg4[%c0_8, %c0_9] : memref<192x1152xbf16, #tpu.memory_space<vmem>>, vector<192x1152xbf16>
    %cst_10 = arith.constant dense<0.000000e+00> : vector<192x49xf32>
    %15 = tpu.matmul %14, %13, %cst_10 {dimension_numbers = #tpu.dot_dimension_numbers<[1], [0], [0], [1], [0, 0, 1, 1], [], []>} : vector<192x1152xbf16>, vector<1152x49xbf16>, vector<192x49xf32> -> vector<192x49xf32>
    %c0_11 = arith.constant 0 : index
    %c0_12 = arith.constant 0 : index
    %16 = vector.load %arg5[%c0_11, %c0_12] : memref<192x49xf32, #tpu.memory_space<vmem>>, vector<192x49xf32>
    tpu.vector_store %arg5[%c0_11, %c0_12], %15 {strides = array<i32>} : memref<192x49xf32, #tpu.memory_space<vmem>>, vector<192x49xf32>,
    return
  }
}

</mosaic_0001>

<llo_original>
// kernel: module_forward.1
$region0: #{module_forward.1}
  #allocation0 [shape = 'u32[]', space=smem, size = 0x4, offset = 0x4, fixed_abs, tag = 'smem constant byte address 0x4 - core index']
  #allocation1 [shape = 'u32[72,128]{1,0:T(1,128)}', space=vmem, size = 0x9000, scoped, tag = 'internal scratch']
  %s0 = inlined_call_operand.vmem [shape: f32[48,1], index: 0, kind: input, shape index: {}]
  %s1 = inlined_call_operand.vmem [shape: f32[1152,49], index: 1, kind: input, shape index: {}]
  %s2 = inlined_call_operand.vmem [shape: f32[1152,48], index: 2, kind: input, shape index: {}]
  %s3 = inlined_call_operand.vmem [shape: f32[1152,1], index: 3, kind: input, shape index: {}]
  %s4 = inlined_call_operand.vmem [shape: bf16[192,1152], index: 4, kind: input, shape index: {}]
  %s5 = inlined_call_operand.vmem [shape: f32[192,49], index: 5, kind: output, shape index: {}]
  %s6 = sld [smem:[#allocation0]]
  $region30: #{module_forward.1} parent=0
    _
  %s8 = ssub.s32 1, %s6
  %s9 = scalar_select 0, %s8, %s6
  // Predicated region
  $region2: #{module_forward.1} parent=0 // pred_check
    _
  $region3: #{module_forward.1} parent=0 // pred_check_branch
    %11 = sbr.rel (0) target = $region5
  $region4: #{module_forward.1} parent=0 // pred_region
    _
  $region5: #{module_forward.1} parent=0 // pred_fallthru
    _
  // Predicated region
  $region6: #{module_forward.1} parent=0 // pred_check
    _
  $region7: #{module_forward.1} parent=0 // pred_check_branch
    %13 = sbr.rel (0) target = $region9
  $region8: #{module_forward.1} parent=0 // pred_region
    _
  $region9: #{module_forward.1} parent=0 // pred_fallthru
    _
  // Predicated region
  $region10: #{module_forward.1} parent=0 // pred_check
    _
  $region11: #{module_forward.1} parent=0 // pred_check_branch
    %15 = sbr.rel (0) target = $region13
  $region12: #{module_forward.1} parent=0 // pred_region
    _
  $region13: #{module_forward.1} parent=0 // pred_fallthru
    _
  // Predicated region
  $region14: #{module_forward.1} parent=0 // pred_check
    _
  $region15: #{module_forward.1} parent=0 // pred_check_branch
    %17 = sbr.rel (0) target = $region17
  $region16: #{module_forward.1} parent=0 // pred_region
    _
  $region17: #{module_forward.1} parent=0 // pred_fallthru
    _
  // Predicated region
  $region18: #{module_forward.1} parent=0 // pred_check
    _
  $region19: #{module_forward.1} parent=0 // pred_check_branch
    %19 = sbr.rel (0) target = $region21
  $region20: #{module_forward.1} parent=0 // pred_region
    _
  $region21: #{module_forward.1} parent=0 // pred_fallthru
    _
  %v20 = vld [vmem:[%s2] sm:$0xff]
  %v21 = vld [vmem:[%s2 + $0x8] sm:$0xff]
  %v22 = vld [vmem:[%s2 + $0x10] sm:$0xff]
  %v23 = vld [vmem:[%s2 + $0x18] sm:$0xff]
  %v24 = vld [vmem:[%s2 + $0x20] sm:$0xff]
  %v25 = vld [vmem:[%s2 + $0x28] sm:$0xff]
  %v26 = vld [vmem:[%s2 + $0x30] sm:$0xff]
  %v27 = vld [vmem:[%s2 + $0x38] sm:$0xff]
  %v28 = vld [vmem:[%s2 + $0x40] sm:$0xff]
  %v29 = vld [vmem:[%s2 + $0x48] sm:$0xff]
  %v30 = vld [vmem:[%s2 + $0x50] sm:$0xff]
  %v31 = vld [vmem:[%s2 + $0x58] sm:$0xff]
  %v32 = vld [vmem:[%s2 + $0x60] sm:$0xff]
  %v33 = vld [vmem:[%s2 + $0x68] sm:$0xff]
  %v34 = vld [vmem:[%s2 + $0x70] sm:$0xff]
  %v35 = vld [vmem:[%s2 + $0x78] sm:$0xff]
  %v36 = vld [vmem:[%s2 + $0x80] sm:$0xff]
  %v37 = vld [vmem:[%s2 + $0x88] sm:$0xff]
  %v38 = vld [vmem:[%s2 + $0x90] sm:$0xff]
  %v39 = vld [vmem:[%s2 + $0x98] sm:$0xff]
  %v40 = vld [vmem:[%s2 + $0xa0] sm:$0xff]
  %v41 = vld [vmem:[%s2 + $0xa8] sm:$0xff]
  %v42 = vld [vmem:[%s2 + $0xb0] sm:$0xff]
  %v43 = vld [vmem:[%s2 + $0xb8] sm:$0xff]
  %v44 = vld [vmem:[%s2 + $0xc0] sm:$0xff]
  %v45 = vld [vmem:[%s2 + $0xc8] sm:$0xff]
  %v46 = vld [vmem:[%s2 + $0xd0] sm:$0xff]
  %v47 = vld [vmem:[%s2 + $0xd8] sm:$0xff]
  %v48 = vld [vmem:[%s2 + $0xe0] sm:$0xff]
  %v49 = vld [vmem:[%s2 + $0xe8] sm:$0xff]
  %v50 = vld [vmem:[%s2 + $0xf0] sm:$0xff]
  %v51 = vld [vmem:[%s2 + $0xf8] sm:$0xff]
  %v52 = vld [vmem:[%s2 + $0x100] sm:$0xff]
  %v53 = vld [vmem:[%s2 + $0x108] sm:$0xff]
  %v54 = vld [vmem:[%s2 + $0x110] sm:$0xff]
  %v55 = vld [vmem:[%s2 + $0x118] sm:$0xff]
  %v56 = vld [vmem:[%s2 + $0x120] sm:$0xff]
  %v57 = vld [vmem:[%s2 + $0x128] sm:$0xff]
  %v58 = vld [vmem:[%s2 + $0x130] sm:$0xff]
  %v59 = vld [vmem:[%s2 + $0x138] sm:$0xff]
  %v60 = vld [vmem:[%s2 + $0x140] sm:$0xff]
  %v61 = vld [vmem:[%s2 + $0x148] sm:$0xff]
  %v62 = vld [vmem:[%s2 + $0x150] sm:$0xff]
  %v63 = vld [vmem:[%s2 + $0x158] sm:$0xff]
  %v64 = vld [vmem:[%s2 + $0x160] sm:$0xff]
  %v65 = vld [vmem:[%s2 + $0x168] sm:$0xff]
  %v66 = vld [vmem:[%s2 + $0x170] sm:$0xff]
  %v67 = vld [vmem:[%s2 + $0x178] sm:$0xff]
  %v68 = vld [vmem:[%s2 + $0x180] sm:$0xff]
  %v69 = vld [vmem:[%s2 + $0x188] sm:$0xff]
  %v70 = vld [vmem:[%s2 + $0x190] sm:$0xff]
  %v71 = vld [vmem:[%s2 + $0x198] sm:$0xff]
  %v72 = vld [vmem:[%s2 + $0x1a0] sm:$0xff]
  %v73 = vld [vmem:[%s2 + $0x1a8] sm:$0xff]
  %v74 = vld [vmem:[%s2 + $0x1b0] sm:$0xff]
  %v75 = vld [vmem:[%s2 + $0x1b8] sm:$0xff]
  %v76 = vld [vmem:[%s2 + $0x1c0] sm:$0xff]
  %v77 = vld [vmem:[%s2 + $0x1c8] sm:$0xff]
  %v78 = vld [vmem:[%s2 + $0x1d0] sm:$0xff]
  %v79 = vld [vmem:[%s2 + $0x1d8] sm:$0xff]
  %v80 = vld [vmem:[%s2 + $0x1e0] sm:$0xff]
  %v81 = vld [vmem:[%s2 + $0x1e8] sm:$0xff]
  %v82 = vld [vmem:[%s2 + $0x1f0] sm:$0xff]
  %v83 = vld [vmem:[%s2 + $0x1f8] sm:$0xff]
  %v84 = vld [vmem:[%s2 + $0x200] sm:$0xff]
  %v85 = vld [vmem:[%s2 + $0x208] sm:$0xff]
  %v86 = vld [vmem:[%s2 + $0x210] sm:$0xff]
  %v87 = vld [vmem:[%s2 + $0x218] sm:$0xff]
  %v88 = vld [vmem:[%s2 + $0x220] sm:$0xff]
  %v89 = vld [vmem:[%s2 + $0x228] sm:$0xff]
  %v90 = vld [vmem:[%s2 + $0x230] sm:$0xff]
  %v91 = vld [vmem:[%s2 + $0x238] sm:$0xff]
  %v92 = vld [vmem:[%s2 + $0x240] sm:$0xff]
  %v93 = vld [vmem:[%s2 + $0x248] sm:$0xff]
  %v94 = vld [vmem:[%s2 + $0x250] sm:$0xff]
  %v95 = vld [vmem:[%s2 + $0x258] sm:$0xff]
  %v96 = vld [vmem:[%s2 + $0x260] sm:$0xff]
  %v97 = vld [vmem:[%s2 + $0x268] sm:$0xff]
  %v98 = vld [vmem:[%s2 + $0x270] sm:$0xff]
  %v99 = vld [vmem:[%s2 + $0x278] sm:$0xff]
  %v100 = vld [vmem:[%s2 + $0x280] sm:$0xff]
  %v101 = vld [vmem:[%s2 + $0x288] sm:$0xff]
  %v102 = vld [vmem:[%s2 + $0x290] sm:$0xff]
  %v103 = vld [vmem:[%s2 + $0x298] sm:$0xff]
  %v104 = vld [vmem:[%s2 + $0x2a0] sm:$0xff]
  %v105 = vld [vmem:[%s2 + $0x2a8] sm:$0xff]
  %v106 = vld [vmem:[%s2 + $0x2b0] sm:$0xff]
  %v107 = vld [vmem:[%s2 + $0x2b8] sm:$0xff]
  %v108 = vld [vmem:[%s2 + $0x2c0] sm:$0xff]
  %v109 = vld [vmem:[%s2 + $0x2c8] sm:$0xff]
  %v110 = vld [vmem:[%s2 + $0x2d0] sm:$0xff]
  %v111 = vld [vmem:[%s2 + $0x2d8] sm:$0xff]
  %v112 = vld [vmem:[%s2 + $0x2e0] sm:$0xff]
  %v113 = vld [vmem:[%s2 + $0x2e8] sm:$0xff]
  %v114 = vld [vmem:[%s2 + $0x2f0] sm:$0xff]
  %v115 = vld [vmem:[%s2 + $0x2f8] sm:$0xff]
  %v116 = vld [vmem:[%s2 + $0x300] sm:$0xff]
  %v117 = vld [vmem:[%s2 + $0x308] sm:$0xff]
  %v118 = vld [vmem:[%s2 + $0x310] sm:$0xff]
  %v119 = vld [vmem:[%s2 + $0x318] sm:$0xff]
  %v120 = vld [vmem:[%s2 + $0x320] sm:$0xff]
  %v121 = vld [vmem:[%s2 + $0x328] sm:$0xff]
  %v122 = vld [vmem:[%s2 + $0x330] sm:$0xff]
  %v123 = vld [vmem:[%s2 + $0x338] sm:$0xff]
  %v124 = vld [vmem:[%s2 + $0x340] sm:$0xff]
  %v125 = vld [vmem:[%s2 + $0x348] sm:$0xff]
  %v126 = vld [vmem:[%s2 + $0x350] sm:$0xff]
  %v127 = vld [vmem:[%s2 + $0x358] sm:$0xff]
  %v128 = vld [vmem:[%s2 + $0x360] sm:$0xff]
  %v129 = vld [vmem:[%s2 + $0x368] sm:$0xff]
  %v130 = vld [vmem:[%s2 + $0x370] sm:$0xff]
  %v131 = vld [vmem:[%s2 + $0x378] sm:$0xff]
  %v132 = vld [vmem:[%s2 + $0x380] sm:$0xff]
  %v133 = vld [vmem:[%s2 + $0x388] sm:$0xff]
  %v134 = vld [vmem:[%s2 + $0x390] sm:$0xff]
  %v135 = vld [vmem:[%s2 + $0x398] sm:$0xff]
  %v136 = vld [vmem:[%s2 + $0x3a0] sm:$0xff]
  %v137 = vld [vmem:[%s2 + $0x3a8] sm:$0xff]
  %v138 = vld [vmem:[%s2 + $0x3b0] sm:$0xff]
  %v139 = vld [vmem:[%s2 + $0x3b8] sm:$0xff]
  %v140 = vld [vmem:[%s2 + $0x3c0] sm:$0xff]
  %v141 = vld [vmem:[%s2 + $0x3c8] sm:$0xff]
  %v142 = vld [vmem:[%s2 + $0x3d0] sm:$0xff]
  %v143 = vld [vmem:[%s2 + $0x3d8] sm:$0xff]
  %v144 = vld [vmem:[%s2 + $0x3e0] sm:$0xff]
  %v145 = vld [vmem:[%s2 + $0x3e8] sm:$0xff]
  %v146 = vld [vmem:[%s2 + $0x3f0] sm:$0xff]
  %v147 = vld [vmem:[%s2 + $0x3f8] sm:$0xff]
  %v148 = vld [vmem:[%s2 + $0x400] sm:$0xff]
  %v149 = vld [vmem:[%s2 + $0x408] sm:$0xff]
  %v150 = vld [vmem:[%s2 + $0x410] sm:$0xff]
  %v151 = vld [vmem:[%s2 + $0x418] sm:$0xff]
  %v152 = vld [vmem:[%s2 + $0x420] sm:$0xff]
  %v153 = vld [vmem:[%s2 + $0x428] sm:$0xff]
  %v154 = vld [vmem:[%s2 + $0x430] sm:$0xff]
  %v155 = vld [vmem:[%s2 + $0x438] sm:$0xff]
  %v156 = vld [vmem:[%s2 + $0x440] sm:$0xff]
  %v157 = vld [vmem:[%s2 + $0x448] sm:$0xff]
  %v158 = vld [vmem:[%s2 + $0x450] sm:$0xff]
  %v159 = vld [vmem:[%s2 + $0x458] sm:$0xff]
  %v160 = vld [vmem:[%s2 + $0x460] sm:$0xff]
  %v161 = vld [vmem:[%s2 + $0x468] sm:$0xff]
  %v162 = vld [vmem:[%s2 + $0x470] sm:$0xff]
  %v163 = vld [vmem:[%s2 + $0x478] sm:$0xff]
  %v164 = vld [vmem:[%s0] sm:$0xff]
  %v165 = vld [vmem:[%s0 + $0x8] sm:$0xff]
  %v166 = vld [vmem:[%s0 + $0x10] sm:$0xff]
  %v167 = vld [vmem:[%s0 + $0x18] sm:$0xff]
  %v168 = vld [vmem:[%s0 + $0x20] sm:$0xff]
  %v169 = vld [vmem:[%s0 + $0x28] sm:$0xff]
  %v170 = vld [vmem:[%s3] sm:$0xff]
  %v171 = vld [vmem:[%s3 + $0x8] sm:$0xff]
  %v172 = vld [vmem:[%s3 + $0x10] sm:$0xff]
  %v173 = vld [vmem:[%s3 + $0x18] sm:$0xff]
  %v174 = vld [vmem:[%s3 + $0x20] sm:$0xff]
  %v175 = vld [vmem:[%s3 + $0x28] sm:$0xff]
  %v176 = vld [vmem:[%s3 + $0x30] sm:$0xff]
  %v177 = vld [vmem:[%s3 + $0x38] sm:$0xff]
  %v178 = vld [vmem:[%s3 + $0x40] sm:$0xff]
  %v179 = vld [vmem:[%s3 + $0x48] sm:$0xff]
  %v180 = vld [vmem:[%s3 + $0x50] sm:$0xff]
  %v181 = vld [vmem:[%s3 + $0x58] sm:$0xff]
  %v182 = vld [vmem:[%s3 + $0x60] sm:$0xff]
  %v183 = vld [vmem:[%s3 + $0x68] sm:$0xff]
  %v184 = vld [vmem:[%s3 + $0x70] sm:$0xff]
  %v185 = vld [vmem:[%s3 + $0x78] sm:$0xff]
  %v186 = vld [vmem:[%s3 + $0x80] sm:$0xff]
  %v187 = vld [vmem:[%s3 + $0x88] sm:$0xff]
  %v188 = vld [vmem:[%s3 + $0x90] sm:$0xff]
  %v189 = vld [vmem:[%s3 + $0x98] sm:$0xff]
  %v190 = vld [vmem:[%s3 + $0xa0] sm:$0xff]
  %v191 = vld [vmem:[%s3 + $0xa8] sm:$0xff]
  %v192 = vld [vmem:[%s3 + $0xb0] sm:$0xff]
  %v193 = vld [vmem:[%s3 + $0xb8] sm:$0xff]
  %v194 = vld [vmem:[%s3 + $0xc0] sm:$0xff]
  %v195 = vld [vmem:[%s3 + $0xc8] sm:$0xff]
  %v196 = vld [vmem:[%s3 + $0xd0] sm:$0xff]
  %v197 = vld [vmem:[%s3 + $0xd8] sm:$0xff]
  %v198 = vld [vmem:[%s3 + $0xe0] sm:$0xff]
  %v199 = vld [vmem:[%s3 + $0xe8] sm:$0xff]
  %v200 = vld [vmem:[%s3 + $0xf0] sm:$0xff]
  %v201 = vld [vmem:[%s3 + $0xf8] sm:$0xff]
  %v202 = vld [vmem:[%s3 + $0x100] sm:$0xff]
  %v203 = vld [vmem:[%s3 + $0x108] sm:$0xff]
  %v204 = vld [vmem:[%s3 + $0x110] sm:$0xff]
  %v205 = vld [vmem:[%s3 + $0x118] sm:$0xff]
  %v206 = vld [vmem:[%s3 + $0x120] sm:$0xff]
  %v207 = vld [vmem:[%s3 + $0x128] sm:$0xff]
  %v208 = vld [vmem:[%s3 + $0x130] sm:$0xff]
  %v209 = vld [vmem:[%s3 + $0x138] sm:$0xff]
  %v210 = vld [vmem:[%s3 + $0x140] sm:$0xff]
  %v211 = vld [vmem:[%s3 + $0x148] sm:$0xff]
  %v212 = vld [vmem:[%s3 + $0x150] sm:$0xff]
  %v213 = vld [vmem:[%s3 + $0x158] sm:$0xff]
  %v214 = vld [vmem:[%s3 + $0x160] sm:$0xff]
  %v215 = vld [vmem:[%s3 + $0x168] sm:$0xff]
  %v216 = vld [vmem:[%s3 + $0x170] sm:$0xff]
  %v217 = vld [vmem:[%s3 + $0x178] sm:$0xff]
  %v218 = vld [vmem:[%s3 + $0x180] sm:$0xff]
  %v219 = vld [vmem:[%s3 + $0x188] sm:$0xff]
  %v220 = vld [vmem:[%s3 + $0x190] sm:$0xff]
  %v221 = vld [vmem:[%s3 + $0x198] sm:$0xff]
  %v222 = vld [vmem:[%s3 + $0x1a0] sm:$0xff]
  %v223 = vld [vmem:[%s3 + $0x1a8] sm:$0xff]
  %v224 = vld [vmem:[%s3 + $0x1b0] sm:$0xff]
  %v225 = vld [vmem:[%s3 + $0x1b8] sm:$0xff]
  %v226 = vld [vmem:[%s3 + $0x1c0] sm:$0xff]
  %v227 = vld [vmem:[%s3 + $0x1c8] sm:$0xff]
  %v228 = vld [vmem:[%s3 + $0x1d0] sm:$0xff]
  %v229 = vld [vmem:[%s3 + $0x1d8] sm:$0xff]
  %v230 = vld [vmem:[%s3 + $0x1e0] sm:$0xff]
  %v231 = vld [vmem:[%s3 + $0x1e8] sm:$0xff]
  %v232 = vld [vmem:[%s3 + $0x1f0] sm:$0xff]
  %v233 = vld [vmem:[%s3 + $0x1f8] sm:$0xff]
  %v234 = vld [vmem:[%s3 + $0x200] sm:$0xff]
  %v235 = vld [vmem:[%s3 + $0x208] sm:$0xff]
  %v236 = vld [vmem:[%s3 + $0x210] sm:$0xff]
  %v237 = vld [vmem:[%s3 + $0x218] sm:$0xff]
  %v238 = vld [vmem:[%s3 + $0x220] sm:$0xff]
  %v239 = vld [vmem:[%s3 + $0x228] sm:$0xff]
  %v240 = vld [vmem:[%s3 + $0x230] sm:$0xff]
  %v241 = vld [vmem:[%s3 + $0x238] sm:$0xff]
  %v242 = vld [vmem:[%s3 + $0x240] sm:$0xff]
  %v243 = vld [vmem:[%s3 + $0x248] sm:$0xff]
  %v244 = vld [vmem:[%s3 + $0x250] sm:$0xff]
  %v245 = vld [vmem:[%s3 + $0x258] sm:$0xff]
  %v246 = vld [vmem:[%s3 + $0x260] sm:$0xff]
  %v247 = vld [vmem:[%s3 + $0x268] sm:$0xff]
  %v248 = vld [vmem:[%s3 + $0x270] sm:$0xff]
  %v249 = vld [vmem:[%s3 + $0x278] sm:$0xff]
  %v250 = vld [vmem:[%s3 + $0x280] sm:$0xff]
  %v251 = vld [vmem:[%s3 + $0x288] sm:$0xff]
  %v252 = vld [vmem:[%s3 + $0x290] sm:$0xff]
  %v253 = vld [vmem:[%s3 + $0x298] sm:$0xff]
  %v254 = vld [vmem:[%s3 + $0x2a0] sm:$0xff]
  %v255 = vld [vmem:[%s3 + $0x2a8] sm:$0xff]
  %v256 = vld [vmem:[%s3 + $0x2b0] sm:$0xff]
  %v257 = vld [vmem:[%s3 + $0x2b8] sm:$0xff]
  %v258 = vld [vmem:[%s3 + $0x2c0] sm:$0xff]
  %v259 = vld [vmem:[%s3 + $0x2c8] sm:$0xff]
  %v260 = vld [vmem:[%s3 + $0x2d0] sm:$0xff]
  %v261 = vld [vmem:[%s3 + $0x2d8] sm:$0xff]
  %v262 = vld [vmem:[%s3 + $0x2e0] sm:$0xff]
  %v263 = vld [vmem:[%s3 + $0x2e8] sm:$0xff]
  %v264 = vld [vmem:[%s3 + $0x2f0] sm:$0xff]
  %v265 = vld [vmem:[%s3 + $0x2f8] sm:$0xff]
  %v266 = vld [vmem:[%s3 + $0x300] sm:$0xff]
  %v267 = vld [vmem:[%s3 + $0x308] sm:$0xff]
  %v268 = vld [vmem:[%s3 + $0x310] sm:$0xff]
  %v269 = vld [vmem:[%s3 + $0x318] sm:$0xff]
  %v270 = vld [vmem:[%s3 + $0x320] sm:$0xff]
  %v271 = vld [vmem:[%s3 + $0x328] sm:$0xff]
  %v272 = vld [vmem:[%s3 + $0x330] sm:$0xff]
  %v273 = vld [vmem:[%s3 + $0x338] sm:$0xff]
  %v274 = vld [vmem:[%s3 + $0x340] sm:$0xff]
  %v275 = vld [vmem:[%s3 + $0x348] sm:$0xff]
  %v276 = vld [vmem:[%s3 + $0x350] sm:$0xff]
  %v277 = vld [vmem:[%s3 + $0x358] sm:$0xff]
  %v278 = vld [vmem:[%s3 + $0x360] sm:$0xff]
  %v279 = vld [vmem:[%s3 + $0x368] sm:$0xff]
  %v280 = vld [vmem:[%s3 + $0x370] sm:$0xff]
  %v281 = vld [vmem:[%s3 + $0x378] sm:$0xff]
  %v282 = vld [vmem:[%s3 + $0x380] sm:$0xff]
  %v283 = vld [vmem:[%s3 + $0x388] sm:$0xff]
  %v284 = vld [vmem:[%s3 + $0x390] sm:$0xff]
  %v285 = vld [vmem:[%s3 + $0x398] sm:$0xff]
  %v286 = vld [vmem:[%s3 + $0x3a0] sm:$0xff]
  %v287 = vld [vmem:[%s3 + $0x3a8] sm:$0xff]
  %v288 = vld [vmem:[%s3 + $0x3b0] sm:$0xff]
  %v289 = vld [vmem:[%s3 + $0x3b8] sm:$0xff]
  %v290 = vld [vmem:[%s3 + $0x3c0] sm:$0xff]
  %v291 = vld [vmem:[%s3 + $0x3c8] sm:$0xff]
  %v292 = vld [vmem:[%s3 + $0x3d0] sm:$0xff]
  %v293 = vld [vmem:[%s3 + $0x3d8] sm:$0xff]
  %v294 = vld [vmem:[%s3 + $0x3e0] sm:$0xff]
  %v295 = vld [vmem:[%s3 + $0x3e8] sm:$0xff]
  %v296 = vld [vmem:[%s3 + $0x3f0] sm:$0xff]
  %v297 = vld [vmem:[%s3 + $0x3f8] sm:$0xff]
  %v298 = vld [vmem:[%s3 + $0x400] sm:$0xff]
  %v299 = vld [vmem:[%s3 + $0x408] sm:$0xff]
  %v300 = vld [vmem:[%s3 + $0x410] sm:$0xff]
  %v301 = vld [vmem:[%s3 + $0x418] sm:$0xff]
  %v302 = vld [vmem:[%s3 + $0x420] sm:$0xff]
  %v303 = vld [vmem:[%s3 + $0x428] sm:$0xff]
  %v304 = vld [vmem:[%s3 + $0x430] sm:$0xff]
  %v305 = vld [vmem:[%s3 + $0x438] sm:$0xff]
  %v306 = vld [vmem:[%s3 + $0x440] sm:$0xff]
  %v307 = vld [vmem:[%s3 + $0x448] sm:$0xff]
  %v308 = vld [vmem:[%s3 + $0x450] sm:$0xff]
  %v309 = vld [vmem:[%s3 + $0x458] sm:$0xff]
  %v310 = vld [vmem:[%s3 + $0x460] sm:$0xff]
  %v311 = vld [vmem:[%s3 + $0x468] sm:$0xff]
  %v312 = vld [vmem:[%s3 + $0x470] sm:$0xff]
  %v313 = vld [vmem:[%s3 + $0x478] sm:$0xff]
  %vm314 = vcmask 392192
  %v316 = vsel %vm314, %v20, 0
  %v319 = vsel %vm314, %v21, 0
  %v322 = vsel %vm314, %v22, 0
  %v325 = vsel %vm314, %v23, 0
  %v328 = vsel %vm314, %v24, 0
  %v331 = vsel %vm314, %v25, 0
  %v334 = vsel %vm314, %v26, 0
  %v337 = vsel %vm314, %v27, 0
  %v340 = vsel %vm314, %v28, 0
  %v343 = vsel %vm314, %v29, 0
  %v346 = vsel %vm314, %v30, 0
  %v349 = vsel %vm314, %v31, 0
  %v352 = vsel %vm314, %v32, 0
  %v355 = vsel %vm314, %v33, 0
  %v358 = vsel %vm314, %v34, 0
  %v361 = vsel %vm314, %v35, 0
  %v364 = vsel %vm314, %v36, 0
  %v367 = vsel %vm314, %v37, 0
  %v370 = vsel %vm314, %v38, 0
  %v373 = vsel %vm314, %v39, 0
  %v376 = vsel %vm314, %v40, 0
  %v379 = vsel %vm314, %v41, 0
  %v382 = vsel %vm314, %v42, 0
  %v385 = vsel %vm314, %v43, 0
  %v388 = vsel %vm314, %v44, 0
  %v391 = vsel %vm314, %v45, 0
  %v394 = vsel %vm314, %v46, 0
  %v397 = vsel %vm314, %v47, 0
  %v400 = vsel %vm314, %v48, 0
  %v403 = vsel %vm314, %v49, 0
  %v406 = vsel %vm314, %v50, 0
  %v409 = vsel %vm314, %v51, 0
  %v412 = vsel %vm314, %v52, 0
  %v415 = vsel %vm314, %v53, 0
  %v418 = vsel %vm314, %v54, 0
  %v421 = vsel %vm314, %v55, 0
  %v424 = vsel %vm314, %v56, 0
  %v427 = vsel %vm314, %v57, 0
  %v430 = vsel %vm314, %v58, 0
  %v433 = vsel %vm314, %v59, 0
  %v436 = vsel %vm314, %v60, 0
  %v439 = vsel %vm314, %v61, 0
  %v442 = vsel %vm314, %v62, 0
  %v445 = vsel %vm314, %v63, 0
  %v448 = vsel %vm314, %v64, 0
  %v451 = vsel %vm314, %v65, 0
  %v454 = vsel %vm314, %v66, 0
  %v457 = vsel %vm314, %v67, 0
  %v460 = vsel %vm314, %v68, 0
  %v463 = vsel %vm314, %v69, 0
  %v466 = vsel %vm314, %v70, 0
  %v469 = vsel %vm314, %v71, 0
  %v472 = vsel %vm314, %v72, 0
  %v475 = vsel %vm314, %v73, 0
  %v478 = vsel %vm314, %v74, 0
  %v481 = vsel %vm314, %v75, 0
  %v484 = vsel %vm314, %v76, 0
  %v487 = vsel %vm314, %v77, 0
  %v490 = vsel %vm314, %v78, 0
  %v493 = vsel %vm314, %v79, 0
  %v496 = vsel %vm314, %v80, 0
  %v499 = vsel %vm314, %v81, 0
  %v502 = vsel %vm314, %v82, 0
  %v505 = vsel %vm314, %v83, 0
  %v508 = vsel %vm314, %v84, 0
  %v511 = vsel %vm314, %v85, 0
  %v514 = vsel %vm314, %v86, 0
  %v517 = vsel %vm314, %v87, 0
  %v520 = vsel %vm314, %v88, 0
  %v523 = vsel %vm314, %v89, 0
  %v526 = vsel %vm314, %v90, 0
  %v529 = vsel %vm314, %v91, 0
  %v532 = vsel %vm314, %v92, 0
  %v535 = vsel %vm314, %v93, 0
  %v538 = vsel %vm314, %v94, 0
  %v541 = vsel %vm314, %v95, 0
  %v544 = vsel %vm314, %v96, 0
  %v547 = vsel %vm314, %v97, 0
  %v550 = vsel %vm314, %v98, 0
  %v553 = vsel %vm314, %v99, 0
  %v556 = vsel %vm314, %v100, 0
  %v559 = vsel %vm314, %v101, 0
  %v562 = vsel %vm314, %v102, 0
  %v565 = vsel %vm314, %v103, 0
  %v568 = vsel %vm314, %v104, 0
  %v571 = vsel %vm314, %v105, 0
  %v574 = vsel %vm314, %v106, 0
  %v577 = vsel %vm314, %v107, 0
  %v580 = vsel %vm314, %v108, 0
  %v583 = vsel %vm314, %v109, 0
  %v586 = vsel %vm314, %v110, 0
  %v589 = vsel %vm314, %v111, 0
  %v592 = vsel %vm314, %v112, 0
  %v595 = vsel %vm314, %v113, 0
  %v598 = vsel %vm314, %v114, 0
  %v601 = vsel %vm314, %v115, 0
  %v604 = vsel %vm314, %v116, 0
  %v607 = vsel %vm314, %v117, 0
  %v610 = vsel %vm314, %v118, 0
  %v613 = vsel %vm314, %v119, 0
  %v616 = vsel %vm314, %v120, 0
  %v619 = vsel %vm314, %v121, 0
  %v622 = vsel %vm314, %v122, 0
  %v625 = vsel %vm314, %v123, 0
  %v628 = vsel %vm314, %v124, 0
  %v631 = vsel %vm314, %v125, 0
  %v634 = vsel %vm314, %v126, 0
  %v637 = vsel %vm314, %v127, 0
  %v640 = vsel %vm314, %v128, 0
  %v643 = vsel %vm314, %v129, 0
  %v646 = vsel %vm314, %v130, 0
  %v649 = vsel %vm314, %v131, 0
  %v652 = vsel %vm314, %v132, 0
  %v655 = vsel %vm314, %v133, 0
  %v658 = vsel %vm314, %v134, 0
  %v661 = vsel %vm314, %v135, 0
  %v664 = vsel %vm314, %v136, 0
  %v667 = vsel %vm314, %v137, 0
  %v670 = vsel %vm314, %v138, 0
  %v673 = vsel %vm314, %v139, 0
  %v676 = vsel %vm314, %v140, 0
  %v679 = vsel %vm314, %v141, 0
  %v682 = vsel %vm314, %v142, 0
  %v685 = vsel %vm314, %v143, 0
  %v688 = vsel %vm314, %v144, 0
  %v691 = vsel %vm314, %v145, 0
  %v694 = vsel %vm314, %v146, 0
  %v697 = vsel %vm314, %v147, 0
  %v700 = vsel %vm314, %v148, 0
  %v703 = vsel %vm314, %v149, 0
  %v706 = vsel %vm314, %v150, 0
  %v709 = vsel %vm314, %v151, 0
  %v712 = vsel %vm314, %v152, 0
  %v715 = vsel %vm314, %v153, 0
  %v718 = vsel %vm314, %v154, 0
  %v721 = vsel %vm314, %v155, 0
  %v724 = vsel %vm314, %v156, 0
  %v727 = vsel %vm314, %v157, 0
  %v730 = vsel %vm314, %v158, 0
  %v733 = vsel %vm314, %v159, 0
  %v736 = vsel %vm314, %v160, 0
  %v739 = vsel %vm314, %v161, 0
  %v742 = vsel %vm314, %v162, 0
  %v745 = vsel %vm314, %v163, 0
  %747 = vmatpush.msra.mxu0 0.0
  %748 = vmatpush.msra.mxu0 0.0
  %749 = vmatpush.msra.mxu0 0.0
  %750 = vmatpush.msra.mxu0 0.0
  %751 = vmatpush.msra.mxu0 0.0
  %752 = vmatpush.msra.mxu0 0.0
  %753 = vmatpush.msra.mxu0 0.0
  %754 = vmatpush.msra.mxu0 0.0
  %755 = vmatpush.msra.mxu0 0.0
  %756 = vmatpush.msra.mxu0 0.0
  %757 = vmatpush.msra.mxu0 %v169
  %758 = vmatpush.msra.mxu0 %v168
  %759 = vmatpush.msra.mxu0 %v167
  %760 = vmatpush.msra.mxu0 %v166
  %761 = vmatpush.msra.mxu0 %v165
  %762 = vmatpush.msra.mxu0 %v164
  %763 = vmatmul.f32.gmra.mxu0 %v316
  %v764 = vpop.f32.mrf.mxu0
  %v765 = vadd.f32 %v170, %v764
  %766 = vmatmul.f32.gmra.mxu0 %v319
  %v767 = vpop.f32.mrf.mxu0
  %v768 = vadd.f32 %v171, %v767
  %769 = vmatmul.f32.gmra.mxu0 %v322
  %v770 = vpop.f32.mrf.mxu0
  %v771 = vadd.f32 %v172, %v770
  %772 = vmatmul.f32.gmra.mxu0 %v325
  %v773 = vpop.f32.mrf.mxu0
  %v774 = vadd.f32 %v173, %v773
  %775 = vmatmul.f32.gmra.mxu0 %v328
  %v776 = vpop.f32.mrf.mxu0
  %v777 = vadd.f32 %v174, %v776
  %778 = vmatmul.f32.gmra.mxu0 %v331
  %v779 = vpop.f32.mrf.mxu0
  %v780 = vadd.f32 %v175, %v779
  %781 = vmatmul.f32.gmra.mxu0 %v334
  %v782 = vpop.f32.mrf.mxu0
  %v783 = vadd.f32 %v176, %v782
  %784 = vmatmul.f32.gmra.mxu0 %v337
  %v785 = vpop.f32.mrf.mxu0
  %v786 = vadd.f32 %v177, %v785
  %787 = vmatmul.f32.gmra.mxu0 %v340
  %v788 = vpop.f32.mrf.mxu0
  %v789 = vadd.f32 %v178, %v788
  %790 = vmatmul.f32.gmra.mxu0 %v343
  %v791 = vpop.f32.mrf.mxu0
  %v792 = vadd.f32 %v179, %v791
  %793 = vmatmul.f32.gmra.mxu0 %v346
  %v794 = vpop.f32.mrf.mxu0
  %v795 = vadd.f32 %v180, %v794
  %796 = vmatmul.f32.gmra.mxu0 %v349
  %v797 = vpop.f32.mrf.mxu0
  %v798 = vadd.f32 %v181, %v797
  %799 = vmatmul.f32.gmra.mxu0 %v352
  %v800 = vpop.f32.mrf.mxu0
  %v801 = vadd.f32 %v182, %v800
  %802 = vmatmul.f32.gmra.mxu0 %v355
  %v803 = vpop.f32.mrf.mxu0
  %v804 = vadd.f32 %v183, %v803
  %805 = vmatmul.f32.gmra.mxu0 %v358
  %v806 = vpop.f32.mrf.mxu0
  %v807 = vadd.f32 %v184, %v806
  %808 = vmatmul.f32.gmra.mxu0 %v361
  %v809 = vpop.f32.mrf.mxu0
  %v810 = vadd.f32 %v185, %v809
  %811 = vmatmul.f32.gmra.mxu0 %v364
  %v812 = vpop.f32.mrf.mxu0
  %v813 = vadd.f32 %v186, %v812
  %814 = vmatmul.f32.gmra.mxu0 %v367
  %v815 = vpop.f32.mrf.mxu0
  %v816 = vadd.f32 %v187, %v815
  %817 = vmatmul.f32.gmra.mxu0 %v370
  %v818 = vpop.f32.mrf.mxu0
  %v819 = vadd.f32 %v188, %v818
  %820 = vmatmul.f32.gmra.mxu0 %v373
  %v821 = vpop.f32.mrf.mxu0
  %v822 = vadd.f32 %v189, %v821
  %823 = vmatmul.f32.gmra.mxu0 %v376
  %v824 = vpop.f32.mrf.mxu0
  %v825 = vadd.f32 %v190, %v824
  %826 = vmatmul.f32.gmra.mxu0 %v379
  %v827 = vpop.f32.mrf.mxu0
  %v828 = vadd.f32 %v191, %v827
  %829 = vmatmul.f32.gmra.mxu0 %v382
  %v830 = vpop.f32.mrf.mxu0
  %v831 = vadd.f32 %v192, %v830
  %832 = vmatmul.f32.gmra.mxu0 %v385
  %v833 = vpop.f32.mrf.mxu0
  %v834 = vadd.f32 %v193, %v833
  %835 = vmatmul.f32.gmra.mxu0 %v388
  %v836 = vpop.f32.mrf.mxu0
  %v837 = vadd.f32 %v194, %v836
  %838 = vmatmul.f32.gmra.mxu0 %v391
  %v839 = vpop.f32.mrf.mxu0
  %v840 = vadd.f32 %v195, %v839
  %841 = vmatmul.f32.gmra.mxu0 %v394
  %v842 = vpop.f32.mrf.mxu0
  %v843 = vadd.f32 %v196, %v842
  %844 = vmatmul.f32.gmra.mxu0 %v397
  %v845 = vpop.f32.mrf.mxu0
  %v846 = vadd.f32 %v197, %v845
  %847 = vmatmul.f32.gmra.mxu0 %v400
  %v848 = vpop.f32.mrf.mxu0
  %v849 = vadd.f32 %v198, %v848
  %850 = vmatmul.f32.gmra.mxu0 %v403
  %v851 = vpop.f32.mrf.mxu0
  %v852 = vadd.f32 %v199, %v851
  %853 = vmatmul.f32.gmra.mxu0 %v406
  %v854 = vpop.f32.mrf.mxu0
  %v855 = vadd.f32 %v200, %v854
  %856 = vmatmul.f32.gmra.mxu0 %v409
  %v857 = vpop.f32.mrf.mxu0
  %v858 = vadd.f32 %v201, %v857
  %859 = vmatmul.f32.gmra.mxu0 %v412
  %v860 = vpop.f32.mrf.mxu0
  %v861 = vadd.f32 %v202, %v860
  %862 = vmatmul.f32.gmra.mxu0 %v415
  %v863 = vpop.f32.mrf.mxu0
  %v864 = vadd.f32 %v203, %v863
  %865 = vmatmul.f32.gmra.mxu0 %v418
  %v866 = vpop.f32.mrf.mxu0
  %v867 = vadd.f32 %v204, %v866
  %868 = vmatmul.f32.gmra.mxu0 %v421
  %v869 = vpop.f32.mrf.mxu0
  %v870 = vadd.f32 %v205, %v869
  %871 = vmatmul.f32.gmra.mxu0 %v424
  %v872 = vpop.f32.mrf.mxu0
  %v873 = vadd.f32 %v206, %v872
  %874 = vmatmul.f32.gmra.mxu0 %v427
  %v875 = vpop.f32.mrf.mxu0
  %v876 = vadd.f32 %v207, %v875
  %877 = vmatmul.f32.gmra.mxu0 %v430
  %v878 = vpop.f32.mrf.mxu0
  %v879 = vadd.f32 %v208, %v878
  %880 = vmatmul.f32.gmra.mxu0 %v433
  %v881 = vpop.f32.mrf.mxu0
  %v882 = vadd.f32 %v209, %v881
  %883 = vmatmul.f32.gmra.mxu0 %v436
  %v884 = vpop.f32.mrf.mxu0
  %v885 = vadd.f32 %v210, %v884
  %886 = vmatmul.f32.gmra.mxu0 %v439
  %v887 = vpop.f32.mrf.mxu0
  %v888 = vadd.f32 %v211, %v887
  %889 = vmatmul.f32.gmra.mxu0 %v442
  %v890 = vpop.f32.mrf.mxu0
  %v891 = vadd.f32 %v212, %v890
  %892 = vmatmul.f32.gmra.mxu0 %v445
  %v893 = vpop.f32.mrf.mxu0
  %v894 = vadd.f32 %v213, %v893
  %895 = vmatmul.f32.gmra.mxu0 %v448
  %v896 = vpop.f32.mrf.mxu0
  %v897 = vadd.f32 %v214, %v896
  %898 = vmatmul.f32.gmra.mxu0 %v451
  %v899 = vpop.f32.mrf.mxu0
  %v900 = vadd.f32 %v215, %v899
  %901 = vmatmul.f32.gmra.mxu0 %v454
  %v902 = vpop.f32.mrf.mxu0
  %v903 = vadd.f32 %v216, %v902
  %904 = vmatmul.f32.gmra.mxu0 %v457
  %v905 = vpop.f32.mrf.mxu0
  %v906 = vadd.f32 %v217, %v905
  %907 = vmatmul.f32.gmra.mxu0 %v460
  %v908 = vpop.f32.mrf.mxu0
  %v909 = vadd.f32 %v218, %v908
  %910 = vmatmul.f32.gmra.mxu0 %v463
  %v911 = vpop.f32.mrf.mxu0
  %v912 = vadd.f32 %v219, %v911
  %913 = vmatmul.f32.gmra.mxu0 %v466
  %v914 = vpop.f32.mrf.mxu0
  %v915 = vadd.f32 %v220, %v914
  %916 = vmatmul.f32.gmra.mxu0 %v469
  %v917 = vpop.f32.mrf.mxu0
  %v918 = vadd.f32 %v221, %v917
  %919 = vmatmul.f32.gmra.mxu0 %v472
  %v920 = vpop.f32.mrf.mxu0
  %v921 = vadd.f32 %v222, %v920
  %922 = vmatmul.f32.gmra.mxu0 %v475
  %v923 = vpop.f32.mrf.mxu0
  %v924 = vadd.f32 %v223, %v923
  %925 = vmatmul.f32.gmra.mxu0 %v478
  %v926 = vpop.f32.mrf.mxu0
  %v927 = vadd.f32 %v224, %v926
  %928 = vmatmul.f32.gmra.mxu0 %v481
  %v929 = vpop.f32.mrf.mxu0
  %v930 = vadd.f32 %v225, %v929
  %931 = vmatmul.f32.gmra.mxu0 %v484
  %v932 = vpop.f32.mrf.mxu0
  %v933 = vadd.f32 %v226, %v932
  %934 = vmatmul.f32.gmra.mxu0 %v487
  %v935 = vpop.f32.mrf.mxu0
  %v936 = vadd.f32 %v227, %v935
  %937 = vmatmul.f32.gmra.mxu0 %v490
  %v938 = vpop.f32.mrf.mxu0
  %v939 = vadd.f32 %v228, %v938
  %940 = vmatmul.f32.gmra.mxu0 %v493
  %v941 = vpop.f32.mrf.mxu0
  %v942 = vadd.f32 %v229, %v941
  %943 = vmatmul.f32.gmra.mxu0 %v496
  %v944 = vpop.f32.mrf.mxu0
  %v945 = vadd.f32 %v230, %v944
  %946 = vmatmul.f32.gmra.mxu0 %v499
  %v947 = vpop.f32.mrf.mxu0
  %v948 = vadd.f32 %v231, %v947
  %949 = vmatmul.f32.gmra.mxu0 %v502
  %v950 = vpop.f32.mrf.mxu0
  %v951 = vadd.f32 %v232, %v950
  %952 = vmatmul.f32.gmra.mxu0 %v505
  %v953 = vpop.f32.mrf.mxu0
  %v954 = vadd.f32 %v233, %v953
  %955 = vmatmul.f32.gmra.mxu0 %v508
  %v956 = vpop.f32.mrf.mxu0
  %v957 = vadd.f32 %v234, %v956
  %958 = vmatmul.f32.gmra.mxu0 %v511
  %v959 = vpop.f32.mrf.mxu0
  %v960 = vadd.f32 %v235, %v959
  %961 = vmatmul.f32.gmra.mxu0 %v514
  %v962 = vpop.f32.mrf.mxu0
  %v963 = vadd.f32 %v236, %v962
  %964 = vmatmul.f32.gmra.mxu0 %v517
  %v965 = vpop.f32.mrf.mxu0
  %v966 = vadd.f32 %v237, %v965
  %967 = vmatmul.f32.gmra.mxu0 %v520
  %v968 = vpop.f32.mrf.mxu0
  %v969 = vadd.f32 %v238, %v968
  %970 = vmatmul.f32.gmra.mxu0 %v523
  %v971 = vpop.f32.mrf.mxu0
  %v972 = vadd.f32 %v239, %v971
  %973 = vmatmul.f32.gmra.mxu0 %v526
  %v974 = vpop.f32.mrf.mxu0
  %v975 = vadd.f32 %v240, %v974
  %976 = vmatmul.f32.gmra.mxu0 %v529
  %v977 = vpop.f32.mrf.mxu0
  %v978 = vadd.f32 %v241, %v977
  %979 = vmatmul.f32.gmra.mxu0 %v532
  %v980 = vpop.f32.mrf.mxu0
  %v981 = vadd.f32 %v242, %v980
  %982 = vmatmul.f32.gmra.mxu0 %v535
  %v983 = vpop.f32.mrf.mxu0
  %v984 = vadd.f32 %v243, %v983
  %985 = vmatmul.f32.gmra.mxu0 %v538
  %v986 = vpop.f32.mrf.mxu0
  %v987 = vadd.f32 %v244, %v986
  %988 = vmatmul.f32.gmra.mxu0 %v541
  %v989 = vpop.f32.mrf.mxu0
  %v990 = vadd.f32 %v245, %v989
  %991 = vmatmul.f32.gmra.mxu0 %v544
  %v992 = vpop.f32.mrf.mxu0
  %v993 = vadd.f32 %v246, %v992
  %994 = vmatmul.f32.gmra.mxu0 %v547
  %v995 = vpop.f32.mrf.mxu0
  %v996 = vadd.f32 %v247, %v995
  %997 = vmatmul.f32.gmra.mxu0 %v550
  %v998 = vpop.f32.mrf.mxu0
  %v999 = vadd.f32 %v248, %v998
  %1000 = vmatmul.f32.gmra.mxu0 %v553
  %v1001 = vpop.f32.mrf.mxu0
  %v1002 = vadd.f32 %v249, %v1001
  %1003 = vmatmul.f32.gmra.mxu0 %v556
  %v1004 = vpop.f32.mrf.mxu0
  %v1005 = vadd.f32 %v250, %v1004
  %1006 = vmatmul.f32.gmra.mxu0 %v559
  %v1007 = vpop.f32.mrf.mxu0
  %v1008 = vadd.f32 %v251, %v1007
  %1009 = vmatmul.f32.gmra.mxu0 %v562
  %v1010 = vpop.f32.mrf.mxu0
  %v1011 = vadd.f32 %v252, %v1010
  %1012 = vmatmul.f32.gmra.mxu0 %v565
  %v1013 = vpop.f32.mrf.mxu0
  %v1014 = vadd.f32 %v253, %v1013
  %1015 = vmatmul.f32.gmra.mxu0 %v568
  %v1016 = vpop.f32.mrf.mxu0
  %v1017 = vadd.f32 %v254, %v1016
  %1018 = vmatmul.f32.gmra.mxu0 %v571
  %v1019 = vpop.f32.mrf.mxu0
  %v1020 = vadd.f32 %v255, %v1019
  %1021 = vmatmul.f32.gmra.mxu0 %v574
  %v1022 = vpop.f32.mrf.mxu0
  %v1023 = vadd.f32 %v256, %v1022
  %1024 = vmatmul.f32.gmra.mxu0 %v577
  %v1025 = vpop.f32.mrf.mxu0
  %v1026 = vadd.f32 %v257, %v1025
  %1027 = vmatmul.f32.gmra.mxu0 %v580
  %v1028 = vpop.f32.mrf.mxu0
  %v1029 = vadd.f32 %v258, %v1028
  %1030 = vmatmul.f32.gmra.mxu0 %v583
  %v1031 = vpop.f32.mrf.mxu0
  %v1032 = vadd.f32 %v259, %v1031
  %1033 = vmatmul.f32.gmra.mxu0 %v586
  %v1034 = vpop.f32.mrf.mxu0
  %v1035 = vadd.f32 %v260, %v1034
  %1036 = vmatmul.f32.gmra.mxu0 %v589
  %v1037 = vpop.f32.mrf.mxu0
  %v1038 = vadd.f32 %v261, %v1037
  %1039 = vmatmul.f32.gmra.mxu0 %v592
  %v1040 = vpop.f32.mrf.mxu0
  %v1041 = vadd.f32 %v262, %v1040
  %1042 = vmatmul.f32.gmra.mxu0 %v595
  %v1043 = vpop.f32.mrf.mxu0
  %v1044 = vadd.f32 %v263, %v1043
  %1045 = vmatmul.f32.gmra.mxu0 %v598
  %v1046 = vpop.f32.mrf.mxu0
  %v1047 = vadd.f32 %v264, %v1046
  %1048 = vmatmul.f32.gmra.mxu0 %v601
  %v1049 = vpop.f32.mrf.mxu0
  %v1050 = vadd.f32 %v265, %v1049
  %1051 = vmatmul.f32.gmra.mxu0 %v604
  %v1052 = vpop.f32.mrf.mxu0
  %v1053 = vadd.f32 %v266, %v1052
  %1054 = vmatmul.f32.gmra.mxu0 %v607
  %v1055 = vpop.f32.mrf.mxu0
  %v1056 = vadd.f32 %v267, %v1055
  %1057 = vmatmul.f32.gmra.mxu0 %v610
  %v1058 = vpop.f32.mrf.mxu0
  %v1059 = vadd.f32 %v268, %v1058
  %1060 = vmatmul.f32.gmra.mxu0 %v613
  %v1061 = vpop.f32.mrf.mxu0
  %v1062 = vadd.f32 %v269, %v1061
  %1063 = vmatmul.f32.gmra.mxu0 %v616
  %v1064 = vpop.f32.mrf.mxu0
  %v1065 = vadd.f32 %v270, %v1064
  %1066 = vmatmul.f32.gmra.mxu0 %v619
  %v1067 = vpop.f32.mrf.mxu0
  %v1068 = vadd.f32 %v271, %v1067
  %1069 = vmatmul.f32.gmra.mxu0 %v622
  %v1070 = vpop.f32.mrf.mxu0
  %v1071 = vadd.f32 %v272, %v1070
  %1072 = vmatmul.f32.gmra.mxu0 %v625
  %v1073 = vpop.f32.mrf.mxu0
  %v1074 = vadd.f32 %v273, %v1073
  %1075 = vmatmul.f32.gmra.mxu0 %v628
  %v1076 = vpop.f32.mrf.mxu0
  %v1077 = vadd.f32 %v274, %v1076
  %1078 = vmatmul.f32.gmra.mxu0 %v631
  %v1079 = vpop.f32.mrf.mxu0
  %v1080 = vadd.f32 %v275, %v1079
  %1081 = vmatmul.f32.gmra.mxu0 %v634
  %v1082 = vpop.f32.mrf.mxu0
  %v1083 = vadd.f32 %v276, %v1082
  %1084 = vmatmul.f32.gmra.mxu0 %v637
  %v1085 = vpop.f32.mrf.mxu0
  %v1086 = vadd.f32 %v277, %v1085
  %1087 = vmatmul.f32.gmra.mxu0 %v640
  %v1088 = vpop.f32.mrf.mxu0
  %v1089 = vadd.f32 %v278, %v1088
  %1090 = vmatmul.f32.gmra.mxu0 %v643
  %v1091 = vpop.f32.mrf.mxu0
  %v1092 = vadd.f32 %v279, %v1091
  %1093 = vmatmul.f32.gmra.mxu0 %v646
  %v1094 = vpop.f32.mrf.mxu0
  %v1095 = vadd.f32 %v280, %v1094
  %1096 = vmatmul.f32.gmra.mxu0 %v649
  %v1097 = vpop.f32.mrf.mxu0
  %v1098 = vadd.f32 %v281, %v1097
  %1099 = vmatmul.f32.gmra.mxu0 %v652
  %v1100 = vpop.f32.mrf.mxu0
  %v1101 = vadd.f32 %v282, %v1100
  %1102 = vmatmul.f32.gmra.mxu0 %v655
  %v1103 = vpop.f32.mrf.mxu0
  %v1104 = vadd.f32 %v283, %v1103
  %1105 = vmatmul.f32.gmra.mxu0 %v658
  %v1106 = vpop.f32.mrf.mxu0
  %v1107 = vadd.f32 %v284, %v1106
  %1108 = vmatmul.f32.gmra.mxu0 %v661
  %v1109 = vpop.f32.mrf.mxu0
  %v1110 = vadd.f32 %v285, %v1109
  %1111 = vmatmul.f32.gmra.mxu0 %v664
  %v1112 = vpop.f32.mrf.mxu0
  %v1113 = vadd.f32 %v286, %v1112
  %1114 = vmatmul.f32.gmra.mxu0 %v667
  %v1115 = vpop.f32.mrf.mxu0
  %v1116 = vadd.f32 %v287, %v1115
  %1117 = vmatmul.f32.gmra.mxu0 %v670
  %v1118 = vpop.f32.mrf.mxu0
  %v1119 = vadd.f32 %v288, %v1118
  %1120 = vmatmul.f32.gmra.mxu0 %v673
  %v1121 = vpop.f32.mrf.mxu0
  %v1122 = vadd.f32 %v289, %v1121
  %1123 = vmatmul.f32.gmra.mxu0 %v676
  %v1124 = vpop.f32.mrf.mxu0
  %v1125 = vadd.f32 %v290, %v1124
  %1126 = vmatmul.f32.gmra.mxu0 %v679
  %v1127 = vpop.f32.mrf.mxu0
  %v1128 = vadd.f32 %v291, %v1127
  %1129 = vmatmul.f32.gmra.mxu0 %v682
  %v1130 = vpop.f32.mrf.mxu0
  %v1131 = vadd.f32 %v292, %v1130
  %1132 = vmatmul.f32.gmra.mxu0 %v685
  %v1133 = vpop.f32.mrf.mxu0
  %v1134 = vadd.f32 %v293, %v1133
  %1135 = vmatmul.f32.gmra.mxu0 %v688
  %v1136 = vpop.f32.mrf.mxu0
  %v1137 = vadd.f32 %v294, %v1136
  %1138 = vmatmul.f32.gmra.mxu0 %v691
  %v1139 = vpop.f32.mrf.mxu0
  %v1140 = vadd.f32 %v295, %v1139
  %1141 = vmatmul.f32.gmra.mxu0 %v694
  %v1142 = vpop.f32.mrf.mxu0
  %v1143 = vadd.f32 %v296, %v1142
  %1144 = vmatmul.f32.gmra.mxu0 %v697
  %v1145 = vpop.f32.mrf.mxu0
  %v1146 = vadd.f32 %v297, %v1145
  %1147 = vmatmul.f32.gmra.mxu0 %v700
  %v1148 = vpop.f32.mrf.mxu0
  %v1149 = vadd.f32 %v298, %v1148
  %1150 = vmatmul.f32.gmra.mxu0 %v703
  %v1151 = vpop.f32.mrf.mxu0
  %v1152 = vadd.f32 %v299, %v1151
  %1153 = vmatmul.f32.gmra.mxu0 %v706
  %v1154 = vpop.f32.mrf.mxu0
  %v1155 = vadd.f32 %v300, %v1154
  %1156 = vmatmul.f32.gmra.mxu0 %v709
  %v1157 = vpop.f32.mrf.mxu0
  %v1158 = vadd.f32 %v301, %v1157
  %1159 = vmatmul.f32.gmra.mxu0 %v712
  %v1160 = vpop.f32.mrf.mxu0
  %v1161 = vadd.f32 %v302, %v1160
  %1162 = vmatmul.f32.gmra.mxu0 %v715
  %v1163 = vpop.f32.mrf.mxu0
  %v1164 = vadd.f32 %v303, %v1163
  %1165 = vmatmul.f32.gmra.mxu0 %v718
  %v1166 = vpop.f32.mrf.mxu0
  %v1167 = vadd.f32 %v304, %v1166
  %1168 = vmatmul.f32.gmra.mxu0 %v721
  %v1169 = vpop.f32.mrf.mxu0
  %v1170 = vadd.f32 %v305, %v1169
  %1171 = vmatmul.f32.gmra.mxu0 %v724
  %v1172 = vpop.f32.mrf.mxu0
  %v1173 = vadd.f32 %v306, %v1172
  %1174 = vmatmul.f32.gmra.mxu0 %v727
  %v1175 = vpop.f32.mrf.mxu0
  %v1176 = vadd.f32 %v307, %v1175
  %1177 = vmatmul.f32.gmra.mxu0 %v730
  %v1178 = vpop.f32.mrf.mxu0
  %v1179 = vadd.f32 %v308, %v1178
  %1180 = vmatmul.f32.gmra.mxu0 %v733
  %v1181 = vpop.f32.mrf.mxu0
  %v1182 = vadd.f32 %v309, %v1181
  %1183 = vmatmul.f32.gmra.mxu0 %v736
  %v1184 = vpop.f32.mrf.mxu0
  %v1185 = vadd.f32 %v310, %v1184
  %1186 = vmatmul.f32.gmra.mxu0 %v739
  %v1187 = vpop.f32.mrf.mxu0
  %v1188 = vadd.f32 %v311, %v1187
  %1189 = vmatmul.f32.gmra.mxu0 %v742
  %v1190 = vpop.f32.mrf.mxu0
  %v1191 = vadd.f32 %v312, %v1190
  %1192 = vmatmul.f32.gmra.mxu0 %v745
  %v1193 = vpop.f32.mrf.mxu0
  %v1194 = vadd.f32 %v313, %v1193
  %1195 = vdwg.mxu0
  %v1196 = vxor.u32 %v765, 2147483648
  %v1197 = vxor.u32 %v768, 2147483648
  %v1198 = vxor.u32 %v771, 2147483648
  %v1199 = vxor.u32 %v774, 2147483648
  %v1200 = vxor.u32 %v777, 2147483648
  %v1201 = vxor.u32 %v780, 2147483648
  %v1202 = vxor.u32 %v783, 2147483648
  %v1203 = vxor.u32 %v786, 2147483648
  %v1204 = vxor.u32 %v789, 2147483648
  %v1205 = vxor.u32 %v792, 2147483648
  %v1206 = vxor.u32 %v795, 2147483648
  %v1207 = vxor.u32 %v798, 2147483648
  %v1208 = vxor.u32 %v801, 2147483648
  %v1209 = vxor.u32 %v804, 2147483648
  %v1210 = vxor.u32 %v807, 2147483648
  %v1211 = vxor.u32 %v810, 2147483648
  %v1212 = vxor.u32 %v813, 2147483648
  %v1213 = vxor.u32 %v816, 2147483648
  %v1214 = vxor.u32 %v819, 2147483648
  %v1215 = vxor.u32 %v822, 2147483648
  %v1216 = vxor.u32 %v825, 2147483648
  %v1217 = vxor.u32 %v828, 2147483648
  %v1218 = vxor.u32 %v831, 2147483648
  %v1219 = vxor.u32 %v834, 2147483648
  %v1220 = vxor.u32 %v837, 2147483648
  %v1221 = vxor.u32 %v840, 2147483648
  %v1222 = vxor.u32 %v843, 2147483648
  %v1223 = vxor.u32 %v846, 2147483648
  %v1224 = vxor.u32 %v849, 2147483648
  %v1225 = vxor.u32 %v852, 2147483648
  %v1226 = vxor.u32 %v855, 2147483648
  %v1227 = vxor.u32 %v858, 2147483648
  %v1228 = vxor.u32 %v861, 2147483648
  %v1229 = vxor.u32 %v864, 2147483648
  %v1230 = vxor.u32 %v867, 2147483648
  %v1231 = vxor.u32 %v870, 2147483648
  %v1232 = vxor.u32 %v873, 2147483648
  %v1233 = vxor.u32 %v876, 2147483648
  %v1234 = vxor.u32 %v879, 2147483648
  %v1235 = vxor.u32 %v882, 2147483648
  %v1236 = vxor.u32 %v885, 2147483648
  %v1237 = vxor.u32 %v888, 2147483648
  %v1238 = vxor.u32 %v891, 2147483648
  %v1239 = vxor.u32 %v894, 2147483648
  %v1240 = vxor.u32 %v897, 2147483648
  %v1241 = vxor.u32 %v900, 2147483648
  %v1242 = vxor.u32 %v903, 2147483648
  %v1243 = vxor.u32 %v906, 2147483648
  %v1244 = vxor.u32 %v909, 2147483648
  %v1245 = vxor.u32 %v912, 2147483648
  %v1246 = vxor.u32 %v915, 2147483648
  %v1247 = vxor.u32 %v918, 2147483648
  %v1248 = vxor.u32 %v921, 2147483648
  %v1249 = vxor.u32 %v924, 2147483648
  %v1250 = vxor.u32 %v927, 2147483648
  %v1251 = vxor.u32 %v930, 2147483648
  %v1252 = vxor.u32 %v933, 2147483648
  %v1253 = vxor.u32 %v936, 2147483648
  %v1254 = vxor.u32 %v939, 2147483648
  %v1255 = vxor.u32 %v942, 2147483648
  %v1256 = vxor.u32 %v945, 2147483648
  %v1257 = vxor.u32 %v948, 2147483648
  %v1258 = vxor.u32 %v951, 2147483648
  %v1259 = vxor.u32 %v954, 2147483648
  %v1260 = vxor.u32 %v957, 2147483648
  %v1261 = vxor.u32 %v960, 2147483648
  %v1262 = vxor.u32 %v963, 2147483648
  %v1263 = vxor.u32 %v966, 2147483648
  %v1264 = vxor.u32 %v969, 2147483648
  %v1265 = vxor.u32 %v972, 2147483648
  %v1266 = vxor.u32 %v975, 2147483648
  %v1267 = vxor.u32 %v978, 2147483648
  %v1268 = vxor.u32 %v981, 2147483648
  %v1269 = vxor.u32 %v984, 2147483648
  %v1270 = vxor.u32 %v987, 2147483648
  %v1271 = vxor.u32 %v990, 2147483648
  %v1272 = vxor.u32 %v993, 2147483648
  %v1273 = vxor.u32 %v996, 2147483648
  %v1274 = vxor.u32 %v999, 2147483648
  %v1275 = vxor.u32 %v1002, 2147483648
  %v1276 = vxor.u32 %v1005, 2147483648
  %v1277 = vxor.u32 %v1008, 2147483648
  %v1278 = vxor.u32 %v1011, 2147483648
  %v1279 = vxor.u32 %v1014, 2147483648
  %v1280 = vxor.u32 %v1017, 2147483648
  %v1281 = vxor.u32 %v1020, 2147483648
  %v1282 = vxor.u32 %v1023, 2147483648
  %v1283 = vxor.u32 %v1026, 2147483648
  %v1284 = vxor.u32 %v1029, 2147483648
  %v1285 = vxor.u32 %v1032, 2147483648
  %v1286 = vxor.u32 %v1035, 2147483648
  %v1287 = vxor.u32 %v1038, 2147483648
  %v1288 = vxor.u32 %v1041, 2147483648
  %v1289 = vxor.u32 %v1044, 2147483648
  %v1290 = vxor.u32 %v1047, 2147483648
  %v1291 = vxor.u32 %v1050, 2147483648
  %v1292 = vxor.u32 %v1053, 2147483648
  %v1293 = vxor.u32 %v1056, 2147483648
  %v1294 = vxor.u32 %v1059, 2147483648
  %v1295 = vxor.u32 %v1062, 2147483648
  %v1296 = vxor.u32 %v1065, 2147483648
  %v1297 = vxor.u32 %v1068, 2147483648
  %v1298 = vxor.u32 %v1071, 2147483648
  %v1299 = vxor.u32 %v1074, 2147483648
  %v1300 = vxor.u32 %v1077, 2147483648
  %v1301 = vxor.u32 %v1080, 2147483648
  %v1302 = vxor.u32 %v1083, 2147483648
  %v1303 = vxor.u32 %v1086, 2147483648
  %v1304 = vxor.u32 %v1089, 2147483648
  %v1305 = vxor.u32 %v1092, 2147483648
  %v1306 = vxor.u32 %v1095, 2147483648
  %v1307 = vxor.u32 %v1098, 2147483648
  %v1308 = vxor.u32 %v1101, 2147483648
  %v1309 = vxor.u32 %v1104, 2147483648
  %v1310 = vxor.u32 %v1107, 2147483648
  %v1311 = vxor.u32 %v1110, 2147483648
  %v1312 = vxor.u32 %v1113, 2147483648
  %v1313 = vxor.u32 %v1116, 2147483648
  %v1314 = vxor.u32 %v1119, 2147483648
  %v1315 = vxor.u32 %v1122, 2147483648
  %v1316 = vxor.u32 %v1125, 2147483648
  %v1317 = vxor.u32 %v1128, 2147483648
  %v1318 = vxor.u32 %v1131, 2147483648
  %v1319 = vxor.u32 %v1134, 2147483648
  %v1320 = vxor.u32 %v1137, 2147483648
  %v1321 = vxor.u32 %v1140, 2147483648
  %v1322 = vxor.u32 %v1143, 2147483648
  %v1323 = vxor.u32 %v1146, 2147483648
  %v1324 = vxor.u32 %v1149, 2147483648
  %v1325 = vxor.u32 %v1152, 2147483648
  %v1326 = vxor.u32 %v1155, 2147483648
  %v1327 = vxor.u32 %v1158, 2147483648
  %v1328 = vxor.u32 %v1161, 2147483648
  %v1329 = vxor.u32 %v1164, 2147483648
  %v1330 = vxor.u32 %v1167, 2147483648
  %v1331 = vxor.u32 %v1170, 2147483648
  %v1332 = vxor.u32 %v1173, 2147483648
  %v1333 = vxor.u32 %v1176, 2147483648
  %v1334 = vxor.u32 %v1179, 2147483648
  %v1335 = vxor.u32 %v1182, 2147483648
  %v1336 = vxor.u32 %v1185, 2147483648
  %v1337 = vxor.u32 %v1188, 2147483648
  %v1338 = vxor.u32 %v1191, 2147483648
  %v1339 = vxor.u32 %v1194, 2147483648
  %v1340 = vmul.f32 %v1196, 1.442695
  %v1341 = vpow.pop %v1340
  %v1342 = vmul.f32 %v1197, 1.442695
  %v1343 = vpow.pop %v1342
  %v1344 = vmul.f32 %v1198, 1.442695
  %v1345 = vpow.pop %v1344
  %v1346 = vmul.f32 %v1199, 1.442695
  %v1347 = vpow.pop %v1346
  %v1348 = vmul.f32 %v1200, 1.442695
  %v1349 = vpow.pop %v1348
  %v1350 = vmul.f32 %v1201, 1.442695
  %v1351 = vpow.pop %v1350
  %v1352 = vmul.f32 %v1202, 1.442695
  %v1353 = vpow.pop %v1352
  %v1354 = vmul.f32 %v1203, 1.442695
  %v1355 = vpow.pop %v1354
  %v1356 = vmul.f32 %v1204, 1.442695
  %v1357 = vpow.pop %v1356
  %v1358 = vmul.f32 %v1205, 1.442695
  %v1359 = vpow.pop %v1358
  %v1360 = vmul.f32 %v1206, 1.442695
  %v1361 = vpow.pop %v1360
  %v1362 = vmul.f32 %v1207, 1.442695
  %v1363 = vpow.pop %v1362
  %v1364 = vmul.f32 %v1208, 1.442695
  %v1365 = vpow.pop %v1364
  %v1366 = vmul.f32 %v1209, 1.442695
  %v1367 = vpow.pop %v1366
  %v1368 = vmul.f32 %v1210, 1.442695
  %v1369 = vpow.pop %v1368
  %v1370 = vmul.f32 %v1211, 1.442695
  %v1371 = vpow.pop %v1370
  %v1372 = vmul.f32 %v1212, 1.442695
  %v1373 = vpow.pop %v1372
  %v1374 = vmul.f32 %v1213, 1.442695
  %v1375 = vpow.pop %v1374
  %v1376 = vmul.f32 %v1214, 1.442695
  %v1377 = vpow.pop %v1376
  %v1378 = vmul.f32 %v1215, 1.442695
  %v1379 = vpow.pop %v1378
  %v1380 = vmul.f32 %v1216, 1.442695
  %v1381 = vpow.pop %v1380
  %v1382 = vmul.f32 %v1217, 1.442695
  %v1383 = vpow.pop %v1382
  %v1384 = vmul.f32 %v1218, 1.442695
  %v1385 = vpow.pop %v1384
  %v1386 = vmul.f32 %v1219, 1.442695
  %v1387 = vpow.pop %v1386
  %v1388 = vmul.f32 %v1220, 1.442695
  %v1389 = vpow.pop %v1388
  %v1390 = vmul.f32 %v1221, 1.442695
  %v1391 = vpow.pop %v1390
  %v1392 = vmul.f32 %v1222, 1.442695
  %v1393 = vpow.pop %v1392
  %v1394 = vmul.f32 %v1223, 1.442695
  %v1395 = vpow.pop %v1394
  %v1396 = vmul.f32 %v1224, 1.442695
  %v1397 = vpow.pop %v1396
  %v1398 = vmul.f32 %v1225, 1.442695
  %v1399 = vpow.pop %v1398
  %v1400 = vmul.f32 %v1226, 1.442695
  %v1401 = vpow.pop %v1400
  %v1402 = vmul.f32 %v1227, 1.442695
  %v1403 = vpow.pop %v1402
  %v1404 = vmul.f32 %v1228, 1.442695
  %v1405 = vpow.pop %v1404
  %v1406 = vmul.f32 %v1229, 1.442695
  %v1407 = vpow.pop %v1406
  %v1408 = vmul.f32 %v1230, 1.442695
  %v1409 = vpow.pop %v1408
  %v1410 = vmul.f32 %v1231, 1.442695
  %v1411 = vpow.pop %v1410
  %v1412 = vmul.f32 %v1232, 1.442695
  %v1413 = vpow.pop %v1412
  %v1414 = vmul.f32 %v1233, 1.442695
  %v1415 = vpow.pop %v1414
  %v1416 = vmul.f32 %v1234, 1.442695
  %v1417 = vpow.pop %v1416
  %v1418 = vmul.f32 %v1235, 1.442695
  %v1419 = vpow.pop %v1418
  %v1420 = vmul.f32 %v1236, 1.442695
  %v1421 = vpow.pop %v1420
  %v1422 = vmul.f32 %v1237, 1.442695
  %v1423 = vpow.pop %v1422
  %v1424 = vmul.f32 %v1238, 1.442695
  %v1425 = vpow.pop %v1424
  %v1426 = vmul.f32 %v1239, 1.442695
  %v1427 = vpow.pop %v1426
  %v1428 = vmul.f32 %v1240, 1.442695
  %v1429 = vpow.pop %v1428
  %v1430 = vmul.f32 %v1241, 1.442695
  %v1431 = vpow.pop %v1430
  %v1432 = vmul.f32 %v1242, 1.442695
  %v1433 = vpow.pop %v1432
  %v1434 = vmul.f32 %v1243, 1.442695
  %v1435 = vpow.pop %v1434
  %v1436 = vmul.f32 %v1244, 1.442695
  %v1437 = vpow.pop %v1436
  %v1438 = vmul.f32 %v1245, 1.442695
  %v1439 = vpow.pop %v1438
  %v1440 = vmul.f32 %v1246, 1.442695
  %v1441 = vpow.pop %v1440
  %v1442 = vmul.f32 %v1247, 1.442695
  %v1443 = vpow.pop %v1442
  %v1444 = vmul.f32 %v1248, 1.442695
  %v1445 = vpow.pop %v1444
  %v1446 = vmul.f32 %v1249, 1.442695
  %v1447 = vpow.pop %v1446
  %v1448 = vmul.f32 %v1250, 1.442695
  %v1449 = vpow.pop %v1448
  %v1450 = vmul.f32 %v1251, 1.442695
  %v1451 = vpow.pop %v1450
  %v1452 = vmul.f32 %v1252, 1.442695
  %v1453 = vpow.pop %v1452
  %v1454 = vmul.f32 %v1253, 1.442695
  %v1455 = vpow.pop %v1454
  %v1456 = vmul.f32 %v1254, 1.442695
  %v1457 = vpow.pop %v1456
  %v1458 = vmul.f32 %v1255, 1.442695
  %v1459 = vpow.pop %v1458
  %v1460 = vmul.f32 %v1256, 1.442695
  %v1461 = vpow.pop %v1460
  %v1462 = vmul.f32 %v1257, 1.442695
  %v1463 = vpow.pop %v1462
  %v1464 = vmul.f32 %v1258, 1.442695
  %v1465 = vpow.pop %v1464
  %v1466 = vmul.f32 %v1259, 1.442695
  %v1467 = vpow.pop %v1466
  %v1468 = vmul.f32 %v1260, 1.442695
  %v1469 = vpow.pop %v1468
  %v1470 = vmul.f32 %v1261, 1.442695
  %v1471 = vpow.pop %v1470
  %v1472 = vmul.f32 %v1262, 1.442695
  %v1473 = vpow.pop %v1472
  %v1474 = vmul.f32 %v1263, 1.442695
  %v1475 = vpow.pop %v1474
  %v1476 = vmul.f32 %v1264, 1.442695
  %v1477 = vpow.pop %v1476
  %v1478 = vmul.f32 %v1265, 1.442695
  %v1479 = vpow.pop %v1478
  %v1480 = vmul.f32 %v1266, 1.442695
  %v1481 = vpow.pop %v1480
  %v1482 = vmul.f32 %v1267, 1.442695
  %v1483 = vpow.pop %v1482
  %v1484 = vmul.f32 %v1268, 1.442695
  %v1485 = vpow.pop %v1484
  %v1486 = vmul.f32 %v1269, 1.442695
  %v1487 = vpow.pop %v1486
  %v1488 = vmul.f32 %v1270, 1.442695
  %v1489 = vpow.pop %v1488
  %v1490 = vmul.f32 %v1271, 1.442695
  %v1491 = vpow.pop %v1490
  %v1492 = vmul.f32 %v1272, 1.442695
  %v1493 = vpow.pop %v1492
  %v1494 = vmul.f32 %v1273, 1.442695
  %v1495 = vpow.pop %v1494
  %v1496 = vmul.f32 %v1274, 1.442695
  %v1497 = vpow.pop %v1496
  %v1498 = vmul.f32 %v1275, 1.442695
  %v1499 = vpow.pop %v1498
  %v1500 = vmul.f32 %v1276, 1.442695
  %v1501 = vpow.pop %v1500
  %v1502 = vmul.f32 %v1277, 1.442695
  %v1503 = vpow.pop %v1502
  %v1504 = vmul.f32 %v1278, 1.442695
  %v1505 = vpow.pop %v1504
  %v1506 = vmul.f32 %v1279, 1.442695
  %v1507 = vpow.pop %v1506
  %v1508 = vmul.f32 %v1280, 1.442695
  %v1509 = vpow.pop %v1508
  %v1510 = vmul.f32 %v1281, 1.442695
  %v1511 = vpow.pop %v1510
  %v1512 = vmul.f32 %v1282, 1.442695
  %v1513 = vpow.pop %v1512
  %v1514 = vmul.f32 %v1283, 1.442695
  %v1515 = vpow.pop %v1514
  %v1516 = vmul.f32 %v1284, 1.442695
  %v1517 = vpow.pop %v1516
  %v1518 = vmul.f32 %v1285, 1.442695
  %v1519 = vpow.pop %v1518
  %v1520 = vmul.f32 %v1286, 1.442695
  %v1521 = vpow.pop %v1520
  %v1522 = vmul.f32 %v1287, 1.442695
  %v1523 = vpow.pop %v1522
  %v1524 = vmul.f32 %v1288, 1.442695
  %v1525 = vpow.pop %v1524
  %v1526 = vmul.f32 %v1289, 1.442695
  %v1527 = vpow.pop %v1526
  %v1528 = vmul.f32 %v1290, 1.442695
  %v1529 = vpow.pop %v1528
  %v1530 = vmul.f32 %v1291, 1.442695
  %v1531 = vpow.pop %v1530
  %v1532 = vmul.f32 %v1292, 1.442695
  %v1533 = vpow.pop %v1532
  %v1534 = vmul.f32 %v1293, 1.442695
  %v1535 = vpow.pop %v1534
  %v1536 = vmul.f32 %v1294, 1.442695
  %v1537 = vpow.pop %v1536
  %v1538 = vmul.f32 %v1295, 1.442695
  %v1539 = vpow.pop %v1538
  %v1540 = vmul.f32 %v1296, 1.442695
  %v1541 = vpow.pop %v1540
  %v1542 = vmul.f32 %v1297, 1.442695
  %v1543 = vpow.pop %v1542
  %v1544 = vmul.f32 %v1298, 1.442695
  %v1545 = vpow.pop %v1544
  %v1546 = vmul.f32 %v1299, 1.442695
  %v1547 = vpow.pop %v1546
  %v1548 = vmul.f32 %v1300, 1.442695
  %v1549 = vpow.pop %v1548
  %v1550 = vmul.f32 %v1301, 1.442695
  %v1551 = vpow.pop %v1550
  %v1552 = vmul.f32 %v1302, 1.442695
  %v1553 = vpow.pop %v1552
  %v1554 = vmul.f32 %v1303, 1.442695
  %v1555 = vpow.pop %v1554
  %v1556 = vmul.f32 %v1304, 1.442695
  %v1557 = vpow.pop %v1556
  %v1558 = vmul.f32 %v1305, 1.442695
  %v1559 = vpow.pop %v1558
  %v1560 = vmul.f32 %v1306, 1.442695
  %v1561 = vpow.pop %v1560
  %v1562 = vmul.f32 %v1307, 1.442695
  %v1563 = vpow.pop %v1562
  %v1564 = vmul.f32 %v1308, 1.442695
  %v1565 = vpow.pop %v1564
  %v1566 = vmul.f32 %v1309, 1.442695
  %v1567 = vpow.pop %v1566
  %v1568 = vmul.f32 %v1310, 1.442695
  %v1569 = vpow.pop %v1568
  %v1570 = vmul.f32 %v1311, 1.442695
  %v1571 = vpow.pop %v1570
  %v1572 = vmul.f32 %v1312, 1.442695
  %v1573 = vpow.pop %v1572
  %v1574 = vmul.f32 %v1313, 1.442695
  %v1575 = vpow.pop %v1574
  %v1576 = vmul.f32 %v1314, 1.442695
  %v1577 = vpow.pop %v1576
  %v1578 = vmul.f32 %v1315, 1.442695
  %v1579 = vpow.pop %v1578
  %v1580 = vmul.f32 %v1316, 1.442695
  %v1581 = vpow.pop %v1580
  %v1582 = vmul.f32 %v1317, 1.442695
  %v1583 = vpow.pop %v1582
  %v1584 = vmul.f32 %v1318, 1.442695
  %v1585 = vpow.pop %v1584
  %v1586 = vmul.f32 %v1319, 1.442695
  %v1587 = vpow.pop %v1586
  %v1588 = vmul.f32 %v1320, 1.442695
  %v1589 = vpow.pop %v1588
  %v1590 = vmul.f32 %v1321, 1.442695
  %v1591 = vpow.pop %v1590
  %v1592 = vmul.f32 %v1322, 1.442695
  %v1593 = vpow.pop %v1592
  %v1594 = vmul.f32 %v1323, 1.442695
  %v1595 = vpow.pop %v1594
  %v1596 = vmul.f32 %v1324, 1.442695
  %v1597 = vpow.pop %v1596
  %v1598 = vmul.f32 %v1325, 1.442695
  %v1599 = vpow.pop %v1598
  %v1600 = vmul.f32 %v1326, 1.442695
  %v1601 = vpow.pop %v1600
  %v1602 = vmul.f32 %v1327, 1.442695
  %v1603 = vpow.pop %v1602
  %v1604 = vmul.f32 %v1328, 1.442695
  %v1605 = vpow.pop %v1604
  %v1606 = vmul.f32 %v1329, 1.442695
  %v1607 = vpow.pop %v1606
  %v1608 = vmul.f32 %v1330, 1.442695
  %v1609 = vpow.pop %v1608
  %v1610 = vmul.f32 %v1331, 1.442695
  %v1611 = vpow.pop %v1610
  %v1612 = vmul.f32 %v1332, 1.442695
  %v1613 = vpow.pop %v1612
  %v1614 = vmul.f32 %v1333, 1.442695
  %v1615 = vpow.pop %v1614
  %v1616 = vmul.f32 %v1334, 1.442695
  %v1617 = vpow.pop %v1616
  %v1618 = vmul.f32 %v1335, 1.442695
  %v1619 = vpow.pop %v1618
  %v1620 = vmul.f32 %v1336, 1.442695
  %v1621 = vpow.pop %v1620
  %v1622 = vmul.f32 %v1337, 1.442695
  %v1623 = vpow.pop %v1622
  %v1624 = vmul.f32 %v1338, 1.442695
  %v1625 = vpow.pop %v1624
  %v1626 = vmul.f32 %v1339, 1.442695
  %v1627 = vpow.pop %v1626
  %v1628 = vadd.f32 %v1341, 1.0
  %v1629 = vadd.f32 %v1343, 1.0
  %v1630 = vadd.f32 %v1345, 1.0
  %v1631 = vadd.f32 %v1347, 1.0
  %v1632 = vadd.f32 %v1349, 1.0
  %v1633 = vadd.f32 %v1351, 1.0
  %v1634 = vadd.f32 %v1353, 1.0
  %v1635 = vadd.f32 %v1355, 1.0
  %v1636 = vadd.f32 %v1357, 1.0
  %v1637 = vadd.f32 %v1359, 1.0
  %v1638 = vadd.f32 %v1361, 1.0
  %v1639 = vadd.f32 %v1363, 1.0
  %v1640 = vadd.f32 %v1365, 1.0
  %v1641 = vadd.f32 %v1367, 1.0
  %v1642 = vadd.f32 %v1369, 1.0
  %v1643 = vadd.f32 %v1371, 1.0
  %v1644 = vadd.f32 %v1373, 1.0
  %v1645 = vadd.f32 %v1375, 1.0
  %v1646 = vadd.f32 %v1377, 1.0
  %v1647 = vadd.f32 %v1379, 1.0
  %v1648 = vadd.f32 %v1381, 1.0
  %v1649 = vadd.f32 %v1383, 1.0
  %v1650 = vadd.f32 %v1385, 1.0
  %v1651 = vadd.f32 %v1387, 1.0
  %v1652 = vadd.f32 %v1389, 1.0
  %v1653 = vadd.f32 %v1391, 1.0
  %v1654 = vadd.f32 %v1393, 1.0
  %v1655 = vadd.f32 %v1395, 1.0
  %v1656 = vadd.f32 %v1397, 1.0
  %v1657 = vadd.f32 %v1399, 1.0
  %v1658 = vadd.f32 %v1401, 1.0
  %v1659 = vadd.f32 %v1403, 1.0
  %v1660 = vadd.f32 %v1405, 1.0
  %v1661 = vadd.f32 %v1407, 1.0
  %v1662 = vadd.f32 %v1409, 1.0
  %v1663 = vadd.f32 %v1411, 1.0
  %v1664 = vadd.f32 %v1413, 1.0
  %v1665 = vadd.f32 %v1415, 1.0
  %v1666 = vadd.f32 %v1417, 1.0
  %v1667 = vadd.f32 %v1419, 1.0
  %v1668 = vadd.f32 %v1421, 1.0
  %v1669 = vadd.f32 %v1423, 1.0
  %v1670 = vadd.f32 %v1425, 1.0
  %v1671 = vadd.f32 %v1427, 1.0
  %v1672 = vadd.f32 %v1429, 1.0
  %v1673 = vadd.f32 %v1431, 1.0
  %v1674 = vadd.f32 %v1433, 1.0
  %v1675 = vadd.f32 %v1435, 1.0
  %v1676 = vadd.f32 %v1437, 1.0
  %v1677 = vadd.f32 %v1439, 1.0
  %v1678 = vadd.f32 %v1441, 1.0
  %v1679 = vadd.f32 %v1443, 1.0
  %v1680 = vadd.f32 %v1445, 1.0
  %v1681 = vadd.f32 %v1447, 1.0
  %v1682 = vadd.f32 %v1449, 1.0
  %v1683 = vadd.f32 %v1451, 1.0
  %v1684 = vadd.f32 %v1453, 1.0
  %v1685 = vadd.f32 %v1455, 1.0
  %v1686 = vadd.f32 %v1457, 1.0
  %v1687 = vadd.f32 %v1459, 1.0
  %v1688 = vadd.f32 %v1461, 1.0
  %v1689 = vadd.f32 %v1463, 1.0
  %v1690 = vadd.f32 %v1465, 1.0
  %v1691 = vadd.f32 %v1467, 1.0
  %v1692 = vadd.f32 %v1469, 1.0
  %v1693 = vadd.f32 %v1471, 1.0
  %v1694 = vadd.f32 %v1473, 1.0
  %v1695 = vadd.f32 %v1475, 1.0
  %v1696 = vadd.f32 %v1477, 1.0
  %v1697 = vadd.f32 %v1479, 1.0
  %v1698 = vadd.f32 %v1481, 1.0
  %v1699 = vadd.f32 %v1483, 1.0
  %v1700 = vadd.f32 %v1485, 1.0
  %v1701 = vadd.f32 %v1487, 1.0
  %v1702 = vadd.f32 %v1489, 1.0
  %v1703 = vadd.f32 %v1491, 1.0
  %v1704 = vadd.f32 %v1493, 1.0
  %v1705 = vadd.f32 %v1495, 1.0
  %v1706 = vadd.f32 %v1497, 1.0
  %v1707 = vadd.f32 %v1499, 1.0
  %v1708 = vadd.f32 %v1501, 1.0
  %v1709 = vadd.f32 %v1503, 1.0
  %v1710 = vadd.f32 %v1505, 1.0
  %v1711 = vadd.f32 %v1507, 1.0
  %v1712 = vadd.f32 %v1509, 1.0
  %v1713 = vadd.f32 %v1511, 1.0
  %v1714 = vadd.f32 %v1513, 1.0
  %v1715 = vadd.f32 %v1515, 1.0
  %v1716 = vadd.f32 %v1517, 1.0
  %v1717 = vadd.f32 %v1519, 1.0
  %v1718 = vadd.f32 %v1521, 1.0
  %v1719 = vadd.f32 %v1523, 1.0
  %v1720 = vadd.f32 %v1525, 1.0
  %v1721 = vadd.f32 %v1527, 1.0
  %v1722 = vadd.f32 %v1529, 1.0
  %v1723 = vadd.f32 %v1531, 1.0
  %v1724 = vadd.f32 %v1533, 1.0
  %v1725 = vadd.f32 %v1535, 1.0
  %v1726 = vadd.f32 %v1537, 1.0
  %v1727 = vadd.f32 %v1539, 1.0
  %v1728 = vadd.f32 %v1541, 1.0
  %v1729 = vadd.f32 %v1543, 1.0
  %v1730 = vadd.f32 %v1545, 1.0
  %v1731 = vadd.f32 %v1547, 1.0
  %v1732 = vadd.f32 %v1549, 1.0
  %v1733 = vadd.f32 %v1551, 1.0
  %v1734 = vadd.f32 %v1553, 1.0
  %v1735 = vadd.f32 %v1555, 1.0
  %v1736 = vadd.f32 %v1557, 1.0
  %v1737 = vadd.f32 %v1559, 1.0
  %v1738 = vadd.f32 %v1561, 1.0
  %v1739 = vadd.f32 %v1563, 1.0
  %v1740 = vadd.f32 %v1565, 1.0
  %v1741 = vadd.f32 %v1567, 1.0
  %v1742 = vadd.f32 %v1569, 1.0
  %v1743 = vadd.f32 %v1571, 1.0
  %v1744 = vadd.f32 %v1573, 1.0
  %v1745 = vadd.f32 %v1575, 1.0
  %v1746 = vadd.f32 %v1577, 1.0
  %v1747 = vadd.f32 %v1579, 1.0
  %v1748 = vadd.f32 %v1581, 1.0
  %v1749 = vadd.f32 %v1583, 1.0
  %v1750 = vadd.f32 %v1585, 1.0
  %v1751 = vadd.f32 %v1587, 1.0
  %v1752 = vadd.f32 %v1589, 1.0
  %v1753 = vadd.f32 %v1591, 1.0
  %v1754 = vadd.f32 %v1593, 1.0
  %v1755 = vadd.f32 %v1595, 1.0
  %v1756 = vadd.f32 %v1597, 1.0
  %v1757 = vadd.f32 %v1599, 1.0
  %v1758 = vadd.f32 %v1601, 1.0
  %v1759 = vadd.f32 %v1603, 1.0
  %v1760 = vadd.f32 %v1605, 1.0
  %v1761 = vadd.f32 %v1607, 1.0
  %v1762 = vadd.f32 %v1609, 1.0
  %v1763 = vadd.f32 %v1611, 1.0
  %v1764 = vadd.f32 %v1613, 1.0
  %v1765 = vadd.f32 %v1615, 1.0
  %v1766 = vadd.f32 %v1617, 1.0
  %v1767 = vadd.f32 %v1619, 1.0
  %v1768 = vadd.f32 %v1621, 1.0
  %v1769 = vadd.f32 %v1623, 1.0
  %v1770 = vadd.f32 %v1625, 1.0
  %v1771 = vadd.f32 %v1627, 1.0
  %v1772 = vrcp.pop %v1628
  %v1773 = vmul.f32 %v1628, %v1772
  %v1774 = vsub.f32 1.0, %v1773
  %v1775 = vmul.f32 %v1772, %v1774
  %v1776 = vadd.f32 %v1772, %v1775
  %vm1777 = vweird.f32 %v1628
  %vm1778 = vweird.f32 %v1772
  %vm1779 = vmor %vm1777, %vm1778
  %v1780 = vsel %vm1779, %v1772, %v1776
  %v1781 = vand.u32 2147483647, %v1628
  %vm1782 = vcmp.eq.f32.partialorder %v1781, 8.507059e+37
  %v1783 = vand.u32 %v1628, 2147483648
  %v1784 = vor.u32 1.1754944e-38, %v1783
  %v1785 = vsel %vm1782, %v1784, %v1780
  %v1786 = vmul.f32 1.0, %v1785
  %v1787 = vrcp.pop %v1629
  %v1788 = vmul.f32 %v1629, %v1787
  %v1789 = vsub.f32 1.0, %v1788
  %v1790 = vmul.f32 %v1787, %v1789
  %v1791 = vadd.f32 %v1787, %v1790
  %vm1792 = vweird.f32 %v1629
  %vm1793 = vweird.f32 %v1787
  %vm1794 = vmor %vm1792, %vm1793
  %v1795 = vsel %vm1794, %v1787, %v1791
  %v1796 = vand.u32 2147483647, %v1629
  %vm1797 = vcmp.eq.f32.partialorder %v1796, 8.507059e+37
  %v1798 = vand.u32 %v1629, 2147483648
  %v1799 = vor.u32 1.1754944e-38, %v1798
  %v1800 = vsel %vm1797, %v1799, %v1795
  %v1801 = vmul.f32 1.0, %v1800
  %v1802 = vrcp.pop %v1630
  %v1803 = vmul.f32 %v1630, %v1802
  %v1804 = vsub.f32 1.0, %v1803
  %v1805 = vmul.f32 %v1802, %v1804
  %v1806 = vadd.f32 %v1802, %v1805
  %vm1807 = vweird.f32 %v1630
  %vm1808 = vweird.f32 %v1802
  %vm1809 = vmor %vm1807, %vm1808
  %v1810 = vsel %vm1809, %v1802, %v1806
  %v1811 = vand.u32 2147483647, %v1630
  %vm1812 = vcmp.eq.f32.partialorder %v1811, 8.507059e+37
  %v1813 = vand.u32 %v1630, 2147483648
  %v1814 = vor.u32 1.1754944e-38, %v1813
  %v1815 = vsel %vm1812, %v1814, %v1810
  %v1816 = vmul.f32 1.0, %v1815
  %v1817 = vrcp.pop %v1631
  %v1818 = vmul.f32 %v1631, %v1817
  %v1819 = vsub.f32 1.0, %v1818
  %v1820 = vmul.f32 %v1817, %v1819
  %v1821 = vadd.f32 %v1817, %v1820
  %vm1822 = vweird.f32 %v1631
  %vm1823 = vweird.f32 %v1817
  %vm1824 = vmor %vm1822, %vm1823
  %v1825 = vsel %vm1824, %v1817, %v1821
  %v1826 = vand.u32 2147483647, %v1631
  %vm1827 = vcmp.eq.f32.partialorder %v1826, 8.507059e+37
  %v1828 = vand.u32 %v1631, 2147483648
  %v1829 = vor.u32 1.1754944e-38, %v1828
  %v1830 = vsel %vm1827, %v1829, %v1825
  %v1831 = vmul.f32 1.0, %v1830
  %v1832 = vrcp.pop %v1632
  %v1833 = vmul.f32 %v1632, %v1832
  %v1834 = vsub.f32 1.0, %v1833
  %v1835 = vmul.f32 %v1832, %v1834
  %v1836 = vadd.f32 %v1832, %v1835
  %vm1837 = vweird.f32 %v1632
  %vm1838 = vweird.f32 %v1832
  %vm1839 = vmor %vm1837, %vm1838
  %v1840 = vsel %vm1839, %v1832, %v1836
  %v1841 = vand.u32 2147483647, %v1632
  %vm1842 = vcmp.eq.f32.partialorder %v1841, 8.507059e+37
  %v1843 = vand.u32 %v1632, 2147483648
  %v1844 = vor.u32 1.1754944e-38, %v1843
  %v1845 = vsel %vm1842, %v1844, %v1840
  %v1846 = vmul.f32 1.0, %v1845
  %v1847 = vrcp.pop %v1633
  %v1848 = vmul.f32 %v1633, %v1847
  %v1849 = vsub.f32 1.0, %v1848
  %v1850 = vmul.f32 %v1847, %v1849
  %v1851 = vadd.f32 %v1847, %v1850
  %vm1852 = vweird.f32 %v1633
  %vm1853 = vweird.f32 %v1847
  %vm1854 = vmor %vm1852, %vm1853
  %v1855 = vsel %vm1854, %v1847, %v1851
  %v1856 = vand.u32 2147483647, %v1633
  %vm1857 = vcmp.eq.f32.partialorder %v1856, 8.507059e+37
  %v1858 = vand.u32 %v1633, 2147483648
  %v1859 = vor.u32 1.1754944e-38, %v1858
  %v1860 = vsel %vm1857, %v1859, %v1855
  %v1861 = vmul.f32 1.0, %v1860
  %v1862 = vrcp.pop %v1634
  %v1863 = vmul.f32 %v1634, %v1862
  %v1864 = vsub.f32 1.0, %v1863
  %v1865 = vmul.f32 %v1862, %v1864
  %v1866 = vadd.f32 %v1862, %v1865
  %vm1867 = vweird.f32 %v1634
  %vm1868 = vweird.f32 %v1862
  %vm1869 = vmor %vm1867, %vm1868
  %v1870 = vsel %vm1869, %v1862, %v1866
  %v1871 = vand.u32 2147483647, %v1634
  %vm1872 = vcmp.eq.f32.partialorder %v1871, 8.507059e+37
  %v1873 = vand.u32 %v1634, 2147483648
  %v1874 = vor.u32 1.1754944e-38, %v1873
  %v1875 = vsel %vm1872, %v1874, %v1870
  %v1876 = vmul.f32 1.0, %v1875
  %v1877 = vrcp.pop %v1635
  %v1878 = vmul.f32 %v1635, %v1877
  %v1879 = vsub.f32 1.0, %v1878
  %v1880 = vmul.f32 %v1877, %v1879
  %v1881 = vadd.f32 %v1877, %v1880
  %vm1882 = vweird.f32 %v1635
  %vm1883 = vweird.f32 %v1877
  %vm1884 = vmor %vm1882, %vm1883
  %v1885 = vsel %vm1884, %v1877, %v1881
  %v1886 = vand.u32 2147483647, %v1635
  %vm1887 = vcmp.eq.f32.partialorder %v1886, 8.507059e+37
  %v1888 = vand.u32 %v1635, 2147483648
  %v1889 = vor.u32 1.1754944e-38, %v1888
  %v1890 = vsel %vm1887, %v1889, %v1885
  %v1891 = vmul.f32 1.0, %v1890
  %v1892 = vrcp.pop %v1636
  %v1893 = vmul.f32 %v1636, %v1892
  %v1894 = vsub.f32 1.0, %v1893
  %v1895 = vmul.f32 %v1892, %v1894
  %v1896 = vadd.f32 %v1892, %v1895
  %vm1897 = vweird.f32 %v1636
  %vm1898 = vweird.f32 %v1892
  %vm1899 = vmor %vm1897, %vm1898
  %v1900 = vsel %vm1899, %v1892, %v1896
  %v1901 = vand.u32 2147483647, %v1636
  %vm1902 = vcmp.eq.f32.partialorder %v1901, 8.507059e+37
  %v1903 = vand.u32 %v1636, 2147483648
  %v1904 = vor.u32 1.1754944e-38, %v1903
  %v1905 = vsel %vm1902, %v1904, %v1900
  %v1906 = vmul.f32 1.0, %v1905
  %v1907 = vrcp.pop %v1637
  %v1908 = vmul.f32 %v1637, %v1907
  %v1909 = vsub.f32 1.0, %v1908
  %v1910 = vmul.f32 %v1907, %v1909
  %v1911 = vadd.f32 %v1907, %v1910
  %vm1912 = vweird.f32 %v1637
  %vm1913 = vweird.f32 %v1907
  %vm1914 = vmor %vm1912, %vm1913
  %v1915 = vsel %vm1914, %v1907, %v1911
  %v1916 = vand.u32 2147483647, %v1637
  %vm1917 = vcmp.eq.f32.partialorder %v1916, 8.507059e+37
  %v1918 = vand.u32 %v1637, 2147483648
  %v1919 = vor.u32 1.1754944e-38, %v1918
  %v1920 = vsel %vm1917, %v1919, %v1915
  %v1921 = vmul.f32 1.0, %v1920
  %v1922 = vrcp.pop %v1638
  %v1923 = vmul.f32 %v1638, %v1922
  %v1924 = vsub.f32 1.0, %v1923
  %v1925 = vmul.f32 %v1922, %v1924
  %v1926 = vadd.f32 %v1922, %v1925
  %vm1927 = vweird.f32 %v1638
  %vm1928 = vweird.f32 %v1922
  %vm1929 = vmor %vm1927, %vm1928
  %v1930 = vsel %vm1929, %v1922, %v1926
  %v1931 = vand.u32 2147483647, %v1638
  %vm1932 = vcmp.eq.f32.partialorder %v1931, 8.507059e+37
  %v1933 = vand.u32 %v1638, 2147483648
  %v1934 = vor.u32 1.1754944e-38, %v1933
  %v1935 = vsel %vm1932, %v1934, %v1930
  %v1936 = vmul.f32 1.0, %v1935
  %v1937 = vrcp.pop %v1639
  %v1938 = vmul.f32 %v1639, %v1937
  %v1939 = vsub.f32 1.0, %v1938
  %v1940 = vmul.f32 %v1937, %v1939
  %v1941 = vadd.f32 %v1937, %v1940
  %vm1942 = vweird.f32 %v1639
  %vm1943 = vweird.f32 %v1937
  %vm1944 = vmor %vm1942, %vm1943
  %v1945 = vsel %vm1944, %v1937, %v1941
  %v1946 = vand.u32 2147483647, %v1639
  %vm1947 = vcmp.eq.f32.partialorder %v1946, 8.507059e+37
  %v1948 = vand.u32 %v1639, 2147483648
  %v1949 = vor.u32 1.1754944e-38, %v1948
  %v1950 = vsel %vm1947, %v1949, %v1945
  %v1951 = vmul.f32 1.0, %v1950
  %v1952 = vrcp.pop %v1640
  %v1953 = vmul.f32 %v1640, %v1952
  %v1954 = vsub.f32 1.0, %v1953
  %v1955 = vmul.f32 %v1952, %v1954
  %v1956 = vadd.f32 %v1952, %v1955
  %vm1957 = vweird.f32 %v1640
  %vm1958 = vweird.f32 %v1952
  %vm1959 = vmor %vm1957, %vm1958
  %v1960 = vsel %vm1959, %v1952, %v1956
  %v1961 = vand.u32 2147483647, %v1640
  %vm1962 = vcmp.eq.f32.partialorder %v1961, 8.507059e+37
  %v1963 = vand.u32 %v1640, 2147483648
  %v1964 = vor.u32 1.1754944e-38, %v1963
  %v1965 = vsel %vm1962, %v1964, %v1960
  %v1966 = vmul.f32 1.0, %v1965
  %v1967 = vrcp.pop %v1641
  %v1968 = vmul.f32 %v1641, %v1967
  %v1969 = vsub.f32 1.0, %v1968
  %v1970 = vmul.f32 %v1967, %v1969
  %v1971 = vadd.f32 %v1967, %v1970
  %vm1972 = vweird.f32 %v1641
  %vm1973 = vweird.f32 %v1967
  %vm1974 = vmor %vm1972, %vm1973
  %v1975 = vsel %vm1974, %v1967, %v1971
  %v1976 = vand.u32 2147483647, %v1641
  %vm1977 = vcmp.eq.f32.partialorder %v1976, 8.507059e+37
  %v1978 = vand.u32 %v1641, 2147483648
  %v1979 = vor.u32 1.1754944e-38, %v1978
  %v1980 = vsel %vm1977, %v1979, %v1975
  %v1981 = vmul.f32 1.0, %v1980
  %v1982 = vrcp.pop %v1642
  %v1983 = vmul.f32 %v1642, %v1982
  %v1984 = vsub.f32 1.0, %v1983
  %v1985 = vmul.f32 %v1982, %v1984
  %v1986 = vadd.f32 %v1982, %v1985
  %vm1987 = vweird.f32 %v1642
  %vm1988 = vweird.f32 %v1982
  %vm1989 = vmor %vm1987, %vm1988
  %v1990 = vsel %vm1989, %v1982, %v1986
  %v1991 = vand.u32 2147483647, %v1642
  %vm1992 = vcmp.eq.f32.partialorder %v1991, 8.507059e+37
  %v1993 = vand.u32 %v1642, 2147483648
  %v1994 = vor.u32 1.1754944e-38, %v1993
  %v1995 = vsel %vm1992, %v1994, %v1990
  %v1996 = vmul.f32 1.0, %v1995
  %v1997 = vrcp.pop %v1643
  %v1998 = vmul.f32 %v1643, %v1997
  %v1999 = vsub.f32 1.0, %v1998
  %v2000 = vmul.f32 %v1997, %v1999
  %v2001 = vadd.f32 %v1997, %v2000
  %vm2002 = vweird.f32 %v1643
  %vm2003 = vweird.f32 %v1997
  %vm2004 = vmor %vm2002, %vm2003
  %v2005 = vsel %vm2004, %v1997, %v2001
  %v2006 = vand.u32 2147483647, %v1643
  %vm2007 = vcmp.eq.f32.partialorder %v2006, 8.507059e+37
  %v2008 = vand.u32 %v1643, 2147483648
  %v2009 = vor.u32 1.1754944e-38, %v2008
  %v2010 = vsel %vm2007, %v2009, %v2005
  %v2011 = vmul.f32 1.0, %v2010
  %v2012 = vrcp.pop %v1644
  %v2013 = vmul.f32 %v1644, %v2012
  %v2014 = vsub.f32 1.0, %v2013
  %v2015 = vmul.f32 %v2012, %v2014
  %v2016 = vadd.f32 %v2012, %v2015
  %vm2017 = vweird.f32 %v1644
  %vm2018 = vweird.f32 %v2012
  %vm2019 = vmor %vm2017, %vm2018
  %v2020 = vsel %vm2019, %v2012, %v2016
  %v2021 = vand.u32 2147483647, %v1644
  %vm2022 = vcmp.eq.f32.partialorder %v2021, 8.507059e+37
  %v2023 = vand.u32 %v1644, 2147483648
  %v2024 = vor.u32 1.1754944e-38, %v2023
  %v2025 = vsel %vm2022, %v2024, %v2020
  %v2026 = vmul.f32 1.0, %v2025
  %v2027 = vrcp.pop %v1645
  %v2028 = vmul.f32 %v1645, %v2027
  %v2029 = vsub.f32 1.0, %v2028
  %v2030 = vmul.f32 %v2027, %v2029
  %v2031 = vadd.f32 %v2027, %v2030
  %vm2032 = vweird.f32 %v1645
  %vm2033 = vweird.f32 %v2027
  %vm2034 = vmor %vm2032, %vm2033
  %v2035 = vsel %vm2034, %v2027, %v2031
  %v2036 = vand.u32 2147483647, %v1645
  %vm2037 = vcmp.eq.f32.partialorder %v2036, 8.507059e+37
  %v2038 = vand.u32 %v1645, 2147483648
  %v2039 = vor.u32 1.1754944e-38, %v2038
  %v2040 = vsel %vm2037, %v2039, %v2035
  %v2041 = vmul.f32 1.0, %v2040
  %v2042 = vrcp.pop %v1646
  %v2043 = vmul.f32 %v1646, %v2042
  %v2044 = vsub.f32 1.0, %v2043
  %v2045 = vmul.f32 %v2042, %v2044
  %v2046 = vadd.f32 %v2042, %v2045
  %vm2047 = vweird.f32 %v1646
  %vm2048 = vweird.f32 %v2042
  %vm2049 = vmor %vm2047, %vm2048
  %v2050 = vsel %vm2049, %v2042, %v2046
  %v2051 = vand.u32 2147483647, %v1646
  %vm2052 = vcmp.eq.f32.partialorder %v2051, 8.507059e+37
  %v2053 = vand.u32 %v1646, 2147483648
  %v2054 = vor.u32 1.1754944e-38, %v2053
  %v2055 = vsel %vm2052, %v2054, %v2050
  %v2056 = vmul.f32 1.0, %v2055
  %v2057 = vrcp.pop %v1647
  %v2058 = vmul.f32 %v1647, %v2057
  %v2059 = vsub.f32 1.0, %v2058
  %v2060 = vmul.f32 %v2057, %v2059
  %v2061 = vadd.f32 %v2057, %v2060
  %vm2062 = vweird.f32 %v1647
  %vm2063 = vweird.f32 %v2057
  %vm2064 = vmor %vm2062, %vm2063
  %v2065 = vsel %vm2064, %v2057, %v2061
  %v2066 = vand.u32 2147483647, %v1647
  %vm2067 = vcmp.eq.f32.partialorder %v2066, 8.507059e+37
  %v2068 = vand.u32 %v1647, 2147483648
  %v2069 = vor.u32 1.1754944e-38, %v2068
  %v2070 = vsel %vm2067, %v2069, %v2065
  %v2071 = vmul.f32 1.0, %v2070
  %v2072 = vrcp.pop %v1648
  %v2073 = vmul.f32 %v1648, %v2072
  %v2074 = vsub.f32 1.0, %v2073
  %v2075 = vmul.f32 %v2072, %v2074
  %v2076 = vadd.f32 %v2072, %v2075
  %vm2077 = vweird.f32 %v1648
  %vm2078 = vweird.f32 %v2072
  %vm2079 = vmor %vm2077, %vm2078
  %v2080 = vsel %vm2079, %v2072, %v2076
  %v2081 = vand.u32 2147483647, %v1648
  %vm2082 = vcmp.eq.f32.partialorder %v2081, 8.507059e+37
  %v2083 = vand.u32 %v1648, 2147483648
  %v2084 = vor.u32 1.1754944e-38, %v2083
  %v2085 = vsel %vm2082, %v2084, %v2080
  %v2086 = vmul.f32 1.0, %v2085
  %v2087 = vrcp.pop %v1649
  %v2088 = vmul.f32 %v1649, %v2087
  %v2089 = vsub.f32 1.0, %v2088
  %v2090 = vmul.f32 %v2087, %v2089
  %v2091 = vadd.f32 %v2087, %v2090
  %vm2092 = vweird.f32 %v1649
  %vm2093 = vweird.f32 %v2087
  %vm2094 = vmor %vm2092, %vm2093
  %v2095 = vsel %vm2094, %v2087, %v2091
  %v2096 = vand.u32 2147483647, %v1649
  %vm2097 = vcmp.eq.f32.partialorder %v2096, 8.507059e+37
  %v2098 = vand.u32 %v1649, 2147483648
  %v2099 = vor.u32 1.1754944e-38, %v2098
  %v2100 = vsel %vm2097, %v2099, %v2095
  %v2101 = vmul.f32 1.0, %v2100
  %v2102 = vrcp.pop %v1650
  %v2103 = vmul.f32 %v1650, %v2102
  %v2104 = vsub.f32 1.0, %v2103
  %v2105 = vmul.f32 %v2102, %v2104
  %v2106 = vadd.f32 %v2102, %v2105
  %vm2107 = vweird.f32 %v1650
  %vm2108 = vweird.f32 %v2102
  %vm2109 = vmor %vm2107, %vm2108
  %v2110 = vsel %vm2109, %v2102, %v2106
  %v2111 = vand.u32 2147483647, %v1650
  %vm2112 = vcmp.eq.f32.partialorder %v2111, 8.507059e+37
  %v2113 = vand.u32 %v1650, 2147483648
  %v2114 = vor.u32 1.1754944e-38, %v2113
  %v2115 = vsel %vm2112, %v2114, %v2110
  %v2116 = vmul.f32 1.0, %v2115
  %v2117 = vrcp.pop %v1651
  %v2118 = vmul.f32 %v1651, %v2117
  %v2119 = vsub.f32 1.0, %v2118
  %v2120 = vmul.f32 %v2117, %v2119
  %v2121 = vadd.f32 %v2117, %v2120
  %vm2122 = vweird.f32 %v1651
  %vm2123 = vweird.f32 %v2117
  %vm2124 = vmor %vm2122, %vm2123
  %v2125 = vsel %vm2124, %v2117, %v2121
  %v2126 = vand.u32 2147483647, %v1651
  %vm2127 = vcmp.eq.f32.partialorder %v2126, 8.507059e+37
  %v2128 = vand.u32 %v1651, 2147483648
  %v2129 = vor.u32 1.1754944e-38, %v2128
  %v2130 = vsel %vm2127, %v2129, %v2125
  %v2131 = vmul.f32 1.0, %v2130
  %v2132 = vrcp.pop %v1652
  %v2133 = vmul.f32 %v1652, %v2132
  %v2134 = vsub.f32 1.0, %v2133
  %v2135 = vmul.f32 %v2132, %v2134
  %v2136 = vadd.f32 %v2132, %v2135
  %vm2137 = vweird.f32 %v1652
  %vm2138 = vweird.f32 %v2132
  %vm2139 = vmor %vm2137, %vm2138
  %v2140 = vsel %vm2139, %v2132, %v2136
  %v2141 = vand.u32 2147483647, %v1652
  %vm2142 = vcmp.eq.f32.partialorder %v2141, 8.507059e+37
  %v2143 = vand.u32 %v1652, 2147483648
  %v2144 = vor.u32 1.1754944e-38, %v2143
  %v2145 = vsel %vm2142, %v2144, %v2140
  %v2146 = vmul.f32 1.0, %v2145
  %v2147 = vrcp.pop %v1653
  %v2148 = vmul.f32 %v1653, %v2147
  %v2149 = vsub.f32 1.0, %v2148
  %v2150 = vmul.f32 %v2147, %v2149
  %v2151 = vadd.f32 %v2147, %v2150
  %vm2152 = vweird.f32 %v1653
  %vm2153 = vweird.f32 %v2147
  %vm2154 = vmor %vm2152, %vm2153
  %v2155 = vsel %vm2154, %v2147, %v2151
  %v2156 = vand.u32 2147483647, %v1653
  %vm2157 = vcmp.eq.f32.partialorder %v2156, 8.507059e+37
  %v2158 = vand.u32 %v1653, 2147483648
  %v2159 = vor.u32 1.1754944e-38, %v2158
  %v2160 = vsel %vm2157, %v2159, %v2155
  %v2161 = vmul.f32 1.0, %v2160
  %v2162 = vrcp.pop %v1654
  %v2163 = vmul.f32 %v1654, %v2162
  %v2164 = vsub.f32 1.0, %v2163
  %v2165 = vmul.f32 %v2162, %v2164
  %v2166 = vadd.f32 %v2162, %v2165
  %vm2167 = vweird.f32 %v1654
  %vm2168 = vweird.f32 %v2162
  %vm2169 = vmor %vm2167, %vm2168
  %v2170 = vsel %vm2169, %v2162, %v2166
  %v2171 = vand.u32 2147483647, %v1654
  %vm2172 = vcmp.eq.f32.partialorder %v2171, 8.507059e+37
  %v2173 = vand.u32 %v1654, 2147483648
  %v2174 = vor.u32 1.1754944e-38, %v2173
  %v2175 = vsel %vm2172, %v2174, %v2170
  %v2176 = vmul.f32 1.0, %v2175
  %v2177 = vrcp.pop %v1655
  %v2178 = vmul.f32 %v1655, %v2177
  %v2179 = vsub.f32 1.0, %v2178
  %v2180 = vmul.f32 %v2177, %v2179
  %v2181 = vadd.f32 %v2177, %v2180
  %vm2182 = vweird.f32 %v1655
  %vm2183 = vweird.f32 %v2177
  %vm2184 = vmor %vm2182, %vm2183
  %v2185 = vsel %vm2184, %v2177, %v2181
  %v2186 = vand.u32 2147483647, %v1655
  %vm2187 = vcmp.eq.f32.partialorder %v2186, 8.507059e+37
  %v2188 = vand.u32 %v1655, 2147483648
  %v2189 = vor.u32 1.1754944e-38, %v2188
  %v2190 = vsel %vm2187, %v2189, %v2185
  %v2191 = vmul.f32 1.0, %v2190
  %v2192 = vrcp.pop %v1656
  %v2193 = vmul.f32 %v1656, %v2192
  %v2194 = vsub.f32 1.0, %v2193
  %v2195 = vmul.f32 %v2192, %v2194
  %v2196 = vadd.f32 %v2192, %v2195
  %vm2197 = vweird.f32 %v1656
  %vm2198 = vweird.f32 %v2192
  %vm2199 = vmor %vm2197, %vm2198
  %v2200 = vsel %vm2199, %v2192, %v2196
  %v2201 = vand.u32 2147483647, %v1656
  %vm2202 = vcmp.eq.f32.partialorder %v2201, 8.507059e+37
  %v2203 = vand.u32 %v1656, 2147483648
  %v2204 = vor.u32 1.1754944e-38, %v2203
  %v2205 = vsel %vm2202, %v2204, %v2200
  %v2206 = vmul.f32 1.0, %v2205
  %v2207 = vrcp.pop %v1657
  %v2208 = vmul.f32 %v1657, %v2207
  %v2209 = vsub.f32 1.0, %v2208
  %v2210 = vmul.f32 %v2207, %v2209
  %v2211 = vadd.f32 %v2207, %v2210
  %vm2212 = vweird.f32 %v1657
  %vm2213 = vweird.f32 %v2207
  %vm2214 = vmor %vm2212, %vm2213
  %v2215 = vsel %vm2214, %v2207, %v2211
  %v2216 = vand.u32 2147483647, %v1657
  %vm2217 = vcmp.eq.f32.partialorder %v2216, 8.507059e+37
  %v2218 = vand.u32 %v1657, 2147483648
  %v2219 = vor.u32 1.1754944e-38, %v2218
  %v2220 = vsel %vm2217, %v2219, %v2215
  %v2221 = vmul.f32 1.0, %v2220
  %v2222 = vrcp.pop %v1658
  %v2223 = vmul.f32 %v1658, %v2222
  %v2224 = vsub.f32 1.0, %v2223
  %v2225 = vmul.f32 %v2222, %v2224
  %v2226 = vadd.f32 %v2222, %v2225
  %vm2227 = vweird.f32 %v1658
  %vm2228 = vweird.f32 %v2222
  %vm2229 = vmor %vm2227, %vm2228
  %v2230 = vsel %vm2229, %v2222, %v2226
  %v2231 = vand.u32 2147483647, %v1658
  %vm2232 = vcmp.eq.f32.partialorder %v2231, 8.507059e+37
  %v2233 = vand.u32 %v1658, 2147483648
  %v2234 = vor.u32 1.1754944e-38, %v2233
  %v2235 = vsel %vm2232, %v2234, %v2230
  %v2236 = vmul.f32 1.0, %v2235
  %v2237 = vrcp.pop %v1659
  %v2238 = vmul.f32 %v1659, %v2237
  %v2239 = vsub.f32 1.0, %v2238
  %v2240 = vmul.f32 %v2237, %v2239
  %v2241 = vadd.f32 %v2237, %v2240
  %vm2242 = vweird.f32 %v1659
  %vm2243 = vweird.f32 %v2237
  %vm2244 = vmor %vm2242, %vm2243
  %v2245 = vsel %vm2244, %v2237, %v2241
  %v2246 = vand.u32 2147483647, %v1659
  %vm2247 = vcmp.eq.f32.partialorder %v2246, 8.507059e+37
  %v2248 = vand.u32 %v1659, 2147483648
  %v2249 = vor.u32 1.1754944e-38, %v2248
  %v2250 = vsel %vm2247, %v2249, %v2245
  %v2251 = vmul.f32 1.0, %v2250
  %v2252 = vrcp.pop %v1660
  %v2253 = vmul.f32 %v1660, %v2252
  %v2254 = vsub.f32 1.0, %v2253
  %v2255 = vmul.f32 %v2252, %v2254
  %v2256 = vadd.f32 %v2252, %v2255
  %vm2257 = vweird.f32 %v1660
  %vm2258 = vweird.f32 %v2252
  %vm2259 = vmor %vm2257, %vm2258
  %v2260 = vsel %vm2259, %v2252, %v2256
  %v2261 = vand.u32 2147483647, %v1660
  %vm2262 = vcmp.eq.f32.partialorder %v2261, 8.507059e+37
  %v2263 = vand.u32 %v1660, 2147483648
  %v2264 = vor.u32 1.1754944e-38, %v2263
  %v2265 = vsel %vm2262, %v2264, %v2260
  %v2266 = vmul.f32 1.0, %v2265
  %v2267 = vrcp.pop %v1661
  %v2268 = vmul.f32 %v1661, %v2267
  %v2269 = vsub.f32 1.0, %v2268
  %v2270 = vmul.f32 %v2267, %v2269
  %v2271 = vadd.f32 %v2267, %v2270
  %vm2272 = vweird.f32 %v1661
  %vm2273 = vweird.f32 %v2267
  %vm2274 = vmor %vm2272, %vm2273
  %v2275 = vsel %vm2274, %v2267, %v2271
  %v2276 = vand.u32 2147483647, %v1661
  %vm2277 = vcmp.eq.f32.partialorder %v2276, 8.507059e+37
  %v2278 = vand.u32 %v1661, 2147483648
  %v2279 = vor.u32 1.1754944e-38, %v2278
  %v2280 = vsel %vm2277, %v2279, %v2275
  %v2281 = vmul.f32 1.0, %v2280
  %v2282 = vrcp.pop %v1662
  %v2283 = vmul.f32 %v1662, %v2282
  %v2284 = vsub.f32 1.0, %v2283
  %v2285 = vmul.f32 %v2282, %v2284
  %v2286 = vadd.f32 %v2282, %v2285
  %vm2287 = vweird.f32 %v1662
  %vm2288 = vweird.f32 %v2282
  %vm2289 = vmor %vm2287, %vm2288
  %v2290 = vsel %vm2289, %v2282, %v2286
  %v2291 = vand.u32 2147483647, %v1662
  %vm2292 = vcmp.eq.f32.partialorder %v2291, 8.507059e+37
  %v2293 = vand.u32 %v1662, 2147483648
  %v2294 = vor.u32 1.1754944e-38, %v2293
  %v2295 = vsel %vm2292, %v2294, %v2290
  %v2296 = vmul.f32 1.0, %v2295
  %v2297 = vrcp.pop %v1663
  %v2298 = vmul.f32 %v1663, %v2297
  %v2299 = vsub.f32 1.0, %v2298
  %v2300 = vmul.f32 %v2297, %v2299
  %v2301 = vadd.f32 %v2297, %v2300
  %vm2302 = vweird.f32 %v1663
  %vm2303 = vweird.f32 %v2297
  %vm2304 = vmor %vm2302, %vm2303
  %v2305 = vsel %vm2304, %v2297, %v2301
  %v2306 = vand.u32 2147483647, %v1663
  %vm2307 = vcmp.eq.f32.partialorder %v2306, 8.507059e+37
  %v2308 = vand.u32 %v1663, 2147483648
  %v2309 = vor.u32 1.1754944e-38, %v2308
  %v2310 = vsel %vm2307, %v2309, %v2305
  %v2311 = vmul.f32 1.0, %v2310
  %v2312 = vrcp.pop %v1664
  %v2313 = vmul.f32 %v1664, %v2312
  %v2314 = vsub.f32 1.0, %v2313
  %v2315 = vmul.f32 %v2312, %v2314
  %v2316 = vadd.f32 %v2312, %v2315
  %vm2317 = vweird.f32 %v1664
  %vm2318 = vweird.f32 %v2312
  %vm2319 = vmor %vm2317, %vm2318
  %v2320 = vsel %vm2319, %v2312, %v2316
  %v2321 = vand.u32 2147483647, %v1664
  %vm2322 = vcmp.eq.f32.partialorder %v2321, 8.507059e+37
  %v2323 = vand.u32 %v1664, 2147483648
  %v2324 = vor.u32 1.1754944e-38, %v2323
  %v2325 = vsel %vm2322, %v2324, %v2320
  %v2326 = vmul.f32 1.0, %v2325
  %v2327 = vrcp.pop %v1665
  %v2328 = vmul.f32 %v1665, %v2327
  %v2329 = vsub.f32 1.0, %v2328
  %v2330 = vmul.f32 %v2327, %v2329
  %v2331 = vadd.f32 %v2327, %v2330
  %vm2332 = vweird.f32 %v1665
  %vm2333 = vweird.f32 %v2327
  %vm2334 = vmor %vm2332, %vm2333
  %v2335 = vsel %vm2334, %v2327, %v2331
  %v2336 = vand.u32 2147483647, %v1665
  %vm2337 = vcmp.eq.f32.partialorder %v2336, 8.507059e+37
  %v2338 = vand.u32 %v1665, 2147483648
  %v2339 = vor.u32 1.1754944e-38, %v2338
  %v2340 = vsel %vm2337, %v2339, %v2335
  %v2341 = vmul.f32 1.0, %v2340
  %v2342 = vrcp.pop %v1666
  %v2343 = vmul.f32 %v1666, %v2342
  %v2344 = vsub.f32 1.0, %v2343
  %v2345 = vmul.f32 %v2342, %v2344
  %v2346 = vadd.f32 %v2342, %v2345
  %vm2347 = vweird.f32 %v1666
  %vm2348 = vweird.f32 %v2342
  %vm2349 = vmor %vm2347, %vm2348
  %v2350 = vsel %vm2349, %v2342, %v2346
  %v2351 = vand.u32 2147483647, %v1666
  %vm2352 = vcmp.eq.f32.partialorder %v2351, 8.507059e+37
  %v2353 = vand.u32 %v1666, 2147483648
  %v2354 = vor.u32 1.1754944e-38, %v2353
  %v2355 = vsel %vm2352, %v2354, %v2350
  %v2356 = vmul.f32 1.0, %v2355
  %v2357 = vrcp.pop %v1667
  %v2358 = vmul.f32 %v1667, %v2357
  %v2359 = vsub.f32 1.0, %v2358
  %v2360 = vmul.f32 %v2357, %v2359
  %v2361 = vadd.f32 %v2357, %v2360
  %vm2362 = vweird.f32 %v1667
  %vm2363 = vweird.f32 %v2357
  %vm2364 = vmor %vm2362, %vm2363
  %v2365 = vsel %vm2364, %v2357, %v2361
  %v2366 = vand.u32 2147483647, %v1667
  %vm2367 = vcmp.eq.f32.partialorder %v2366, 8.507059e+37
  %v2368 = vand.u32 %v1667, 2147483648
  %v2369 = vor.u32 1.1754944e-38, %v2368
  %v2370 = vsel %vm2367, %v2369, %v2365
  %v2371 = vmul.f32 1.0, %v2370
  %v2372 = vrcp.pop %v1668
  %v2373 = vmul.f32 %v1668, %v2372
  %v2374 = vsub.f32 1.0, %v2373
  %v2375 = vmul.f32 %v2372, %v2374
  %v2376 = vadd.f32 %v2372, %v2375
  %vm2377 = vweird.f32 %v1668
  %vm2378 = vweird.f32 %v2372
  %vm2379 = vmor %vm2377, %vm2378
  %v2380 = vsel %vm2379, %v2372, %v2376
  %v2381 = vand.u32 2147483647, %v1668
  %vm2382 = vcmp.eq.f32.partialorder %v2381, 8.507059e+37
  %v2383 = vand.u32 %v1668, 2147483648
  %v2384 = vor.u32 1.1754944e-38, %v2383
  %v2385 = vsel %vm2382, %v2384, %v2380
  %v2386 = vmul.f32 1.0, %v2385
  %v2387 = vrcp.pop %v1669
  %v2388 = vmul.f32 %v1669, %v2387
  %v2389 = vsub.f32 1.0, %v2388
  %v2390 = vmul.f32 %v2387, %v2389
  %v2391 = vadd.f32 %v2387, %v2390
  %vm2392 = vweird.f32 %v1669
  %vm2393 = vweird.f32 %v2387
  %vm2394 = vmor %vm2392, %vm2393
  %v2395 = vsel %vm2394, %v2387, %v2391
  %v2396 = vand.u32 2147483647, %v1669
  %vm2397 = vcmp.eq.f32.partialorder %v2396, 8.507059e+37
  %v2398 = vand.u32 %v1669, 2147483648
  %v2399 = vor.u32 1.1754944e-38, %v2398
  %v2400 = vsel %vm2397, %v2399, %v2395
  %v2401 = vmul.f32 1.0, %v2400
  %v2402 = vrcp.pop %v1670
  %v2403 = vmul.f32 %v1670, %v2402
  %v2404 = vsub.f32 1.0, %v2403
  %v2405 = vmul.f32 %v2402, %v2404
  %v2406 = vadd.f32 %v2402, %v2405
  %vm2407 = vweird.f32 %v1670
  %vm2408 = vweird.f32 %v2402
  %vm2409 = vmor %vm2407, %vm2408
  %v2410 = vsel %vm2409, %v2402, %v2406
  %v2411 = vand.u32 2147483647, %v1670
  %vm2412 = vcmp.eq.f32.partialorder %v2411, 8.507059e+37
  %v2413 = vand.u32 %v1670, 2147483648
  %v2414 = vor.u32 1.1754944e-38, %v2413
  %v2415 = vsel %vm2412, %v2414, %v2410
  %v2416 = vmul.f32 1.0, %v2415
  %v2417 = vrcp.pop %v1671
  %v2418 = vmul.f32 %v1671, %v2417
  %v2419 = vsub.f32 1.0, %v2418
  %v2420 = vmul.f32 %v2417, %v2419
  %v2421 = vadd.f32 %v2417, %v2420
  %vm2422 = vweird.f32 %v1671
  %vm2423 = vweird.f32 %v2417
  %vm2424 = vmor %vm2422, %vm2423
  %v2425 = vsel %vm2424, %v2417, %v2421
  %v2426 = vand.u32 2147483647, %v1671
  %vm2427 = vcmp.eq.f32.partialorder %v2426, 8.507059e+37
  %v2428 = vand.u32 %v1671, 2147483648
  %v2429 = vor.u32 1.1754944e-38, %v2428
  %v2430 = vsel %vm2427, %v2429, %v2425
  %v2431 = vmul.f32 1.0, %v2430
  %v2432 = vrcp.pop %v1672
  %v2433 = vmul.f32 %v1672, %v2432
  %v2434 = vsub.f32 1.0, %v2433
  %v2435 = vmul.f32 %v2432, %v2434
  %v2436 = vadd.f32 %v2432, %v2435
  %vm2437 = vweird.f32 %v1672
  %vm2438 = vweird.f32 %v2432
  %vm2439 = vmor %vm2437, %vm2438
  %v2440 = vsel %vm2439, %v2432, %v2436
  %v2441 = vand.u32 2147483647, %v1672
  %vm2442 = vcmp.eq.f32.partialorder %v2441, 8.507059e+37
  %v2443 = vand.u32 %v1672, 2147483648
  %v2444 = vor.u32 1.1754944e-38, %v2443
  %v2445 = vsel %vm2442, %v2444, %v2440
  %v2446 = vmul.f32 1.0, %v2445
  %v2447 = vrcp.pop %v1673
  %v2448 = vmul.f32 %v1673, %v2447
  %v2449 = vsub.f32 1.0, %v2448
  %v2450 = vmul.f32 %v2447, %v2449
  %v2451 = vadd.f32 %v2447, %v2450
  %vm2452 = vweird.f32 %v1673
  %vm2453 = vweird.f32 %v2447
  %vm2454 = vmor %vm2452, %vm2453
  %v2455 = vsel %vm2454, %v2447, %v2451
  %v2456 = vand.u32 2147483647, %v1673
  %vm2457 = vcmp.eq.f32.partialorder %v2456, 8.507059e+37
  %v2458 = vand.u32 %v1673, 2147483648
  %v2459 = vor.u32 1.1754944e-38, %v2458
  %v2460 = vsel %vm2457, %v2459, %v2455
  %v2461 = vmul.f32 1.0, %v2460
  %v2462 = vrcp.pop %v1674
  %v2463 = vmul.f32 %v1674, %v2462
  %v2464 = vsub.f32 1.0, %v2463
  %v2465 = vmul.f32 %v2462, %v2464
  %v2466 = vadd.f32 %v2462, %v2465
  %vm2467 = vweird.f32 %v1674
  %vm2468 = vweird.f32 %v2462
  %vm2469 = vmor %vm2467, %vm2468
  %v2470 = vsel %vm2469, %v2462, %v2466
  %v2471 = vand.u32 2147483647, %v1674
  %vm2472 = vcmp.eq.f32.partialorder %v2471, 8.507059e+37
  %v2473 = vand.u32 %v1674, 2147483648
  %v2474 = vor.u32 1.1754944e-38, %v2473
  %v2475 = vsel %vm2472, %v2474, %v2470
  %v2476 = vmul.f32 1.0, %v2475
  %v2477 = vrcp.pop %v1675
  %v2478 = vmul.f32 %v1675, %v2477
  %v2479 = vsub.f32 1.0, %v2478
  %v2480 = vmul.f32 %v2477, %v2479
  %v2481 = vadd.f32 %v2477, %v2480
  %vm2482 = vweird.f32 %v1675
  %vm2483 = vweird.f32 %v2477
  %vm2484 = vmor %vm2482, %vm2483
  %v2485 = vsel %vm2484, %v2477, %v2481
  %v2486 = vand.u32 2147483647, %v1675
  %vm2487 = vcmp.eq.f32.partialorder %v2486, 8.507059e+37
  %v2488 = vand.u32 %v1675, 2147483648
  %v2489 = vor.u32 1.1754944e-38, %v2488
  %v2490 = vsel %vm2487, %v2489, %v2485
  %v2491 = vmul.f32 1.0, %v2490
  %v2492 = vrcp.pop %v1676
  %v2493 = vmul.f32 %v1676, %v2492
  %v2494 = vsub.f32 1.0, %v2493
  %v2495 = vmul.f32 %v2492, %v2494
  %v2496 = vadd.f32 %v2492, %v2495
  %vm2497 = vweird.f32 %v1676
  %vm2498 = vweird.f32 %v2492
  %vm2499 = vmor %vm2497, %vm2498
  %v2500 = vsel %vm2499, %v2492, %v2496
  %v2501 = vand.u32 2147483647, %v1676
  %vm2502 = vcmp.eq.f32.partialorder %v2501, 8.507059e+37
  %v2503 = vand.u32 %v1676, 2147483648
  %v2504 = vor.u32 1.1754944e-38, %v2503
  %v2505 = vsel %vm2502, %v2504, %v2500
  %v2506 = vmul.f32 1.0, %v2505
  %v2507 = vrcp.pop %v1677
  %v2508 = vmul.f32 %v1677, %v2507
  %v2509 = vsub.f32 1.0, %v2508
  %v2510 = vmul.f32 %v2507, %v2509
  %v2511 = vadd.f32 %v2507, %v2510
  %vm2512 = vweird.f32 %v1677
  %vm2513 = vweird.f32 %v2507
  %vm2514 = vmor %vm2512, %vm2513
  %v2515 = vsel %vm2514, %v2507, %v2511
  %v2516 = vand.u32 2147483647, %v1677
  %vm2517 = vcmp.eq.f32.partialorder %v2516, 8.507059e+37
  %v2518 = vand.u32 %v1677, 2147483648
  %v2519 = vor.u32 1.1754944e-38, %v2518
  %v2520 = vsel %vm2517, %v2519, %v2515
  %v2521 = vmul.f32 1.0, %v2520
  %v2522 = vrcp.pop %v1678
  %v2523 = vmul.f32 %v1678, %v2522
  %v2524 = vsub.f32 1.0, %v2523
  %v2525 = vmul.f32 %v2522, %v2524
  %v2526 = vadd.f32 %v2522, %v2525
  %vm2527 = vweird.f32 %v1678
  %vm2528 = vweird.f32 %v2522
  %vm2529 = vmor %vm2527, %vm2528
  %v2530 = vsel %vm2529, %v2522, %v2526
  %v2531 = vand.u32 2147483647, %v1678
  %vm2532 = vcmp.eq.f32.partialorder %v2531, 8.507059e+37
  %v2533 = vand.u32 %v1678, 2147483648
  %v2534 = vor.u32 1.1754944e-38, %v2533
  %v2535 = vsel %vm2532, %v2534, %v2530
  %v2536 = vmul.f32 1.0, %v2535
  %v2537 = vrcp.pop %v1679
  %v2538 = vmul.f32 %v1679, %v2537
  %v2539 = vsub.f32 1.0, %v2538
  %v2540 = vmul.f32 %v2537, %v2539
  %v2541 = vadd.f32 %v2537, %v2540
  %vm2542 = vweird.f32 %v1679
  %vm2543 = vweird.f32 %v2537
  %vm2544 = vmor %vm2542, %vm2543
  %v2545 = vsel %vm2544, %v2537, %v2541
  %v2546 = vand.u32 2147483647, %v1679
  %vm2547 = vcmp.eq.f32.partialorder %v2546, 8.507059e+37
  %v2548 = vand.u32 %v1679, 2147483648
  %v2549 = vor.u32 1.1754944e-38, %v2548
  %v2550 = vsel %vm2547, %v2549, %v2545
  %v2551 = vmul.f32 1.0, %v2550
  %v2552 = vrcp.pop %v1680
  %v2553 = vmul.f32 %v1680, %v2552
  %v2554 = vsub.f32 1.0, %v2553
  %v2555 = vmul.f32 %v2552, %v2554
  %v2556 = vadd.f32 %v2552, %v2555
  %vm2557 = vweird.f32 %v1680
  %vm2558 = vweird.f32 %v2552
  %vm2559 = vmor %vm2557, %vm2558
  %v2560 = vsel %vm2559, %v2552, %v2556
  %v2561 = vand.u32 2147483647, %v1680
  %vm2562 = vcmp.eq.f32.partialorder %v2561, 8.507059e+37
  %v2563 = vand.u32 %v1680, 2147483648
  %v2564 = vor.u32 1.1754944e-38, %v2563
  %v2565 = vsel %vm2562, %v2564, %v2560
  %v2566 = vmul.f32 1.0, %v2565
  %v2567 = vrcp.pop %v1681
  %v2568 = vmul.f32 %v1681, %v2567
  %v2569 = vsub.f32 1.0, %v2568
  %v2570 = vmul.f32 %v2567, %v2569
  %v2571 = vadd.f32 %v2567, %v2570
  %vm2572 = vweird.f32 %v1681
  %vm2573 = vweird.f32 %v2567
  %vm2574 = vmor %vm2572, %vm2573
  %v2575 = vsel %vm2574, %v2567, %v2571
  %v2576 = vand.u32 2147483647, %v1681
  %vm2577 = vcmp.eq.f32.partialorder %v2576, 8.507059e+37
  %v2578 = vand.u32 %v1681, 2147483648
  %v2579 = vor.u32 1.1754944e-38, %v2578
  %v2580 = vsel %vm2577, %v2579, %v2575
  %v2581 = vmul.f32 1.0, %v2580
  %v2582 = vrcp.pop %v1682
  %v2583 = vmul.f32 %v1682, %v2582
  %v2584 = vsub.f32 1.0, %v2583
  %v2585 = vmul.f32 %v2582, %v2584
  %v2586 = vadd.f32 %v2582, %v2585
  %vm2587 = vweird.f32 %v1682
  %vm2588 = vweird.f32 %v2582
  %vm2589 = vmor %vm2587, %vm2588
  %v2590 = vsel %vm2589, %v2582, %v2586
  %v2591 = vand.u32 2147483647, %v1682
  %vm2592 = vcmp.eq.f32.partialorder %v2591, 8.507059e+37
  %v2593 = vand.u32 %v1682, 2147483648
  %v2594 = vor.u32 1.1754944e-38, %v2593
  %v2595 = vsel %vm2592, %v2594, %v2590
  %v2596 = vmul.f32 1.0, %v2595
  %v2597 = vrcp.pop %v1683
  %v2598 = vmul.f32 %v1683, %v2597
  %v2599 = vsub.f32 1.0, %v2598
  %v2600 = vmul.f32 %v2597, %v2599
  %v2601 = vadd.f32 %v2597, %v2600
  %vm2602 = vweird.f32 %v1683
  %vm2603 = vweird.f32 %v2597
  %vm2604 = vmor %vm2602, %vm2603
  %v2605 = vsel %vm2604, %v2597, %v2601
  %v2606 = vand.u32 2147483647, %v1683
  %vm2607 = vcmp.eq.f32.partialorder %v2606, 8.507059e+37
  %v2608 = vand.u32 %v1683, 2147483648
  %v2609 = vor.u32 1.1754944e-38, %v2608
  %v2610 = vsel %vm2607, %v2609, %v2605
  %v2611 = vmul.f32 1.0, %v2610
  %v2612 = vrcp.pop %v1684
  %v2613 = vmul.f32 %v1684, %v2612
  %v2614 = vsub.f32 1.0, %v2613
  %v2615 = vmul.f32 %v2612, %v2614
  %v2616 = vadd.f32 %v2612, %v2615
  %vm2617 = vweird.f32 %v1684
  %vm2618 = vweird.f32 %v2612
  %vm2619 = vmor %vm2617, %vm2618
  %v2620 = vsel %vm2619, %v2612, %v2616
  %v2621 = vand.u32 2147483647, %v1684
  %vm2622 = vcmp.eq.f32.partialorder %v2621, 8.507059e+37
  %v2623 = vand.u32 %v1684, 2147483648
  %v2624 = vor.u32 1.1754944e-38, %v2623
  %v2625 = vsel %vm2622, %v2624, %v2620
  %v2626 = vmul.f32 1.0, %v2625
  %v2627 = vrcp.pop %v1685
  %v2628 = vmul.f32 %v1685, %v2627
  %v2629 = vsub.f32 1.0, %v2628
  %v2630 = vmul.f32 %v2627, %v2629
  %v2631 = vadd.f32 %v2627, %v2630
  %vm2632 = vweird.f32 %v1685
  %vm2633 = vweird.f32 %v2627
  %vm2634 = vmor %vm2632, %vm2633
  %v2635 = vsel %vm2634, %v2627, %v2631
  %v2636 = vand.u32 2147483647, %v1685
  %vm2637 = vcmp.eq.f32.partialorder %v2636, 8.507059e+37
  %v2638 = vand.u32 %v1685, 2147483648
  %v2639 = vor.u32 1.1754944e-38, %v2638
  %v2640 = vsel %vm2637, %v2639, %v2635
  %v2641 = vmul.f32 1.0, %v2640
  %v2642 = vrcp.pop %v1686
  %v2643 = vmul.f32 %v1686, %v2642
  %v2644 = vsub.f32 1.0, %v2643
  %v2645 = vmul.f32 %v2642, %v2644
  %v2646 = vadd.f32 %v2642, %v2645
  %vm2647 = vweird.f32 %v1686
  %vm2648 = vweird.f32 %v2642
  %vm2649 = vmor %vm2647, %vm2648
  %v2650 = vsel %vm2649, %v2642, %v2646
  %v2651 = vand.u32 2147483647, %v1686
  %vm2652 = vcmp.eq.f32.partialorder %v2651, 8.507059e+37
  %v2653 = vand.u32 %v1686, 2147483648
  %v2654 = vor.u32 1.1754944e-38, %v2653
  %v2655 = vsel %vm2652, %v2654, %v2650
  %v2656 = vmul.f32 1.0, %v2655
  %v2657 = vrcp.pop %v1687
  %v2658 = vmul.f32 %v1687, %v2657
  %v2659 = vsub.f32 1.0, %v2658
  %v2660 = vmul.f32 %v2657, %v2659
  %v2661 = vadd.f32 %v2657, %v2660
  %vm2662 = vweird.f32 %v1687
  %vm2663 = vweird.f32 %v2657
  %vm2664 = vmor %vm2662, %vm2663
  %v2665 = vsel %vm2664, %v2657, %v2661
  %v2666 = vand.u32 2147483647, %v1687
  %vm2667 = vcmp.eq.f32.partialorder %v2666, 8.507059e+37
  %v2668 = vand.u32 %v1687, 2147483648
  %v2669 = vor.u32 1.1754944e-38, %v2668
  %v2670 = vsel %vm2667, %v2669, %v2665
  %v2671 = vmul.f32 1.0, %v2670
  %v2672 = vrcp.pop %v1688
  %v2673 = vmul.f32 %v1688, %v2672
  %v2674 = vsub.f32 1.0, %v2673
  %v2675 = vmul.f32 %v2672, %v2674
  %v2676 = vadd.f32 %v2672, %v2675
  %vm2677 = vweird.f32 %v1688
  %vm2678 = vweird.f32 %v2672
  %vm2679 = vmor %vm2677, %vm2678
  %v2680 = vsel %vm2679, %v2672, %v2676
  %v2681 = vand.u32 2147483647, %v1688
  %vm2682 = vcmp.eq.f32.partialorder %v2681, 8.507059e+37
  %v2683 = vand.u32 %v1688, 2147483648
  %v2684 = vor.u32 1.1754944e-38, %v2683
  %v2685 = vsel %vm2682, %v2684, %v2680
  %v2686 = vmul.f32 1.0, %v2685
  %v2687 = vrcp.pop %v1689
  %v2688 = vmul.f32 %v1689, %v2687
  %v2689 = vsub.f32 1.0, %v2688
  %v2690 = vmul.f32 %v2687, %v2689
  %v2691 = vadd.f32 %v2687, %v2690
  %vm2692 = vweird.f32 %v1689
  %vm2693 = vweird.f32 %v2687
  %vm2694 = vmor %vm2692, %vm2693
  %v2695 = vsel %vm2694, %v2687, %v2691
  %v2696 = vand.u32 2147483647, %v1689
  %vm2697 = vcmp.eq.f32.partialorder %v2696, 8.507059e+37
  %v2698 = vand.u32 %v1689, 2147483648
  %v2699 = vor.u32 1.1754944e-38, %v2698
  %v2700 = vsel %vm2697, %v2699, %v2695
  %v2701 = vmul.f32 1.0, %v2700
  %v2702 = vrcp.pop %v1690
  %v2703 = vmul.f32 %v1690, %v2702
  %v2704 = vsub.f32 1.0, %v2703
  %v2705 = vmul.f32 %v2702, %v2704
  %v2706 = vadd.f32 %v2702, %v2705
  %vm2707 = vweird.f32 %v1690
  %vm2708 = vweird.f32 %v2702
  %vm2709 = vmor %vm2707, %vm2708
  %v2710 = vsel %vm2709, %v2702, %v2706
  %v2711 = vand.u32 2147483647, %v1690
  %vm2712 = vcmp.eq.f32.partialorder %v2711, 8.507059e+37
  %v2713 = vand.u32 %v1690, 2147483648
  %v2714 = vor.u32 1.1754944e-38, %v2713
  %v2715 = vsel %vm2712, %v2714, %v2710
  %v2716 = vmul.f32 1.0, %v2715
  %v2717 = vrcp.pop %v1691
  %v2718 = vmul.f32 %v1691, %v2717
  %v2719 = vsub.f32 1.0, %v2718
  %v2720 = vmul.f32 %v2717, %v2719
  %v2721 = vadd.f32 %v2717, %v2720
  %vm2722 = vweird.f32 %v1691
  %vm2723 = vweird.f32 %v2717
  %vm2724 = vmor %vm2722, %vm2723
  %v2725 = vsel %vm2724, %v2717, %v2721
  %v2726 = vand.u32 2147483647, %v1691
  %vm2727 = vcmp.eq.f32.partialorder %v2726, 8.507059e+37
  %v2728 = vand.u32 %v1691, 2147483648
  %v2729 = vor.u32 1.1754944e-38, %v2728
  %v2730 = vsel %vm2727, %v2729, %v2725
  %v2731 = vmul.f32 1.0, %v2730
  %v2732 = vrcp.pop %v1692
  %v2733 = vmul.f32 %v1692, %v2732
  %v2734 = vsub.f32 1.0, %v2733
  %v2735 = vmul.f32 %v2732, %v2734
  %v2736 = vadd.f32 %v2732, %v2735
  %vm2737 = vweird.f32 %v1692
  %vm2738 = vweird.f32 %v2732
  %vm2739 = vmor %vm2737, %vm2738
  %v2740 = vsel %vm2739, %v2732, %v2736
  %v2741 = vand.u32 2147483647, %v1692
  %vm2742 = vcmp.eq.f32.partialorder %v2741, 8.507059e+37
  %v2743 = vand.u32 %v1692, 2147483648
  %v2744 = vor.u32 1.1754944e-38, %v2743
  %v2745 = vsel %vm2742, %v2744, %v2740
  %v2746 = vmul.f32 1.0, %v2745
  %v2747 = vrcp.pop %v1693
  %v2748 = vmul.f32 %v1693, %v2747
  %v2749 = vsub.f32 1.0, %v2748
  %v2750 = vmul.f32 %v2747, %v2749
  %v2751 = vadd.f32 %v2747, %v2750
  %vm2752 = vweird.f32 %v1693
  %vm2753 = vweird.f32 %v2747
  %vm2754 = vmor %vm2752, %vm2753
  %v2755 = vsel %vm2754, %v2747, %v2751
  %v2756 = vand.u32 2147483647, %v1693
  %vm2757 = vcmp.eq.f32.partialorder %v2756, 8.507059e+37
  %v2758 = vand.u32 %v1693, 2147483648
  %v2759 = vor.u32 1.1754944e-38, %v2758
  %v2760 = vsel %vm2757, %v2759, %v2755
  %v2761 = vmul.f32 1.0, %v2760
  %v2762 = vrcp.pop %v1694
  %v2763 = vmul.f32 %v1694, %v2762
  %v2764 = vsub.f32 1.0, %v2763
  %v2765 = vmul.f32 %v2762, %v2764
  %v2766 = vadd.f32 %v2762, %v2765
  %vm2767 = vweird.f32 %v1694
  %vm2768 = vweird.f32 %v2762
  %vm2769 = vmor %vm2767, %vm2768
  %v2770 = vsel %vm2769, %v2762, %v2766
  %v2771 = vand.u32 2147483647, %v1694
  %vm2772 = vcmp.eq.f32.partialorder %v2771, 8.507059e+37
  %v2773 = vand.u32 %v1694, 2147483648
  %v2774 = vor.u32 1.1754944e-38, %v2773
  %v2775 = vsel %vm2772, %v2774, %v2770
  %v2776 = vmul.f32 1.0, %v2775
  %v2777 = vrcp.pop %v1695
  %v2778 = vmul.f32 %v1695, %v2777
  %v2779 = vsub.f32 1.0, %v2778
  %v2780 = vmul.f32 %v2777, %v2779
  %v2781 = vadd.f32 %v2777, %v2780
  %vm2782 = vweird.f32 %v1695
  %vm2783 = vweird.f32 %v2777
  %vm2784 = vmor %vm2782, %vm2783
  %v2785 = vsel %vm2784, %v2777, %v2781
  %v2786 = vand.u32 2147483647, %v1695
  %vm2787 = vcmp.eq.f32.partialorder %v2786, 8.507059e+37
  %v2788 = vand.u32 %v1695, 2147483648
  %v2789 = vor.u32 1.1754944e-38, %v2788
  %v2790 = vsel %vm2787, %v2789, %v2785
  %v2791 = vmul.f32 1.0, %v2790
  %v2792 = vrcp.pop %v1696
  %v2793 = vmul.f32 %v1696, %v2792
  %v2794 = vsub.f32 1.0, %v2793
  %v2795 = vmul.f32 %v2792, %v2794
  %v2796 = vadd.f32 %v2792, %v2795
  %vm2797 = vweird.f32 %v1696
  %vm2798 = vweird.f32 %v2792
  %vm2799 = vmor %vm2797, %vm2798
  %v2800 = vsel %vm2799, %v2792, %v2796
  %v2801 = vand.u32 2147483647, %v1696
  %vm2802 = vcmp.eq.f32.partialorder %v2801, 8.507059e+37
  %v2803 = vand.u32 %v1696, 2147483648
  %v2804 = vor.u32 1.1754944e-38, %v2803
  %v2805 = vsel %vm2802, %v2804, %v2800
  %v2806 = vmul.f32 1.0, %v2805
  %v2807 = vrcp.pop %v1697
  %v2808 = vmul.f32 %v1697, %v2807
  %v2809 = vsub.f32 1.0, %v2808
  %v2810 = vmul.f32 %v2807, %v2809
  %v2811 = vadd.f32 %v2807, %v2810
  %vm2812 = vweird.f32 %v1697
  %vm2813 = vweird.f32 %v2807
  %vm2814 = vmor %vm2812, %vm2813
  %v2815 = vsel %vm2814, %v2807, %v2811
  %v2816 = vand.u32 2147483647, %v1697
  %vm2817 = vcmp.eq.f32.partialorder %v2816, 8.507059e+37
  %v2818 = vand.u32 %v1697, 2147483648
  %v2819 = vor.u32 1.1754944e-38, %v2818
  %v2820 = vsel %vm2817, %v2819, %v2815
  %v2821 = vmul.f32 1.0, %v2820
  %v2822 = vrcp.pop %v1698
  %v2823 = vmul.f32 %v1698, %v2822
  %v2824 = vsub.f32 1.0, %v2823
  %v2825 = vmul.f32 %v2822, %v2824
  %v2826 = vadd.f32 %v2822, %v2825
  %vm2827 = vweird.f32 %v1698
  %vm2828 = vweird.f32 %v2822
  %vm2829 = vmor %vm2827, %vm2828
  %v2830 = vsel %vm2829, %v2822, %v2826
  %v2831 = vand.u32 2147483647, %v1698
  %vm2832 = vcmp.eq.f32.partialorder %v2831, 8.507059e+37
  %v2833 = vand.u32 %v1698, 2147483648
  %v2834 = vor.u32 1.1754944e-38, %v2833
  %v2835 = vsel %vm2832, %v2834, %v2830
  %v2836 = vmul.f32 1.0, %v2835
  %v2837 = vrcp.pop %v1699
  %v2838 = vmul.f32 %v1699, %v2837
  %v2839 = vsub.f32 1.0, %v2838
  %v2840 = vmul.f32 %v2837, %v2839
  %v2841 = vadd.f32 %v2837, %v2840
  %vm2842 = vweird.f32 %v1699
  %vm2843 = vweird.f32 %v2837
  %vm2844 = vmor %vm2842, %vm2843
  %v2845 = vsel %vm2844, %v2837, %v2841
  %v2846 = vand.u32 2147483647, %v1699
  %vm2847 = vcmp.eq.f32.partialorder %v2846, 8.507059e+37
  %v2848 = vand.u32 %v1699, 2147483648
  %v2849 = vor.u32 1.1754944e-38, %v2848
  %v2850 = vsel %vm2847, %v2849, %v2845
  %v2851 = vmul.f32 1.0, %v2850
  %v2852 = vrcp.pop %v1700
  %v2853 = vmul.f32 %v1700, %v2852
  %v2854 = vsub.f32 1.0, %v2853
  %v2855 = vmul.f32 %v2852, %v2854
  %v2856 = vadd.f32 %v2852, %v2855
  %vm2857 = vweird.f32 %v1700
  %vm2858 = vweird.f32 %v2852
  %vm2859 = vmor %vm2857, %vm2858
  %v2860 = vsel %vm2859, %v2852, %v2856
  %v2861 = vand.u32 2147483647, %v1700
  %vm2862 = vcmp.eq.f32.partialorder %v2861, 8.507059e+37
  %v2863 = vand.u32 %v1700, 2147483648
  %v2864 = vor.u32 1.1754944e-38, %v2863
  %v2865 = vsel %vm2862, %v2864, %v2860
  %v2866 = vmul.f32 1.0, %v2865
  %v2867 = vrcp.pop %v1701
  %v2868 = vmul.f32 %v1701, %v2867
  %v2869 = vsub.f32 1.0, %v2868
  %v2870 = vmul.f32 %v2867, %v2869
  %v2871 = vadd.f32 %v2867, %v2870
  %vm2872 = vweird.f32 %v1701
  %vm2873 = vweird.f32 %v2867
  %vm2874 = vmor %vm2872, %vm2873
  %v2875 = vsel %vm2874, %v2867, %v2871
  %v2876 = vand.u32 2147483647, %v1701
  %vm2877 = vcmp.eq.f32.partialorder %v2876, 8.507059e+37
  %v2878 = vand.u32 %v1701, 2147483648
  %v2879 = vor.u32 1.1754944e-38, %v2878
  %v2880 = vsel %vm2877, %v2879, %v2875
  %v2881 = vmul.f32 1.0, %v2880
  %v2882 = vrcp.pop %v1702
  %v2883 = vmul.f32 %v1702, %v2882
  %v2884 = vsub.f32 1.0, %v2883
  %v2885 = vmul.f32 %v2882, %v2884
  %v2886 = vadd.f32 %v2882, %v2885
  %vm2887 = vweird.f32 %v1702
  %vm2888 = vweird.f32 %v2882
  %vm2889 = vmor %vm2887, %vm2888
  %v2890 = vsel %vm2889, %v2882, %v2886
  %v2891 = vand.u32 2147483647, %v1702
  %vm2892 = vcmp.eq.f32.partialorder %v2891, 8.507059e+37
  %v2893 = vand.u32 %v1702, 2147483648
  %v2894 = vor.u32 1.1754944e-38, %v2893
  %v2895 = vsel %vm2892, %v2894, %v2890
  %v2896 = vmul.f32 1.0, %v2895
  %v2897 = vrcp.pop %v1703
  %v2898 = vmul.f32 %v1703, %v2897
  %v2899 = vsub.f32 1.0, %v2898
  %v2900 = vmul.f32 %v2897, %v2899
  %v2901 = vadd.f32 %v2897, %v2900
  %vm2902 = vweird.f32 %v1703
  %vm2903 = vweird.f32 %v2897
  %vm2904 = vmor %vm2902, %vm2903
  %v2905 = vsel %vm2904, %v2897, %v2901
  %v2906 = vand.u32 2147483647, %v1703
  %vm2907 = vcmp.eq.f32.partialorder %v2906, 8.507059e+37
  %v2908 = vand.u32 %v1703, 2147483648
  %v2909 = vor.u32 1.1754944e-38, %v2908
  %v2910 = vsel %vm2907, %v2909, %v2905
  %v2911 = vmul.f32 1.0, %v2910
  %v2912 = vrcp.pop %v1704
  %v2913 = vmul.f32 %v1704, %v2912
  %v2914 = vsub.f32 1.0, %v2913
  %v2915 = vmul.f32 %v2912, %v2914
  %v2916 = vadd.f32 %v2912, %v2915
  %vm2917 = vweird.f32 %v1704
  %vm2918 = vweird.f32 %v2912
  %vm2919 = vmor %vm2917, %vm2918
  %v2920 = vsel %vm2919, %v2912, %v2916
  %v2921 = vand.u32 2147483647, %v1704
  %vm2922 = vcmp.eq.f32.partialorder %v2921, 8.507059e+37
  %v2923 = vand.u32 %v1704, 2147483648
  %v2924 = vor.u32 1.1754944e-38, %v2923
  %v2925 = vsel %vm2922, %v2924, %v2920
  %v2926 = vmul.f32 1.0, %v2925
  %v2927 = vrcp.pop %v1705
  %v2928 = vmul.f32 %v1705, %v2927
  %v2929 = vsub.f32 1.0, %v2928
  %v2930 = vmul.f32 %v2927, %v2929
  %v2931 = vadd.f32 %v2927, %v2930
  %vm2932 = vweird.f32 %v1705
  %vm2933 = vweird.f32 %v2927
  %vm2934 = vmor %vm2932, %vm2933
  %v2935 = vsel %vm2934, %v2927, %v2931
  %v2936 = vand.u32 2147483647, %v1705
  %vm2937 = vcmp.eq.f32.partialorder %v2936, 8.507059e+37
  %v2938 = vand.u32 %v1705, 2147483648
  %v2939 = vor.u32 1.1754944e-38, %v2938
  %v2940 = vsel %vm2937, %v2939, %v2935
  %v2941 = vmul.f32 1.0, %v2940
  %v2942 = vrcp.pop %v1706
  %v2943 = vmul.f32 %v1706, %v2942
  %v2944 = vsub.f32 1.0, %v2943
  %v2945 = vmul.f32 %v2942, %v2944
  %v2946 = vadd.f32 %v2942, %v2945
  %vm2947 = vweird.f32 %v1706
  %vm2948 = vweird.f32 %v2942
  %vm2949 = vmor %vm2947, %vm2948
  %v2950 = vsel %vm2949, %v2942, %v2946
  %v2951 = vand.u32 2147483647, %v1706
  %vm2952 = vcmp.eq.f32.partialorder %v2951, 8.507059e+37
  %v2953 = vand.u32 %v1706, 2147483648
  %v2954 = vor.u32 1.1754944e-38, %v2953
  %v2955 = vsel %vm2952, %v2954, %v2950
  %v2956 = vmul.f32 1.0, %v2955
  %v2957 = vrcp.pop %v1707
  %v2958 = vmul.f32 %v1707, %v2957
  %v2959 = vsub.f32 1.0, %v2958
  %v2960 = vmul.f32 %v2957, %v2959
  %v2961 = vadd.f32 %v2957, %v2960
  %vm2962 = vweird.f32 %v1707
  %vm2963 = vweird.f32 %v2957
  %vm2964 = vmor %vm2962, %vm2963
  %v2965 = vsel %vm2964, %v2957, %v2961
  %v2966 = vand.u32 2147483647, %v1707
  %vm2967 = vcmp.eq.f32.partialorder %v2966, 8.507059e+37
  %v2968 = vand.u32 %v1707, 2147483648
  %v2969 = vor.u32 1.1754944e-38, %v2968
  %v2970 = vsel %vm2967, %v2969, %v2965
  %v2971 = vmul.f32 1.0, %v2970
  %v2972 = vrcp.pop %v1708
  %v2973 = vmul.f32 %v1708, %v2972
  %v2974 = vsub.f32 1.0, %v2973
  %v2975 = vmul.f32 %v2972, %v2974
  %v2976 = vadd.f32 %v2972, %v2975
  %vm2977 = vweird.f32 %v1708
  %vm2978 = vweird.f32 %v2972
  %vm2979 = vmor %vm2977, %vm2978
  %v2980 = vsel %vm2979, %v2972, %v2976
  %v2981 = vand.u32 2147483647, %v1708
  %vm2982 = vcmp.eq.f32.partialorder %v2981, 8.507059e+37
  %v2983 = vand.u32 %v1708, 2147483648
  %v2984 = vor.u32 1.1754944e-38, %v2983
  %v2985 = vsel %vm2982, %v2984, %v2980
  %v2986 = vmul.f32 1.0, %v2985
  %v2987 = vrcp.pop %v1709
  %v2988 = vmul.f32 %v1709, %v2987
  %v2989 = vsub.f32 1.0, %v2988
  %v2990 = vmul.f32 %v2987, %v2989
  %v2991 = vadd.f32 %v2987, %v2990
  %vm2992 = vweird.f32 %v1709
  %vm2993 = vweird.f32 %v2987
  %vm2994 = vmor %vm2992, %vm2993
  %v2995 = vsel %vm2994, %v2987, %v2991
  %v2996 = vand.u32 2147483647, %v1709
  %vm2997 = vcmp.eq.f32.partialorder %v2996, 8.507059e+37
  %v2998 = vand.u32 %v1709, 2147483648
  %v2999 = vor.u32 1.1754944e-38, %v2998
  %v3000 = vsel %vm2997, %v2999, %v2995
  %v3001 = vmul.f32 1.0, %v3000
  %v3002 = vrcp.pop %v1710
  %v3003 = vmul.f32 %v1710, %v3002
  %v3004 = vsub.f32 1.0, %v3003
  %v3005 = vmul.f32 %v3002, %v3004
  %v3006 = vadd.f32 %v3002, %v3005
  %vm3007 = vweird.f32 %v1710
  %vm3008 = vweird.f32 %v3002
  %vm3009 = vmor %vm3007, %vm3008
  %v3010 = vsel %vm3009, %v3002, %v3006
  %v3011 = vand.u32 2147483647, %v1710
  %vm3012 = vcmp.eq.f32.partialorder %v3011, 8.507059e+37
  %v3013 = vand.u32 %v1710, 2147483648
  %v3014 = vor.u32 1.1754944e-38, %v3013
  %v3015 = vsel %vm3012, %v3014, %v3010
  %v3016 = vmul.f32 1.0, %v3015
  %v3017 = vrcp.pop %v1711
  %v3018 = vmul.f32 %v1711, %v3017
  %v3019 = vsub.f32 1.0, %v3018
  %v3020 = vmul.f32 %v3017, %v3019
  %v3021 = vadd.f32 %v3017, %v3020
  %vm3022 = vweird.f32 %v1711
  %vm3023 = vweird.f32 %v3017
  %vm3024 = vmor %vm3022, %vm3023
  %v3025 = vsel %vm3024, %v3017, %v3021
  %v3026 = vand.u32 2147483647, %v1711
  %vm3027 = vcmp.eq.f32.partialorder %v3026, 8.507059e+37
  %v3028 = vand.u32 %v1711, 2147483648
  %v3029 = vor.u32 1.1754944e-38, %v3028
  %v3030 = vsel %vm3027, %v3029, %v3025
  %v3031 = vmul.f32 1.0, %v3030
  %v3032 = vrcp.pop %v1712
  %v3033 = vmul.f32 %v1712, %v3032
  %v3034 = vsub.f32 1.0, %v3033
  %v3035 = vmul.f32 %v3032, %v3034
  %v3036 = vadd.f32 %v3032, %v3035
  %vm3037 = vweird.f32 %v1712
  %vm3038 = vweird.f32 %v3032
  %vm3039 = vmor %vm3037, %vm3038
  %v3040 = vsel %vm3039, %v3032, %v3036
  %v3041 = vand.u32 2147483647, %v1712
  %vm3042 = vcmp.eq.f32.partialorder %v3041, 8.507059e+37
  %v3043 = vand.u32 %v1712, 2147483648
  %v3044 = vor.u32 1.1754944e-38, %v3043
  %v3045 = vsel %vm3042, %v3044, %v3040
  %v3046 = vmul.f32 1.0, %v3045
  %v3047 = vrcp.pop %v1713
  %v3048 = vmul.f32 %v1713, %v3047
  %v3049 = vsub.f32 1.0, %v3048
  %v3050 = vmul.f32 %v3047, %v3049
  %v3051 = vadd.f32 %v3047, %v3050
  %vm3052 = vweird.f32 %v1713
  %vm3053 = vweird.f32 %v3047
  %vm3054 = vmor %vm3052, %vm3053
  %v3055 = vsel %vm3054, %v3047, %v3051
  %v3056 = vand.u32 2147483647, %v1713
  %vm3057 = vcmp.eq.f32.partialorder %v3056, 8.507059e+37
  %v3058 = vand.u32 %v1713, 2147483648
  %v3059 = vor.u32 1.1754944e-38, %v3058
  %v3060 = vsel %vm3057, %v3059, %v3055
  %v3061 = vmul.f32 1.0, %v3060
  %v3062 = vrcp.pop %v1714
  %v3063 = vmul.f32 %v1714, %v3062
  %v3064 = vsub.f32 1.0, %v3063
  %v3065 = vmul.f32 %v3062, %v3064
  %v3066 = vadd.f32 %v3062, %v3065
  %vm3067 = vweird.f32 %v1714
  %vm3068 = vweird.f32 %v3062
  %vm3069 = vmor %vm3067, %vm3068
  %v3070 = vsel %vm3069, %v3062, %v3066
  %v3071 = vand.u32 2147483647, %v1714
  %vm3072 = vcmp.eq.f32.partialorder %v3071, 8.507059e+37
  %v3073 = vand.u32 %v1714, 2147483648
  %v3074 = vor.u32 1.1754944e-38, %v3073
  %v3075 = vsel %vm3072, %v3074, %v3070
  %v3076 = vmul.f32 1.0, %v3075
  %v3077 = vrcp.pop %v1715
  %v3078 = vmul.f32 %v1715, %v3077
  %v3079 = vsub.f32 1.0, %v3078
  %v3080 = vmul.f32 %v3077, %v3079
  %v3081 = vadd.f32 %v3077, %v3080
  %vm3082 = vweird.f32 %v1715
  %vm3083 = vweird.f32 %v3077
  %vm3084 = vmor %vm3082, %vm3083
  %v3085 = vsel %vm3084, %v3077, %v3081
  %v3086 = vand.u32 2147483647, %v1715
  %vm3087 = vcmp.eq.f32.partialorder %v3086, 8.507059e+37
  %v3088 = vand.u32 %v1715, 2147483648
  %v3089 = vor.u32 1.1754944e-38, %v3088
  %v3090 = vsel %vm3087, %v3089, %v3085
  %v3091 = vmul.f32 1.0, %v3090
  %v3092 = vrcp.pop %v1716
  %v3093 = vmul.f32 %v1716, %v3092
  %v3094 = vsub.f32 1.0, %v3093
  %v3095 = vmul.f32 %v3092, %v3094
  %v3096 = vadd.f32 %v3092, %v3095
  %vm3097 = vweird.f32 %v1716
  %vm3098 = vweird.f32 %v3092
  %vm3099 = vmor %vm3097, %vm3098
  %v3100 = vsel %vm3099, %v3092, %v3096
  %v3101 = vand.u32 2147483647, %v1716
  %vm3102 = vcmp.eq.f32.partialorder %v3101, 8.507059e+37
  %v3103 = vand.u32 %v1716, 2147483648
  %v3104 = vor.u32 1.1754944e-38, %v3103
  %v3105 = vsel %vm3102, %v3104, %v3100
  %v3106 = vmul.f32 1.0, %v3105
  %v3107 = vrcp.pop %v1717
  %v3108 = vmul.f32 %v1717, %v3107
  %v3109 = vsub.f32 1.0, %v3108
  %v3110 = vmul.f32 %v3107, %v3109
  %v3111 = vadd.f32 %v3107, %v3110
  %vm3112 = vweird.f32 %v1717
  %vm3113 = vweird.f32 %v3107
  %vm3114 = vmor %vm3112, %vm3113
  %v3115 = vsel %vm3114, %v3107, %v3111
  %v3116 = vand.u32 2147483647, %v1717
  %vm3117 = vcmp.eq.f32.partialorder %v3116, 8.507059e+37
  %v3118 = vand.u32 %v1717, 2147483648
  %v3119 = vor.u32 1.1754944e-38, %v3118
  %v3120 = vsel %vm3117, %v3119, %v3115
  %v3121 = vmul.f32 1.0, %v3120
  %v3122 = vrcp.pop %v1718
  %v3123 = vmul.f32 %v1718, %v3122
  %v3124 = vsub.f32 1.0, %v3123
  %v3125 = vmul.f32 %v3122, %v3124
  %v3126 = vadd.f32 %v3122, %v3125
  %vm3127 = vweird.f32 %v1718
  %vm3128 = vweird.f32 %v3122
  %vm3129 = vmor %vm3127, %vm3128
  %v3130 = vsel %vm3129, %v3122, %v3126
  %v3131 = vand.u32 2147483647, %v1718
  %vm3132 = vcmp.eq.f32.partialorder %v3131, 8.507059e+37
  %v3133 = vand.u32 %v1718, 2147483648
  %v3134 = vor.u32 1.1754944e-38, %v3133
  %v3135 = vsel %vm3132, %v3134, %v3130
  %v3136 = vmul.f32 1.0, %v3135
  %v3137 = vrcp.pop %v1719
  %v3138 = vmul.f32 %v1719, %v3137
  %v3139 = vsub.f32 1.0, %v3138
  %v3140 = vmul.f32 %v3137, %v3139
  %v3141 = vadd.f32 %v3137, %v3140
  %vm3142 = vweird.f32 %v1719
  %vm3143 = vweird.f32 %v3137
  %vm3144 = vmor %vm3142, %vm3143
  %v3145 = vsel %vm3144, %v3137, %v3141
  %v3146 = vand.u32 2147483647, %v1719
  %vm3147 = vcmp.eq.f32.partialorder %v3146, 8.507059e+37
  %v3148 = vand.u32 %v1719, 2147483648
  %v3149 = vor.u32 1.1754944e-38, %v3148
  %v3150 = vsel %vm3147, %v3149, %v3145
  %v3151 = vmul.f32 1.0, %v3150
  %v3152 = vrcp.pop %v1720
  %v3153 = vmul.f32 %v1720, %v3152
  %v3154 = vsub.f32 1.0, %v3153
  %v3155 = vmul.f32 %v3152, %v3154
  %v3156 = vadd.f32 %v3152, %v3155
  %vm3157 = vweird.f32 %v1720
  %vm3158 = vweird.f32 %v3152
  %vm3159 = vmor %vm3157, %vm3158
  %v3160 = vsel %vm3159, %v3152, %v3156
  %v3161 = vand.u32 2147483647, %v1720
  %vm3162 = vcmp.eq.f32.partialorder %v3161, 8.507059e+37
  %v3163 = vand.u32 %v1720, 2147483648
  %v3164 = vor.u32 1.1754944e-38, %v3163
  %v3165 = vsel %vm3162, %v3164, %v3160
  %v3166 = vmul.f32 1.0, %v3165
  %v3167 = vrcp.pop %v1721
  %v3168 = vmul.f32 %v1721, %v3167
  %v3169 = vsub.f32 1.0, %v3168
  %v3170 = vmul.f32 %v3167, %v3169
  %v3171 = vadd.f32 %v3167, %v3170
  %vm3172 = vweird.f32 %v1721
  %vm3173 = vweird.f32 %v3167
  %vm3174 = vmor %vm3172, %vm3173
  %v3175 = vsel %vm3174, %v3167, %v3171
  %v3176 = vand.u32 2147483647, %v1721
  %vm3177 = vcmp.eq.f32.partialorder %v3176, 8.507059e+37
  %v3178 = vand.u32 %v1721, 2147483648
  %v3179 = vor.u32 1.1754944e-38, %v3178
  %v3180 = vsel %vm3177, %v3179, %v3175
  %v3181 = vmul.f32 1.0, %v3180
  %v3182 = vrcp.pop %v1722
  %v3183 = vmul.f32 %v1722, %v3182
  %v3184 = vsub.f32 1.0, %v3183
  %v3185 = vmul.f32 %v3182, %v3184
  %v3186 = vadd.f32 %v3182, %v3185
  %vm3187 = vweird.f32 %v1722
  %vm3188 = vweird.f32 %v3182
  %vm3189 = vmor %vm3187, %vm3188
  %v3190 = vsel %vm3189, %v3182, %v3186
  %v3191 = vand.u32 2147483647, %v1722
  %vm3192 = vcmp.eq.f32.partialorder %v3191, 8.507059e+37
  %v3193 = vand.u32 %v1722, 2147483648
  %v3194 = vor.u32 1.1754944e-38, %v3193
  %v3195 = vsel %vm3192, %v3194, %v3190
  %v3196 = vmul.f32 1.0, %v3195
  %v3197 = vrcp.pop %v1723
  %v3198 = vmul.f32 %v1723, %v3197
  %v3199 = vsub.f32 1.0, %v3198
  %v3200 = vmul.f32 %v3197, %v3199
  %v3201 = vadd.f32 %v3197, %v3200
  %vm3202 = vweird.f32 %v1723
  %vm3203 = vweird.f32 %v3197
  %vm3204 = vmor %vm3202, %vm3203
  %v3205 = vsel %vm3204, %v3197, %v3201
  %v3206 = vand.u32 2147483647, %v1723
  %vm3207 = vcmp.eq.f32.partialorder %v3206, 8.507059e+37
  %v3208 = vand.u32 %v1723, 2147483648
  %v3209 = vor.u32 1.1754944e-38, %v3208
  %v3210 = vsel %vm3207, %v3209, %v3205
  %v3211 = vmul.f32 1.0, %v3210
  %v3212 = vrcp.pop %v1724
  %v3213 = vmul.f32 %v1724, %v3212
  %v3214 = vsub.f32 1.0, %v3213
  %v3215 = vmul.f32 %v3212, %v3214
  %v3216 = vadd.f32 %v3212, %v3215
  %vm3217 = vweird.f32 %v1724
  %vm3218 = vweird.f32 %v3212
  %vm3219 = vmor %vm3217, %vm3218
  %v3220 = vsel %vm3219, %v3212, %v3216
  %v3221 = vand.u32 2147483647, %v1724
  %vm3222 = vcmp.eq.f32.partialorder %v3221, 8.507059e+37
  %v3223 = vand.u32 %v1724, 2147483648
  %v3224 = vor.u32 1.1754944e-38, %v3223
  %v3225 = vsel %vm3222, %v3224, %v3220
  %v3226 = vmul.f32 1.0, %v3225
  %v3227 = vrcp.pop %v1725
  %v3228 = vmul.f32 %v1725, %v3227
  %v3229 = vsub.f32 1.0, %v3228
  %v3230 = vmul.f32 %v3227, %v3229
  %v3231 = vadd.f32 %v3227, %v3230
  %vm3232 = vweird.f32 %v1725
  %vm3233 = vweird.f32 %v3227
  %vm3234 = vmor %vm3232, %vm3233
  %v3235 = vsel %vm3234, %v3227, %v3231
  %v3236 = vand.u32 2147483647, %v1725
  %vm3237 = vcmp.eq.f32.partialorder %v3236, 8.507059e+37
  %v3238 = vand.u32 %v1725, 2147483648
  %v3239 = vor.u32 1.1754944e-38, %v3238
  %v3240 = vsel %vm3237, %v3239, %v3235
  %v3241 = vmul.f32 1.0, %v3240
  %v3242 = vrcp.pop %v1726
  %v3243 = vmul.f32 %v1726, %v3242
  %v3244 = vsub.f32 1.0, %v3243
  %v3245 = vmul.f32 %v3242, %v3244
  %v3246 = vadd.f32 %v3242, %v3245
  %vm3247 = vweird.f32 %v1726
  %vm3248 = vweird.f32 %v3242
  %vm3249 = vmor %vm3247, %vm3248
  %v3250 = vsel %vm3249, %v3242, %v3246
  %v3251 = vand.u32 2147483647, %v1726
  %vm3252 = vcmp.eq.f32.partialorder %v3251, 8.507059e+37
  %v3253 = vand.u32 %v1726, 2147483648
  %v3254 = vor.u32 1.1754944e-38, %v3253
  %v3255 = vsel %vm3252, %v3254, %v3250
  %v3256 = vmul.f32 1.0, %v3255
  %v3257 = vrcp.pop %v1727
  %v3258 = vmul.f32 %v1727, %v3257
  %v3259 = vsub.f32 1.0, %v3258
  %v3260 = vmul.f32 %v3257, %v3259
  %v3261 = vadd.f32 %v3257, %v3260
  %vm3262 = vweird.f32 %v1727
  %vm3263 = vweird.f32 %v3257
  %vm3264 = vmor %vm3262, %vm3263
  %v3265 = vsel %vm3264, %v3257, %v3261
  %v3266 = vand.u32 2147483647, %v1727
  %vm3267 = vcmp.eq.f32.partialorder %v3266, 8.507059e+37
  %v3268 = vand.u32 %v1727, 2147483648
  %v3269 = vor.u32 1.1754944e-38, %v3268
  %v3270 = vsel %vm3267, %v3269, %v3265
  %v3271 = vmul.f32 1.0, %v3270
  %v3272 = vrcp.pop %v1728
  %v3273 = vmul.f32 %v1728, %v3272
  %v3274 = vsub.f32 1.0, %v3273
  %v3275 = vmul.f32 %v3272, %v3274
  %v3276 = vadd.f32 %v3272, %v3275
  %vm3277 = vweird.f32 %v1728
  %vm3278 = vweird.f32 %v3272
  %vm3279 = vmor %vm3277, %vm3278
  %v3280 = vsel %vm3279, %v3272, %v3276
  %v3281 = vand.u32 2147483647, %v1728
  %vm3282 = vcmp.eq.f32.partialorder %v3281, 8.507059e+37
  %v3283 = vand.u32 %v1728, 2147483648
  %v3284 = vor.u32 1.1754944e-38, %v3283
  %v3285 = vsel %vm3282, %v3284, %v3280
  %v3286 = vmul.f32 1.0, %v3285
  %v3287 = vrcp.pop %v1729
  %v3288 = vmul.f32 %v1729, %v3287
  %v3289 = vsub.f32 1.0, %v3288
  %v3290 = vmul.f32 %v3287, %v3289
  %v3291 = vadd.f32 %v3287, %v3290
  %vm3292 = vweird.f32 %v1729
  %vm3293 = vweird.f32 %v3287
  %vm3294 = vmor %vm3292, %vm3293
  %v3295 = vsel %vm3294, %v3287, %v3291
  %v3296 = vand.u32 2147483647, %v1729
  %vm3297 = vcmp.eq.f32.partialorder %v3296, 8.507059e+37
  %v3298 = vand.u32 %v1729, 2147483648
  %v3299 = vor.u32 1.1754944e-38, %v3298
  %v3300 = vsel %vm3297, %v3299, %v3295
  %v3301 = vmul.f32 1.0, %v3300
  %v3302 = vrcp.pop %v1730
  %v3303 = vmul.f32 %v1730, %v3302
  %v3304 = vsub.f32 1.0, %v3303
  %v3305 = vmul.f32 %v3302, %v3304
  %v3306 = vadd.f32 %v3302, %v3305
  %vm3307 = vweird.f32 %v1730
  %vm3308 = vweird.f32 %v3302
  %vm3309 = vmor %vm3307, %vm3308
  %v3310 = vsel %vm3309, %v3302, %v3306
  %v3311 = vand.u32 2147483647, %v1730
  %vm3312 = vcmp.eq.f32.partialorder %v3311, 8.507059e+37
  %v3313 = vand.u32 %v1730, 2147483648
  %v3314 = vor.u32 1.1754944e-38, %v3313
  %v3315 = vsel %vm3312, %v3314, %v3310
  %v3316 = vmul.f32 1.0, %v3315
  %v3317 = vrcp.pop %v1731
  %v3318 = vmul.f32 %v1731, %v3317
  %v3319 = vsub.f32 1.0, %v3318
  %v3320 = vmul.f32 %v3317, %v3319
  %v3321 = vadd.f32 %v3317, %v3320
  %vm3322 = vweird.f32 %v1731
  %vm3323 = vweird.f32 %v3317
  %vm3324 = vmor %vm3322, %vm3323
  %v3325 = vsel %vm3324, %v3317, %v3321
  %v3326 = vand.u32 2147483647, %v1731
  %vm3327 = vcmp.eq.f32.partialorder %v3326, 8.507059e+37
  %v3328 = vand.u32 %v1731, 2147483648
  %v3329 = vor.u32 1.1754944e-38, %v3328
  %v3330 = vsel %vm3327, %v3329, %v3325
  %v3331 = vmul.f32 1.0, %v3330
  %v3332 = vrcp.pop %v1732
  %v3333 = vmul.f32 %v1732, %v3332
  %v3334 = vsub.f32 1.0, %v3333
  %v3335 = vmul.f32 %v3332, %v3334
  %v3336 = vadd.f32 %v3332, %v3335
  %vm3337 = vweird.f32 %v1732
  %vm3338 = vweird.f32 %v3332
  %vm3339 = vmor %vm3337, %vm3338
  %v3340 = vsel %vm3339, %v3332, %v3336
  %v3341 = vand.u32 2147483647, %v1732
  %vm3342 = vcmp.eq.f32.partialorder %v3341, 8.507059e+37
  %v3343 = vand.u32 %v1732, 2147483648
  %v3344 = vor.u32 1.1754944e-38, %v3343
  %v3345 = vsel %vm3342, %v3344, %v3340
  %v3346 = vmul.f32 1.0, %v3345
  %v3347 = vrcp.pop %v1733
  %v3348 = vmul.f32 %v1733, %v3347
  %v3349 = vsub.f32 1.0, %v3348
  %v3350 = vmul.f32 %v3347, %v3349
  %v3351 = vadd.f32 %v3347, %v3350
  %vm3352 = vweird.f32 %v1733
  %vm3353 = vweird.f32 %v3347
  %vm3354 = vmor %vm3352, %vm3353
  %v3355 = vsel %vm3354, %v3347, %v3351
  %v3356 = vand.u32 2147483647, %v1733
  %vm3357 = vcmp.eq.f32.partialorder %v3356, 8.507059e+37
  %v3358 = vand.u32 %v1733, 2147483648
  %v3359 = vor.u32 1.1754944e-38, %v3358
  %v3360 = vsel %vm3357, %v3359, %v3355
  %v3361 = vmul.f32 1.0, %v3360
  %v3362 = vrcp.pop %v1734
  %v3363 = vmul.f32 %v1734, %v3362
  %v3364 = vsub.f32 1.0, %v3363
  %v3365 = vmul.f32 %v3362, %v3364
  %v3366 = vadd.f32 %v3362, %v3365
  %vm3367 = vweird.f32 %v1734
  %vm3368 = vweird.f32 %v3362
  %vm3369 = vmor %vm3367, %vm3368
  %v3370 = vsel %vm3369, %v3362, %v3366
  %v3371 = vand.u32 2147483647, %v1734
  %vm3372 = vcmp.eq.f32.partialorder %v3371, 8.507059e+37
  %v3373 = vand.u32 %v1734, 2147483648
  %v3374 = vor.u32 1.1754944e-38, %v3373
  %v3375 = vsel %vm3372, %v3374, %v3370
  %v3376 = vmul.f32 1.0, %v3375
  %v3377 = vrcp.pop %v1735
  %v3378 = vmul.f32 %v1735, %v3377
  %v3379 = vsub.f32 1.0, %v3378
  %v3380 = vmul.f32 %v3377, %v3379
  %v3381 = vadd.f32 %v3377, %v3380
  %vm3382 = vweird.f32 %v1735
  %vm3383 = vweird.f32 %v3377
  %vm3384 = vmor %vm3382, %vm3383
  %v3385 = vsel %vm3384, %v3377, %v3381
  %v3386 = vand.u32 2147483647, %v1735
  %vm3387 = vcmp.eq.f32.partialorder %v3386, 8.507059e+37
  %v3388 = vand.u32 %v1735, 2147483648
  %v3389 = vor.u32 1.1754944e-38, %v3388
  %v3390 = vsel %vm3387, %v3389, %v3385
  %v3391 = vmul.f32 1.0, %v3390
  %v3392 = vrcp.pop %v1736
  %v3393 = vmul.f32 %v1736, %v3392
  %v3394 = vsub.f32 1.0, %v3393
  %v3395 = vmul.f32 %v3392, %v3394
  %v3396 = vadd.f32 %v3392, %v3395
  %vm3397 = vweird.f32 %v1736
  %vm3398 = vweird.f32 %v3392
  %vm3399 = vmor %vm3397, %vm3398
  %v3400 = vsel %vm3399, %v3392, %v3396
  %v3401 = vand.u32 2147483647, %v1736
  %vm3402 = vcmp.eq.f32.partialorder %v3401, 8.507059e+37
  %v3403 = vand.u32 %v1736, 2147483648
  %v3404 = vor.u32 1.1754944e-38, %v3403
  %v3405 = vsel %vm3402, %v3404, %v3400
  %v3406 = vmul.f32 1.0, %v3405
  %v3407 = vrcp.pop %v1737
  %v3408 = vmul.f32 %v1737, %v3407
  %v3409 = vsub.f32 1.0, %v3408
  %v3410 = vmul.f32 %v3407, %v3409
  %v3411 = vadd.f32 %v3407, %v3410
  %vm3412 = vweird.f32 %v1737
  %vm3413 = vweird.f32 %v3407
  %vm3414 = vmor %vm3412, %vm3413
  %v3415 = vsel %vm3414, %v3407, %v3411
  %v3416 = vand.u32 2147483647, %v1737
  %vm3417 = vcmp.eq.f32.partialorder %v3416, 8.507059e+37
  %v3418 = vand.u32 %v1737, 2147483648
  %v3419 = vor.u32 1.1754944e-38, %v3418
  %v3420 = vsel %vm3417, %v3419, %v3415
  %v3421 = vmul.f32 1.0, %v3420
  %v3422 = vrcp.pop %v1738
  %v3423 = vmul.f32 %v1738, %v3422
  %v3424 = vsub.f32 1.0, %v3423
  %v3425 = vmul.f32 %v3422, %v3424
  %v3426 = vadd.f32 %v3422, %v3425
  %vm3427 = vweird.f32 %v1738
  %vm3428 = vweird.f32 %v3422
  %vm3429 = vmor %vm3427, %vm3428
  %v3430 = vsel %vm3429, %v3422, %v3426
  %v3431 = vand.u32 2147483647, %v1738
  %vm3432 = vcmp.eq.f32.partialorder %v3431, 8.507059e+37
  %v3433 = vand.u32 %v1738, 2147483648
  %v3434 = vor.u32 1.1754944e-38, %v3433
  %v3435 = vsel %vm3432, %v3434, %v3430
  %v3436 = vmul.f32 1.0, %v3435
  %v3437 = vrcp.pop %v1739
  %v3438 = vmul.f32 %v1739, %v3437
  %v3439 = vsub.f32 1.0, %v3438
  %v3440 = vmul.f32 %v3437, %v3439
  %v3441 = vadd.f32 %v3437, %v3440
  %vm3442 = vweird.f32 %v1739
  %vm3443 = vweird.f32 %v3437
  %vm3444 = vmor %vm3442, %vm3443
  %v3445 = vsel %vm3444, %v3437, %v3441
  %v3446 = vand.u32 2147483647, %v1739
  %vm3447 = vcmp.eq.f32.partialorder %v3446, 8.507059e+37
  %v3448 = vand.u32 %v1739, 2147483648
  %v3449 = vor.u32 1.1754944e-38, %v3448
  %v3450 = vsel %vm3447, %v3449, %v3445
  %v3451 = vmul.f32 1.0, %v3450
  %v3452 = vrcp.pop %v1740
  %v3453 = vmul.f32 %v1740, %v3452
  %v3454 = vsub.f32 1.0, %v3453
  %v3455 = vmul.f32 %v3452, %v3454
  %v3456 = vadd.f32 %v3452, %v3455
  %vm3457 = vweird.f32 %v1740
  %vm3458 = vweird.f32 %v3452
  %vm3459 = vmor %vm3457, %vm3458
  %v3460 = vsel %vm3459, %v3452, %v3456
  %v3461 = vand.u32 2147483647, %v1740
  %vm3462 = vcmp.eq.f32.partialorder %v3461, 8.507059e+37
  %v3463 = vand.u32 %v1740, 2147483648
  %v3464 = vor.u32 1.1754944e-38, %v3463
  %v3465 = vsel %vm3462, %v3464, %v3460
  %v3466 = vmul.f32 1.0, %v3465
  %v3467 = vrcp.pop %v1741
  %v3468 = vmul.f32 %v1741, %v3467
  %v3469 = vsub.f32 1.0, %v3468
  %v3470 = vmul.f32 %v3467, %v3469
  %v3471 = vadd.f32 %v3467, %v3470
  %vm3472 = vweird.f32 %v1741
  %vm3473 = vweird.f32 %v3467
  %vm3474 = vmor %vm3472, %vm3473
  %v3475 = vsel %vm3474, %v3467, %v3471
  %v3476 = vand.u32 2147483647, %v1741
  %vm3477 = vcmp.eq.f32.partialorder %v3476, 8.507059e+37
  %v3478 = vand.u32 %v1741, 2147483648
  %v3479 = vor.u32 1.1754944e-38, %v3478
  %v3480 = vsel %vm3477, %v3479, %v3475
  %v3481 = vmul.f32 1.0, %v3480
  %v3482 = vrcp.pop %v1742
  %v3483 = vmul.f32 %v1742, %v3482
  %v3484 = vsub.f32 1.0, %v3483
  %v3485 = vmul.f32 %v3482, %v3484
  %v3486 = vadd.f32 %v3482, %v3485
  %vm3487 = vweird.f32 %v1742
  %vm3488 = vweird.f32 %v3482
  %vm3489 = vmor %vm3487, %vm3488
  %v3490 = vsel %vm3489, %v3482, %v3486
  %v3491 = vand.u32 2147483647, %v1742
  %vm3492 = vcmp.eq.f32.partialorder %v3491, 8.507059e+37
  %v3493 = vand.u32 %v1742, 2147483648
  %v3494 = vor.u32 1.1754944e-38, %v3493
  %v3495 = vsel %vm3492, %v3494, %v3490
  %v3496 = vmul.f32 1.0, %v3495
  %v3497 = vrcp.pop %v1743
  %v3498 = vmul.f32 %v1743, %v3497
  %v3499 = vsub.f32 1.0, %v3498
  %v3500 = vmul.f32 %v3497, %v3499
  %v3501 = vadd.f32 %v3497, %v3500
  %vm3502 = vweird.f32 %v1743
  %vm3503 = vweird.f32 %v3497
  %vm3504 = vmor %vm3502, %vm3503
  %v3505 = vsel %vm3504, %v3497, %v3501
  %v3506 = vand.u32 2147483647, %v1743
  %vm3507 = vcmp.eq.f32.partialorder %v3506, 8.507059e+37
  %v3508 = vand.u32 %v1743, 2147483648
  %v3509 = vor.u32 1.1754944e-38, %v3508
  %v3510 = vsel %vm3507, %v3509, %v3505
  %v3511 = vmul.f32 1.0, %v3510
  %v3512 = vrcp.pop %v1744
  %v3513 = vmul.f32 %v1744, %v3512
  %v3514 = vsub.f32 1.0, %v3513
  %v3515 = vmul.f32 %v3512, %v3514
  %v3516 = vadd.f32 %v3512, %v3515
  %vm3517 = vweird.f32 %v1744
  %vm3518 = vweird.f32 %v3512
  %vm3519 = vmor %vm3517, %vm3518
  %v3520 = vsel %vm3519, %v3512, %v3516
  %v3521 = vand.u32 2147483647, %v1744
  %vm3522 = vcmp.eq.f32.partialorder %v3521, 8.507059e+37
  %v3523 = vand.u32 %v1744, 2147483648
  %v3524 = vor.u32 1.1754944e-38, %v3523
  %v3525 = vsel %vm3522, %v3524, %v3520
  %v3526 = vmul.f32 1.0, %v3525
  %v3527 = vrcp.pop %v1745
  %v3528 = vmul.f32 %v1745, %v3527
  %v3529 = vsub.f32 1.0, %v3528
  %v3530 = vmul.f32 %v3527, %v3529
  %v3531 = vadd.f32 %v3527, %v3530
  %vm3532 = vweird.f32 %v1745
  %vm3533 = vweird.f32 %v3527
  %vm3534 = vmor %vm3532, %vm3533
  %v3535 = vsel %vm3534, %v3527, %v3531
  %v3536 = vand.u32 2147483647, %v1745
  %vm3537 = vcmp.eq.f32.partialorder %v3536, 8.507059e+37
  %v3538 = vand.u32 %v1745, 2147483648
  %v3539 = vor.u32 1.1754944e-38, %v3538
  %v3540 = vsel %vm3537, %v3539, %v3535
  %v3541 = vmul.f32 1.0, %v3540
  %v3542 = vrcp.pop %v1746
  %v3543 = vmul.f32 %v1746, %v3542
  %v3544 = vsub.f32 1.0, %v3543
  %v3545 = vmul.f32 %v3542, %v3544
  %v3546 = vadd.f32 %v3542, %v3545
  %vm3547 = vweird.f32 %v1746
  %vm3548 = vweird.f32 %v3542
  %vm3549 = vmor %vm3547, %vm3548
  %v3550 = vsel %vm3549, %v3542, %v3546
  %v3551 = vand.u32 2147483647, %v1746
  %vm3552 = vcmp.eq.f32.partialorder %v3551, 8.507059e+37
  %v3553 = vand.u32 %v1746, 2147483648
  %v3554 = vor.u32 1.1754944e-38, %v3553
  %v3555 = vsel %vm3552, %v3554, %v3550
  %v3556 = vmul.f32 1.0, %v3555
  %v3557 = vrcp.pop %v1747
  %v3558 = vmul.f32 %v1747, %v3557
  %v3559 = vsub.f32 1.0, %v3558
  %v3560 = vmul.f32 %v3557, %v3559
  %v3561 = vadd.f32 %v3557, %v3560
  %vm3562 = vweird.f32 %v1747
  %vm3563 = vweird.f32 %v3557
  %vm3564 = vmor %vm3562, %vm3563
  %v3565 = vsel %vm3564, %v3557, %v3561
  %v3566 = vand.u32 2147483647, %v1747
  %vm3567 = vcmp.eq.f32.partialorder %v3566, 8.507059e+37
  %v3568 = vand.u32 %v1747, 2147483648
  %v3569 = vor.u32 1.1754944e-38, %v3568
  %v3570 = vsel %vm3567, %v3569, %v3565
  %v3571 = vmul.f32 1.0, %v3570
  %v3572 = vrcp.pop %v1748
  %v3573 = vmul.f32 %v1748, %v3572
  %v3574 = vsub.f32 1.0, %v3573
  %v3575 = vmul.f32 %v3572, %v3574
  %v3576 = vadd.f32 %v3572, %v3575
  %vm3577 = vweird.f32 %v1748
  %vm3578 = vweird.f32 %v3572
  %vm3579 = vmor %vm3577, %vm3578
  %v3580 = vsel %vm3579, %v3572, %v3576
  %v3581 = vand.u32 2147483647, %v1748
  %vm3582 = vcmp.eq.f32.partialorder %v3581, 8.507059e+37
  %v3583 = vand.u32 %v1748, 2147483648
  %v3584 = vor.u32 1.1754944e-38, %v3583
  %v3585 = vsel %vm3582, %v3584, %v3580
  %v3586 = vmul.f32 1.0, %v3585
  %v3587 = vrcp.pop %v1749
  %v3588 = vmul.f32 %v1749, %v3587
  %v3589 = vsub.f32 1.0, %v3588
  %v3590 = vmul.f32 %v3587, %v3589
  %v3591 = vadd.f32 %v3587, %v3590
  %vm3592 = vweird.f32 %v1749
  %vm3593 = vweird.f32 %v3587
  %vm3594 = vmor %vm3592, %vm3593
  %v3595 = vsel %vm3594, %v3587, %v3591
  %v3596 = vand.u32 2147483647, %v1749
  %vm3597 = vcmp.eq.f32.partialorder %v3596, 8.507059e+37
  %v3598 = vand.u32 %v1749, 2147483648
  %v3599 = vor.u32 1.1754944e-38, %v3598
  %v3600 = vsel %vm3597, %v3599, %v3595
  %v3601 = vmul.f32 1.0, %v3600
  %v3602 = vrcp.pop %v1750
  %v3603 = vmul.f32 %v1750, %v3602
  %v3604 = vsub.f32 1.0, %v3603
  %v3605 = vmul.f32 %v3602, %v3604
  %v3606 = vadd.f32 %v3602, %v3605
  %vm3607 = vweird.f32 %v1750
  %vm3608 = vweird.f32 %v3602
  %vm3609 = vmor %vm3607, %vm3608
  %v3610 = vsel %vm3609, %v3602, %v3606
  %v3611 = vand.u32 2147483647, %v1750
  %vm3612 = vcmp.eq.f32.partialorder %v3611, 8.507059e+37
  %v3613 = vand.u32 %v1750, 2147483648
  %v3614 = vor.u32 1.1754944e-38, %v3613
  %v3615 = vsel %vm3612, %v3614, %v3610
  %v3616 = vmul.f32 1.0, %v3615
  %v3617 = vrcp.pop %v1751
  %v3618 = vmul.f32 %v1751, %v3617
  %v3619 = vsub.f32 1.0, %v3618
  %v3620 = vmul.f32 %v3617, %v3619
  %v3621 = vadd.f32 %v3617, %v3620
  %vm3622 = vweird.f32 %v1751
  %vm3623 = vweird.f32 %v3617
  %vm3624 = vmor %vm3622, %vm3623
  %v3625 = vsel %vm3624, %v3617, %v3621
  %v3626 = vand.u32 2147483647, %v1751
  %vm3627 = vcmp.eq.f32.partialorder %v3626, 8.507059e+37
  %v3628 = vand.u32 %v1751, 2147483648
  %v3629 = vor.u32 1.1754944e-38, %v3628
  %v3630 = vsel %vm3627, %v3629, %v3625
  %v3631 = vmul.f32 1.0, %v3630
  %v3632 = vrcp.pop %v1752
  %v3633 = vmul.f32 %v1752, %v3632
  %v3634 = vsub.f32 1.0, %v3633
  %v3635 = vmul.f32 %v3632, %v3634
  %v3636 = vadd.f32 %v3632, %v3635
  %vm3637 = vweird.f32 %v1752
  %vm3638 = vweird.f32 %v3632
  %vm3639 = vmor %vm3637, %vm3638
  %v3640 = vsel %vm3639, %v3632, %v3636
  %v3641 = vand.u32 2147483647, %v1752
  %vm3642 = vcmp.eq.f32.partialorder %v3641, 8.507059e+37
  %v3643 = vand.u32 %v1752, 2147483648
  %v3644 = vor.u32 1.1754944e-38, %v3643
  %v3645 = vsel %vm3642, %v3644, %v3640
  %v3646 = vmul.f32 1.0, %v3645
  %v3647 = vrcp.pop %v1753
  %v3648 = vmul.f32 %v1753, %v3647
  %v3649 = vsub.f32 1.0, %v3648
  %v3650 = vmul.f32 %v3647, %v3649
  %v3651 = vadd.f32 %v3647, %v3650
  %vm3652 = vweird.f32 %v1753
  %vm3653 = vweird.f32 %v3647
  %vm3654 = vmor %vm3652, %vm3653
  %v3655 = vsel %vm3654, %v3647, %v3651
  %v3656 = vand.u32 2147483647, %v1753
  %vm3657 = vcmp.eq.f32.partialorder %v3656, 8.507059e+37
  %v3658 = vand.u32 %v1753, 2147483648
  %v3659 = vor.u32 1.1754944e-38, %v3658
  %v3660 = vsel %vm3657, %v3659, %v3655
  %v3661 = vmul.f32 1.0, %v3660
  %v3662 = vrcp.pop %v1754
  %v3663 = vmul.f32 %v1754, %v3662
  %v3664 = vsub.f32 1.0, %v3663
  %v3665 = vmul.f32 %v3662, %v3664
  %v3666 = vadd.f32 %v3662, %v3665
  %vm3667 = vweird.f32 %v1754
  %vm3668 = vweird.f32 %v3662
  %vm3669 = vmor %vm3667, %vm3668
  %v3670 = vsel %vm3669, %v3662, %v3666
  %v3671 = vand.u32 2147483647, %v1754
  %vm3672 = vcmp.eq.f32.partialorder %v3671, 8.507059e+37
  %v3673 = vand.u32 %v1754, 2147483648
  %v3674 = vor.u32 1.1754944e-38, %v3673
  %v3675 = vsel %vm3672, %v3674, %v3670
  %v3676 = vmul.f32 1.0, %v3675
  %v3677 = vrcp.pop %v1755
  %v3678 = vmul.f32 %v1755, %v3677
  %v3679 = vsub.f32 1.0, %v3678
  %v3680 = vmul.f32 %v3677, %v3679
  %v3681 = vadd.f32 %v3677, %v3680
  %vm3682 = vweird.f32 %v1755
  %vm3683 = vweird.f32 %v3677
  %vm3684 = vmor %vm3682, %vm3683
  %v3685 = vsel %vm3684, %v3677, %v3681
  %v3686 = vand.u32 2147483647, %v1755
  %vm3687 = vcmp.eq.f32.partialorder %v3686, 8.507059e+37
  %v3688 = vand.u32 %v1755, 2147483648
  %v3689 = vor.u32 1.1754944e-38, %v3688
  %v3690 = vsel %vm3687, %v3689, %v3685
  %v3691 = vmul.f32 1.0, %v3690
  %v3692 = vrcp.pop %v1756
  %v3693 = vmul.f32 %v1756, %v3692
  %v3694 = vsub.f32 1.0, %v3693
  %v3695 = vmul.f32 %v3692, %v3694
  %v3696 = vadd.f32 %v3692, %v3695
  %vm3697 = vweird.f32 %v1756
  %vm3698 = vweird.f32 %v3692
  %vm3699 = vmor %vm3697, %vm3698
  %v3700 = vsel %vm3699, %v3692, %v3696
  %v3701 = vand.u32 2147483647, %v1756
  %vm3702 = vcmp.eq.f32.partialorder %v3701, 8.507059e+37
  %v3703 = vand.u32 %v1756, 2147483648
  %v3704 = vor.u32 1.1754944e-38, %v3703
  %v3705 = vsel %vm3702, %v3704, %v3700
  %v3706 = vmul.f32 1.0, %v3705
  %v3707 = vrcp.pop %v1757
  %v3708 = vmul.f32 %v1757, %v3707
  %v3709 = vsub.f32 1.0, %v3708
  %v3710 = vmul.f32 %v3707, %v3709
  %v3711 = vadd.f32 %v3707, %v3710
  %vm3712 = vweird.f32 %v1757
  %vm3713 = vweird.f32 %v3707
  %vm3714 = vmor %vm3712, %vm3713
  %v3715 = vsel %vm3714, %v3707, %v3711
  %v3716 = vand.u32 2147483647, %v1757
  %vm3717 = vcmp.eq.f32.partialorder %v3716, 8.507059e+37
  %v3718 = vand.u32 %v1757, 2147483648
  %v3719 = vor.u32 1.1754944e-38, %v3718
  %v3720 = vsel %vm3717, %v3719, %v3715
  %v3721 = vmul.f32 1.0, %v3720
  %v3722 = vrcp.pop %v1758
  %v3723 = vmul.f32 %v1758, %v3722
  %v3724 = vsub.f32 1.0, %v3723
  %v3725 = vmul.f32 %v3722, %v3724
  %v3726 = vadd.f32 %v3722, %v3725
  %vm3727 = vweird.f32 %v1758
  %vm3728 = vweird.f32 %v3722
  %vm3729 = vmor %vm3727, %vm3728
  %v3730 = vsel %vm3729, %v3722, %v3726
  %v3731 = vand.u32 2147483647, %v1758
  %vm3732 = vcmp.eq.f32.partialorder %v3731, 8.507059e+37
  %v3733 = vand.u32 %v1758, 2147483648
  %v3734 = vor.u32 1.1754944e-38, %v3733
  %v3735 = vsel %vm3732, %v3734, %v3730
  %v3736 = vmul.f32 1.0, %v3735
  %v3737 = vrcp.pop %v1759
  %v3738 = vmul.f32 %v1759, %v3737
  %v3739 = vsub.f32 1.0, %v3738
  %v3740 = vmul.f32 %v3737, %v3739
  %v3741 = vadd.f32 %v3737, %v3740
  %vm3742 = vweird.f32 %v1759
  %vm3743 = vweird.f32 %v3737
  %vm3744 = vmor %vm3742, %vm3743
  %v3745 = vsel %vm3744, %v3737, %v3741
  %v3746 = vand.u32 2147483647, %v1759
  %vm3747 = vcmp.eq.f32.partialorder %v3746, 8.507059e+37
  %v3748 = vand.u32 %v1759, 2147483648
  %v3749 = vor.u32 1.1754944e-38, %v3748
  %v3750 = vsel %vm3747, %v3749, %v3745
  %v3751 = vmul.f32 1.0, %v3750
  %v3752 = vrcp.pop %v1760
  %v3753 = vmul.f32 %v1760, %v3752
  %v3754 = vsub.f32 1.0, %v3753
  %v3755 = vmul.f32 %v3752, %v3754
  %v3756 = vadd.f32 %v3752, %v3755
  %vm3757 = vweird.f32 %v1760
  %vm3758 = vweird.f32 %v3752
  %vm3759 = vmor %vm3757, %vm3758
  %v3760 = vsel %vm3759, %v3752, %v3756
  %v3761 = vand.u32 2147483647, %v1760
  %vm3762 = vcmp.eq.f32.partialorder %v3761, 8.507059e+37
  %v3763 = vand.u32 %v1760, 2147483648
  %v3764 = vor.u32 1.1754944e-38, %v3763
  %v3765 = vsel %vm3762, %v3764, %v3760
  %v3766 = vmul.f32 1.0, %v3765
  %v3767 = vrcp.pop %v1761
  %v3768 = vmul.f32 %v1761, %v3767
  %v3769 = vsub.f32 1.0, %v3768
  %v3770 = vmul.f32 %v3767, %v3769
  %v3771 = vadd.f32 %v3767, %v3770
  %vm3772 = vweird.f32 %v1761
  %vm3773 = vweird.f32 %v3767
  %vm3774 = vmor %vm3772, %vm3773
  %v3775 = vsel %vm3774, %v3767, %v3771
  %v3776 = vand.u32 2147483647, %v1761
  %vm3777 = vcmp.eq.f32.partialorder %v3776, 8.507059e+37
  %v3778 = vand.u32 %v1761, 2147483648
  %v3779 = vor.u32 1.1754944e-38, %v3778
  %v3780 = vsel %vm3777, %v3779, %v3775
  %v3781 = vmul.f32 1.0, %v3780
  %v3782 = vrcp.pop %v1762
  %v3783 = vmul.f32 %v1762, %v3782
  %v3784 = vsub.f32 1.0, %v3783
  %v3785 = vmul.f32 %v3782, %v3784
  %v3786 = vadd.f32 %v3782, %v3785
  %vm3787 = vweird.f32 %v1762
  %vm3788 = vweird.f32 %v3782
  %vm3789 = vmor %vm3787, %vm3788
  %v3790 = vsel %vm3789, %v3782, %v3786
  %v3791 = vand.u32 2147483647, %v1762
  %vm3792 = vcmp.eq.f32.partialorder %v3791, 8.507059e+37
  %v3793 = vand.u32 %v1762, 2147483648
  %v3794 = vor.u32 1.1754944e-38, %v3793
  %v3795 = vsel %vm3792, %v3794, %v3790
  %v3796 = vmul.f32 1.0, %v3795
  %v3797 = vrcp.pop %v1763
  %v3798 = vmul.f32 %v1763, %v3797
  %v3799 = vsub.f32 1.0, %v3798
  %v3800 = vmul.f32 %v3797, %v3799
  %v3801 = vadd.f32 %v3797, %v3800
  %vm3802 = vweird.f32 %v1763
  %vm3803 = vweird.f32 %v3797
  %vm3804 = vmor %vm3802, %vm3803
  %v3805 = vsel %vm3804, %v3797, %v3801
  %v3806 = vand.u32 2147483647, %v1763
  %vm3807 = vcmp.eq.f32.partialorder %v3806, 8.507059e+37
  %v3808 = vand.u32 %v1763, 2147483648
  %v3809 = vor.u32 1.1754944e-38, %v3808
  %v3810 = vsel %vm3807, %v3809, %v3805
  %v3811 = vmul.f32 1.0, %v3810
  %v3812 = vrcp.pop %v1764
  %v3813 = vmul.f32 %v1764, %v3812
  %v3814 = vsub.f32 1.0, %v3813
  %v3815 = vmul.f32 %v3812, %v3814
  %v3816 = vadd.f32 %v3812, %v3815
  %vm3817 = vweird.f32 %v1764
  %vm3818 = vweird.f32 %v3812
  %vm3819 = vmor %vm3817, %vm3818
  %v3820 = vsel %vm3819, %v3812, %v3816
  %v3821 = vand.u32 2147483647, %v1764
  %vm3822 = vcmp.eq.f32.partialorder %v3821, 8.507059e+37
  %v3823 = vand.u32 %v1764, 2147483648
  %v3824 = vor.u32 1.1754944e-38, %v3823
  %v3825 = vsel %vm3822, %v3824, %v3820
  %v3826 = vmul.f32 1.0, %v3825
  %v3827 = vrcp.pop %v1765
  %v3828 = vmul.f32 %v1765, %v3827
  %v3829 = vsub.f32 1.0, %v3828
  %v3830 = vmul.f32 %v3827, %v3829
  %v3831 = vadd.f32 %v3827, %v3830
  %vm3832 = vweird.f32 %v1765
  %vm3833 = vweird.f32 %v3827
  %vm3834 = vmor %vm3832, %vm3833
  %v3835 = vsel %vm3834, %v3827, %v3831
  %v3836 = vand.u32 2147483647, %v1765
  %vm3837 = vcmp.eq.f32.partialorder %v3836, 8.507059e+37
  %v3838 = vand.u32 %v1765, 2147483648
  %v3839 = vor.u32 1.1754944e-38, %v3838
  %v3840 = vsel %vm3837, %v3839, %v3835
  %v3841 = vmul.f32 1.0, %v3840
  %v3842 = vrcp.pop %v1766
  %v3843 = vmul.f32 %v1766, %v3842
  %v3844 = vsub.f32 1.0, %v3843
  %v3845 = vmul.f32 %v3842, %v3844
  %v3846 = vadd.f32 %v3842, %v3845
  %vm3847 = vweird.f32 %v1766
  %vm3848 = vweird.f32 %v3842
  %vm3849 = vmor %vm3847, %vm3848
  %v3850 = vsel %vm3849, %v3842, %v3846
  %v3851 = vand.u32 2147483647, %v1766
  %vm3852 = vcmp.eq.f32.partialorder %v3851, 8.507059e+37
  %v3853 = vand.u32 %v1766, 2147483648
  %v3854 = vor.u32 1.1754944e-38, %v3853
  %v3855 = vsel %vm3852, %v3854, %v3850
  %v3856 = vmul.f32 1.0, %v3855
  %v3857 = vrcp.pop %v1767
  %v3858 = vmul.f32 %v1767, %v3857
  %v3859 = vsub.f32 1.0, %v3858
  %v3860 = vmul.f32 %v3857, %v3859
  %v3861 = vadd.f32 %v3857, %v3860
  %vm3862 = vweird.f32 %v1767
  %vm3863 = vweird.f32 %v3857
  %vm3864 = vmor %vm3862, %vm3863
  %v3865 = vsel %vm3864, %v3857, %v3861
  %v3866 = vand.u32 2147483647, %v1767
  %vm3867 = vcmp.eq.f32.partialorder %v3866, 8.507059e+37
  %v3868 = vand.u32 %v1767, 2147483648
  %v3869 = vor.u32 1.1754944e-38, %v3868
  %v3870 = vsel %vm3867, %v3869, %v3865
  %v3871 = vmul.f32 1.0, %v3870
  %v3872 = vrcp.pop %v1768
  %v3873 = vmul.f32 %v1768, %v3872
  %v3874 = vsub.f32 1.0, %v3873
  %v3875 = vmul.f32 %v3872, %v3874
  %v3876 = vadd.f32 %v3872, %v3875
  %vm3877 = vweird.f32 %v1768
  %vm3878 = vweird.f32 %v3872
  %vm3879 = vmor %vm3877, %vm3878
  %v3880 = vsel %vm3879, %v3872, %v3876
  %v3881 = vand.u32 2147483647, %v1768
  %vm3882 = vcmp.eq.f32.partialorder %v3881, 8.507059e+37
  %v3883 = vand.u32 %v1768, 2147483648
  %v3884 = vor.u32 1.1754944e-38, %v3883
  %v3885 = vsel %vm3882, %v3884, %v3880
  %v3886 = vmul.f32 1.0, %v3885
  %v3887 = vrcp.pop %v1769
  %v3888 = vmul.f32 %v1769, %v3887
  %v3889 = vsub.f32 1.0, %v3888
  %v3890 = vmul.f32 %v3887, %v3889
  %v3891 = vadd.f32 %v3887, %v3890
  %vm3892 = vweird.f32 %v1769
  %vm3893 = vweird.f32 %v3887
  %vm3894 = vmor %vm3892, %vm3893
  %v3895 = vsel %vm3894, %v3887, %v3891
  %v3896 = vand.u32 2147483647, %v1769
  %vm3897 = vcmp.eq.f32.partialorder %v3896, 8.507059e+37
  %v3898 = vand.u32 %v1769, 2147483648
  %v3899 = vor.u32 1.1754944e-38, %v3898
  %v3900 = vsel %vm3897, %v3899, %v3895
  %v3901 = vmul.f32 1.0, %v3900
  %v3902 = vrcp.pop %v1770
  %v3903 = vmul.f32 %v1770, %v3902
  %v3904 = vsub.f32 1.0, %v3903
  %v3905 = vmul.f32 %v3902, %v3904
  %v3906 = vadd.f32 %v3902, %v3905
  %vm3907 = vweird.f32 %v1770
  %vm3908 = vweird.f32 %v3902
  %vm3909 = vmor %vm3907, %vm3908
  %v3910 = vsel %vm3909, %v3902, %v3906
  %v3911 = vand.u32 2147483647, %v1770
  %vm3912 = vcmp.eq.f32.partialorder %v3911, 8.507059e+37
  %v3913 = vand.u32 %v1770, 2147483648
  %v3914 = vor.u32 1.1754944e-38, %v3913
  %v3915 = vsel %vm3912, %v3914, %v3910
  %v3916 = vmul.f32 1.0, %v3915
  %v3917 = vrcp.pop %v1771
  %v3918 = vmul.f32 %v1771, %v3917
  %v3919 = vsub.f32 1.0, %v3918
  %v3920 = vmul.f32 %v3917, %v3919
  %v3921 = vadd.f32 %v3917, %v3920
  %vm3922 = vweird.f32 %v1771
  %vm3923 = vweird.f32 %v3917
  %vm3924 = vmor %vm3922, %vm3923
  %v3925 = vsel %vm3924, %v3917, %v3921
  %v3926 = vand.u32 2147483647, %v1771
  %vm3927 = vcmp.eq.f32.partialorder %v3926, 8.507059e+37
  %v3928 = vand.u32 %v1771, 2147483648
  %v3929 = vor.u32 1.1754944e-38, %v3928
  %v3930 = vsel %vm3927, %v3929, %v3925
  %v3931 = vmul.f32 1.0, %v3930
  %v3932 = vld [vmem:[%s1] sm:$0xff]
  %v3933 = vld [vmem:[%s1 + $0x8] sm:$0xff]
  %v3934 = vld [vmem:[%s1 + $0x10] sm:$0xff]
  %v3935 = vld [vmem:[%s1 + $0x18] sm:$0xff]
  %v3936 = vld [vmem:[%s1 + $0x20] sm:$0xff]
  %v3937 = vld [vmem:[%s1 + $0x28] sm:$0xff]
  %v3938 = vld [vmem:[%s1 + $0x30] sm:$0xff]
  %v3939 = vld [vmem:[%s1 + $0x38] sm:$0xff]
  %v3940 = vld [vmem:[%s1 + $0x40] sm:$0xff]
  %v3941 = vld [vmem:[%s1 + $0x48] sm:$0xff]
  %v3942 = vld [vmem:[%s1 + $0x50] sm:$0xff]
  %v3943 = vld [vmem:[%s1 + $0x58] sm:$0xff]
  %v3944 = vld [vmem:[%s1 + $0x60] sm:$0xff]
  %v3945 = vld [vmem:[%s1 + $0x68] sm:$0xff]
  %v3946 = vld [vmem:[%s1 + $0x70] sm:$0xff]
  %v3947 = vld [vmem:[%s1 + $0x78] sm:$0xff]
  %v3948 = vld [vmem:[%s1 + $0x80] sm:$0xff]
  %v3949 = vld [vmem:[%s1 + $0x88] sm:$0xff]
  %v3950 = vld [vmem:[%s1 + $0x90] sm:$0xff]
  %v3951 = vld [vmem:[%s1 + $0x98] sm:$0xff]
  %v3952 = vld [vmem:[%s1 + $0xa0] sm:$0xff]
  %v3953 = vld [vmem:[%s1 + $0xa8] sm:$0xff]
  %v3954 = vld [vmem:[%s1 + $0xb0] sm:$0xff]
  %v3955 = vld [vmem:[%s1 + $0xb8] sm:$0xff]
  %v3956 = vld [vmem:[%s1 + $0xc0] sm:$0xff]
  %v3957 = vld [vmem:[%s1 + $0xc8] sm:$0xff]
  %v3958 = vld [vmem:[%s1 + $0xd0] sm:$0xff]
  %v3959 = vld [vmem:[%s1 + $0xd8] sm:$0xff]
  %v3960 = vld [vmem:[%s1 + $0xe0] sm:$0xff]
  %v3961 = vld [vmem:[%s1 + $0xe8] sm:$0xff]
  %v3962 = vld [vmem:[%s1 + $0xf0] sm:$0xff]
  %v3963 = vld [vmem:[%s1 + $0xf8] sm:$0xff]
  %v3964 = vld [vmem:[%s1 + $0x100] sm:$0xff]
  %v3965 = vld [vmem:[%s1 + $0x108] sm:$0xff]
  %v3966 = vld [vmem:[%s1 + $0x110] sm:$0xff]
  %v3967 = vld [vmem:[%s1 + $0x118] sm:$0xff]
  %v3968 = vld [vmem:[%s1 + $0x120] sm:$0xff]
  %v3969 = vld [vmem:[%s1 + $0x128] sm:$0xff]
  %v3970 = vld [vmem:[%s1 + $0x130] sm:$0xff]
  %v3971 = vld [vmem:[%s1 + $0x138] sm:$0xff]
  %v3972 = vld [vmem:[%s1 + $0x140] sm:$0xff]
  %v3973 = vld [vmem:[%s1 + $0x148] sm:$0xff]
  %v3974 = vld [vmem:[%s1 + $0x150] sm:$0xff]
  %v3975 = vld [vmem:[%s1 + $0x158] sm:$0xff]
  %v3976 = vld [vmem:[%s1 + $0x160] sm:$0xff]
  %v3977 = vld [vmem:[%s1 + $0x168] sm:$0xff]
  %v3978 = vld [vmem:[%s1 + $0x170] sm:$0xff]
  %v3979 = vld [vmem:[%s1 + $0x178] sm:$0xff]
  %v3980 = vld [vmem:[%s1 + $0x180] sm:$0xff]
  %v3981 = vld [vmem:[%s1 + $0x188] sm:$0xff]
  %v3982 = vld [vmem:[%s1 + $0x190] sm:$0xff]
  %v3983 = vld [vmem:[%s1 + $0x198] sm:$0xff]
  %v3984 = vld [vmem:[%s1 + $0x1a0] sm:$0xff]
  %v3985 = vld [vmem:[%s1 + $0x1a8] sm:$0xff]
  %v3986 = vld [vmem:[%s1 + $0x1b0] sm:$0xff]
  %v3987 = vld [vmem:[%s1 + $0x1b8] sm:$0xff]
  %v3988 = vld [vmem:[%s1 + $0x1c0] sm:$0xff]
  %v3989 = vld [vmem:[%s1 + $0x1c8] sm:$0xff]
  %v3990 = vld [vmem:[%s1 + $0x1d0] sm:$0xff]
  %v3991 = vld [vmem:[%s1 + $0x1d8] sm:$0xff]
  %v3992 = vld [vmem:[%s1 + $0x1e0] sm:$0xff]
  %v3993 = vld [vmem:[%s1 + $0x1e8] sm:$0xff]
  %v3994 = vld [vmem:[%s1 + $0x1f0] sm:$0xff]
  %v3995 = vld [vmem:[%s1 + $0x1f8] sm:$0xff]
  %v3996 = vld [vmem:[%s1 + $0x200] sm:$0xff]
  %v3997 = vld [vmem:[%s1 + $0x208] sm:$0xff]
  %v3998 = vld [vmem:[%s1 + $0x210] sm:$0xff]
  %v3999 = vld [vmem:[%s1 + $0x218] sm:$0xff]
  %v4000 = vld [vmem:[%s1 + $0x220] sm:$0xff]
  %v4001 = vld [vmem:[%s1 + $0x228] sm:$0xff]
  %v4002 = vld [vmem:[%s1 + $0x230] sm:$0xff]
  %v4003 = vld [vmem:[%s1 + $0x238] sm:$0xff]
  %v4004 = vld [vmem:[%s1 + $0x240] sm:$0xff]
  %v4005 = vld [vmem:[%s1 + $0x248] sm:$0xff]
  %v4006 = vld [vmem:[%s1 + $0x250] sm:$0xff]
  %v4007 = vld [vmem:[%s1 + $0x258] sm:$0xff]
  %v4008 = vld [vmem:[%s1 + $0x260] sm:$0xff]
  %v4009 = vld [vmem:[%s1 + $0x268] sm:$0xff]
  %v4010 = vld [vmem:[%s1 + $0x270] sm:$0xff]
  %v4011 = vld [vmem:[%s1 + $0x278] sm:$0xff]
  %v4012 = vld [vmem:[%s1 + $0x280] sm:$0xff]
  %v4013 = vld [vmem:[%s1 + $0x288] sm:$0xff]
  %v4014 = vld [vmem:[%s1 + $0x290] sm:$0xff]
  %v4015 = vld [vmem:[%s1 + $0x298] sm:$0xff]
  %v4016 = vld [vmem:[%s1 + $0x2a0] sm:$0xff]
  %v4017 = vld [vmem:[%s1 + $0x2a8] sm:$0xff]
  %v4018 = vld [vmem:[%s1 + $0x2b0] sm:$0xff]
  %v4019 = vld [vmem:[%s1 + $0x2b8] sm:$0xff]
  %v4020 = vld [vmem:[%s1 + $0x2c0] sm:$0xff]
  %v4021 = vld [vmem:[%s1 + $0x2c8] sm:$0xff]
  %v4022 = vld [vmem:[%s1 + $0x2d0] sm:$0xff]
  %v4023 = vld [vmem:[%s1 + $0x2d8] sm:$0xff]
  %v4024 = vld [vmem:[%s1 + $0x2e0] sm:$0xff]
  %v4025 = vld [vmem:[%s1 + $0x2e8] sm:$0xff]
  %v4026 = vld [vmem:[%s1 + $0x2f0] sm:$0xff]
  %v4027 = vld [vmem:[%s1 + $0x2f8] sm:$0xff]
  %v4028 = vld [vmem:[%s1 + $0x300] sm:$0xff]
  %v4029 = vld [vmem:[%s1 + $0x308] sm:$0xff]
  %v4030 = vld [vmem:[%s1 + $0x310] sm:$0xff]
  %v4031 = vld [vmem:[%s1 + $0x318] sm:$0xff]
  %v4032 = vld [vmem:[%s1 + $0x320] sm:$0xff]
  %v4033 = vld [vmem:[%s1 + $0x328] sm:$0xff]
  %v4034 = vld [vmem:[%s1 + $0x330] sm:$0xff]
  %v4035 = vld [vmem:[%s1 + $0x338] sm:$0xff]
  %v4036 = vld [vmem:[%s1 + $0x340] sm:$0xff]
  %v4037 = vld [vmem:[%s1 + $0x348] sm:$0xff]
  %v4038 = vld [vmem:[%s1 + $0x350] sm:$0xff]
  %v4039 = vld [vmem:[%s1 + $0x358] sm:$0xff]
  %v4040 = vld [vmem:[%s1 + $0x360] sm:$0xff]
  %v4041 = vld [vmem:[%s1 + $0x368] sm:$0xff]
  %v4042 = vld [vmem:[%s1 + $0x370] sm:$0xff]
  %v4043 = vld [vmem:[%s1 + $0x378] sm:$0xff]
  %v4044 = vld [vmem:[%s1 + $0x380] sm:$0xff]
  %v4045 = vld [vmem:[%s1 + $0x388] sm:$0xff]
  %v4046 = vld [vmem:[%s1 + $0x390] sm:$0xff]
  %v4047 = vld [vmem:[%s1 + $0x398] sm:$0xff]
  %v4048 = vld [vmem:[%s1 + $0x3a0] sm:$0xff]
  %v4049 = vld [vmem:[%s1 + $0x3a8] sm:$0xff]
  %v4050 = vld [vmem:[%s1 + $0x3b0] sm:$0xff]
  %v4051 = vld [vmem:[%s1 + $0x3b8] sm:$0xff]
  %v4052 = vld [vmem:[%s1 + $0x3c0] sm:$0xff]
  %v4053 = vld [vmem:[%s1 + $0x3c8] sm:$0xff]
  %v4054 = vld [vmem:[%s1 + $0x3d0] sm:$0xff]
  %v4055 = vld [vmem:[%s1 + $0x3d8] sm:$0xff]
  %v4056 = vld [vmem:[%s1 + $0x3e0] sm:$0xff]
  %v4057 = vld [vmem:[%s1 + $0x3e8] sm:$0xff]
  %v4058 = vld [vmem:[%s1 + $0x3f0] sm:$0xff]
  %v4059 = vld [vmem:[%s1 + $0x3f8] sm:$0xff]
  %v4060 = vld [vmem:[%s1 + $0x400] sm:$0xff]
  %v4061 = vld [vmem:[%s1 + $0x408] sm:$0xff]
  %v4062 = vld [vmem:[%s1 + $0x410] sm:$0xff]
  %v4063 = vld [vmem:[%s1 + $0x418] sm:$0xff]
  %v4064 = vld [vmem:[%s1 + $0x420] sm:$0xff]
  %v4065 = vld [vmem:[%s1 + $0x428] sm:$0xff]
  %v4066 = vld [vmem:[%s1 + $0x430] sm:$0xff]
  %v4067 = vld [vmem:[%s1 + $0x438] sm:$0xff]
  %v4068 = vld [vmem:[%s1 + $0x440] sm:$0xff]
  %v4069 = vld [vmem:[%s1 + $0x448] sm:$0xff]
  %v4070 = vld [vmem:[%s1 + $0x450] sm:$0xff]
  %v4071 = vld [vmem:[%s1 + $0x458] sm:$0xff]
  %v4072 = vld [vmem:[%s1 + $0x460] sm:$0xff]
  %v4073 = vld [vmem:[%s1 + $0x468] sm:$0xff]
  %v4074 = vld [vmem:[%s1 + $0x470] sm:$0xff]
  %v4075 = vld [vmem:[%s1 + $0x478] sm:$0xff]
  %4077 = vset.pattern.permute.xlu0 0
  %4078 = vperm.xlu0 %4077, %v1786
  %v4079 = vpop.permute.xlu0 %4078
  %4082 = vset.pattern.permute.xlu0 0
  %4083 = vperm.xlu0 %4082, %v1801
  %v4084 = vpop.permute.xlu0 %4083
  %4087 = vset.pattern.permute.xlu0 0
  %4088 = vperm.xlu0 %4087, %v1816
  %v4089 = vpop.permute.xlu0 %4088
  %4092 = vset.pattern.permute.xlu0 0
  %4093 = vperm.xlu0 %4092, %v1831
  %v4094 = vpop.permute.xlu0 %4093
  %4097 = vset.pattern.permute.xlu0 0
  %4098 = vperm.xlu0 %4097, %v1846
  %v4099 = vpop.permute.xlu0 %4098
  %4102 = vset.pattern.permute.xlu0 0
  %4103 = vperm.xlu0 %4102, %v1861
  %v4104 = vpop.permute.xlu0 %4103
  %4107 = vset.pattern.permute.xlu0 0
  %4108 = vperm.xlu0 %4107, %v1876
  %v4109 = vpop.permute.xlu0 %4108
  %4112 = vset.pattern.permute.xlu0 0
  %4113 = vperm.xlu0 %4112, %v1891
  %v4114 = vpop.permute.xlu0 %4113
  %4117 = vset.pattern.permute.xlu0 0
  %4118 = vperm.xlu0 %4117, %v1906
  %v4119 = vpop.permute.xlu0 %4118
  %4122 = vset.pattern.permute.xlu0 0
  %4123 = vperm.xlu0 %4122, %v1921
  %v4124 = vpop.permute.xlu0 %4123
  %4127 = vset.pattern.permute.xlu0 0
  %4128 = vperm.xlu0 %4127, %v1936
  %v4129 = vpop.permute.xlu0 %4128
  %4132 = vset.pattern.permute.xlu0 0
  %4133 = vperm.xlu0 %4132, %v1951
  %v4134 = vpop.permute.xlu0 %4133
  %4137 = vset.pattern.permute.xlu0 0
  %4138 = vperm.xlu0 %4137, %v1966
  %v4139 = vpop.permute.xlu0 %4138
  %4142 = vset.pattern.permute.xlu0 0
  %4143 = vperm.xlu0 %4142, %v1981
  %v4144 = vpop.permute.xlu0 %4143
  %4147 = vset.pattern.permute.xlu0 0
  %4148 = vperm.xlu0 %4147, %v1996
  %v4149 = vpop.permute.xlu0 %4148
  %4152 = vset.pattern.permute.xlu0 0
  %4153 = vperm.xlu0 %4152, %v2011
  %v4154 = vpop.permute.xlu0 %4153
  %4157 = vset.pattern.permute.xlu0 0
  %4158 = vperm.xlu0 %4157, %v2026
  %v4159 = vpop.permute.xlu0 %4158
  %4162 = vset.pattern.permute.xlu0 0
  %4163 = vperm.xlu0 %4162, %v2041
  %v4164 = vpop.permute.xlu0 %4163
  %4167 = vset.pattern.permute.xlu0 0
  %4168 = vperm.xlu0 %4167, %v2056
  %v4169 = vpop.permute.xlu0 %4168
  %4172 = vset.pattern.permute.xlu0 0
  %4173 = vperm.xlu0 %4172, %v2071
  %v4174 = vpop.permute.xlu0 %4173
  %4177 = vset.pattern.permute.xlu0 0
  %4178 = vperm.xlu0 %4177, %v2086
  %v4179 = vpop.permute.xlu0 %4178
  %4182 = vset.pattern.permute.xlu0 0
  %4183 = vperm.xlu0 %4182, %v2101
  %v4184 = vpop.permute.xlu0 %4183
  %4187 = vset.pattern.permute.xlu0 0
  %4188 = vperm.xlu0 %4187, %v2116
  %v4189 = vpop.permute.xlu0 %4188
  %4192 = vset.pattern.permute.xlu0 0
  %4193 = vperm.xlu0 %4192, %v2131
  %v4194 = vpop.permute.xlu0 %4193
  %4197 = vset.pattern.permute.xlu0 0
  %4198 = vperm.xlu0 %4197, %v2146
  %v4199 = vpop.permute.xlu0 %4198
  %4202 = vset.pattern.permute.xlu0 0
  %4203 = vperm.xlu0 %4202, %v2161
  %v4204 = vpop.permute.xlu0 %4203
  %4207 = vset.pattern.permute.xlu0 0
  %4208 = vperm.xlu0 %4207, %v2176
  %v4209 = vpop.permute.xlu0 %4208
  %4212 = vset.pattern.permute.xlu0 0
  %4213 = vperm.xlu0 %4212, %v2191
  %v4214 = vpop.permute.xlu0 %4213
  %4217 = vset.pattern.permute.xlu0 0
  %4218 = vperm.xlu0 %4217, %v2206
  %v4219 = vpop.permute.xlu0 %4218
  %4222 = vset.pattern.permute.xlu0 0
  %4223 = vperm.xlu0 %4222, %v2221
  %v4224 = vpop.permute.xlu0 %4223
  %4227 = vset.pattern.permute.xlu0 0
  %4228 = vperm.xlu0 %4227, %v2236
  %v4229 = vpop.permute.xlu0 %4228
  %4232 = vset.pattern.permute.xlu0 0
  %4233 = vperm.xlu0 %4232, %v2251
  %v4234 = vpop.permute.xlu0 %4233
  %4237 = vset.pattern.permute.xlu0 0
  %4238 = vperm.xlu0 %4237, %v2266
  %v4239 = vpop.permute.xlu0 %4238
  %4242 = vset.pattern.permute.xlu0 0
  %4243 = vperm.xlu0 %4242, %v2281
  %v4244 = vpop.permute.xlu0 %4243
  %4247 = vset.pattern.permute.xlu0 0
  %4248 = vperm.xlu0 %4247, %v2296
  %v4249 = vpop.permute.xlu0 %4248
  %4252 = vset.pattern.permute.xlu0 0
  %4253 = vperm.xlu0 %4252, %v2311
  %v4254 = vpop.permute.xlu0 %4253
  %4257 = vset.pattern.permute.xlu0 0
  %4258 = vperm.xlu0 %4257, %v2326
  %v4259 = vpop.permute.xlu0 %4258
  %4262 = vset.pattern.permute.xlu0 0
  %4263 = vperm.xlu0 %4262, %v2341
  %v4264 = vpop.permute.xlu0 %4263
  %4267 = vset.pattern.permute.xlu0 0
  %4268 = vperm.xlu0 %4267, %v2356
  %v4269 = vpop.permute.xlu0 %4268
  %4272 = vset.pattern.permute.xlu0 0
  %4273 = vperm.xlu0 %4272, %v2371
  %v4274 = vpop.permute.xlu0 %4273
  %4277 = vset.pattern.permute.xlu0 0
  %4278 = vperm.xlu0 %4277, %v2386
  %v4279 = vpop.permute.xlu0 %4278
  %4282 = vset.pattern.permute.xlu0 0
  %4283 = vperm.xlu0 %4282, %v2401
  %v4284 = vpop.permute.xlu0 %4283
  %4287 = vset.pattern.permute.xlu0 0
  %4288 = vperm.xlu0 %4287, %v2416
  %v4289 = vpop.permute.xlu0 %4288
  %4292 = vset.pattern.permute.xlu0 0
  %4293 = vperm.xlu0 %4292, %v2431
  %v4294 = vpop.permute.xlu0 %4293
  %4297 = vset.pattern.permute.xlu0 0
  %4298 = vperm.xlu0 %4297, %v2446
  %v4299 = vpop.permute.xlu0 %4298
  %4302 = vset.pattern.permute.xlu0 0
  %4303 = vperm.xlu0 %4302, %v2461
  %v4304 = vpop.permute.xlu0 %4303
  %4307 = vset.pattern.permute.xlu0 0
  %4308 = vperm.xlu0 %4307, %v2476
  %v4309 = vpop.permute.xlu0 %4308
  %4312 = vset.pattern.permute.xlu0 0
  %4313 = vperm.xlu0 %4312, %v2491
  %v4314 = vpop.permute.xlu0 %4313
  %4317 = vset.pattern.permute.xlu0 0
  %4318 = vperm.xlu0 %4317, %v2506
  %v4319 = vpop.permute.xlu0 %4318
  %4322 = vset.pattern.permute.xlu0 0
  %4323 = vperm.xlu0 %4322, %v2521
  %v4324 = vpop.permute.xlu0 %4323
  %4327 = vset.pattern.permute.xlu0 0
  %4328 = vperm.xlu0 %4327, %v2536
  %v4329 = vpop.permute.xlu0 %4328
  %4332 = vset.pattern.permute.xlu0 0
  %4333 = vperm.xlu0 %4332, %v2551
  %v4334 = vpop.permute.xlu0 %4333
  %4337 = vset.pattern.permute.xlu0 0
  %4338 = vperm.xlu0 %4337, %v2566
  %v4339 = vpop.permute.xlu0 %4338
  %4342 = vset.pattern.permute.xlu0 0
  %4343 = vperm.xlu0 %4342, %v2581
  %v4344 = vpop.permute.xlu0 %4343
  %4347 = vset.pattern.permute.xlu0 0
  %4348 = vperm.xlu0 %4347, %v2596
  %v4349 = vpop.permute.xlu0 %4348
  %4352 = vset.pattern.permute.xlu0 0
  %4353 = vperm.xlu0 %4352, %v2611
  %v4354 = vpop.permute.xlu0 %4353
  %4357 = vset.pattern.permute.xlu0 0
  %4358 = vperm.xlu0 %4357, %v2626
  %v4359 = vpop.permute.xlu0 %4358
  %4362 = vset.pattern.permute.xlu0 0
  %4363 = vperm.xlu0 %4362, %v2641
  %v4364 = vpop.permute.xlu0 %4363
  %4367 = vset.pattern.permute.xlu0 0
  %4368 = vperm.xlu0 %4367, %v2656
  %v4369 = vpop.permute.xlu0 %4368
  %4372 = vset.pattern.permute.xlu0 0
  %4373 = vperm.xlu0 %4372, %v2671
  %v4374 = vpop.permute.xlu0 %4373
  %4377 = vset.pattern.permute.xlu0 0
  %4378 = vperm.xlu0 %4377, %v2686
  %v4379 = vpop.permute.xlu0 %4378
  %4382 = vset.pattern.permute.xlu0 0
  %4383 = vperm.xlu0 %4382, %v2701
  %v4384 = vpop.permute.xlu0 %4383
  %4387 = vset.pattern.permute.xlu0 0
  %4388 = vperm.xlu0 %4387, %v2716
  %v4389 = vpop.permute.xlu0 %4388
  %4392 = vset.pattern.permute.xlu0 0
  %4393 = vperm.xlu0 %4392, %v2731
  %v4394 = vpop.permute.xlu0 %4393
  %4397 = vset.pattern.permute.xlu0 0
  %4398 = vperm.xlu0 %4397, %v2746
  %v4399 = vpop.permute.xlu0 %4398
  %4402 = vset.pattern.permute.xlu0 0
  %4403 = vperm.xlu0 %4402, %v2761
  %v4404 = vpop.permute.xlu0 %4403
  %4407 = vset.pattern.permute.xlu0 0
  %4408 = vperm.xlu0 %4407, %v2776
  %v4409 = vpop.permute.xlu0 %4408
  %4412 = vset.pattern.permute.xlu0 0
  %4413 = vperm.xlu0 %4412, %v2791
  %v4414 = vpop.permute.xlu0 %4413
  %4417 = vset.pattern.permute.xlu0 0
  %4418 = vperm.xlu0 %4417, %v2806
  %v4419 = vpop.permute.xlu0 %4418
  %4422 = vset.pattern.permute.xlu0 0
  %4423 = vperm.xlu0 %4422, %v2821
  %v4424 = vpop.permute.xlu0 %4423
  %4427 = vset.pattern.permute.xlu0 0
  %4428 = vperm.xlu0 %4427, %v2836
  %v4429 = vpop.permute.xlu0 %4428
  %4432 = vset.pattern.permute.xlu0 0
  %4433 = vperm.xlu0 %4432, %v2851
  %v4434 = vpop.permute.xlu0 %4433
  %4437 = vset.pattern.permute.xlu0 0
  %4438 = vperm.xlu0 %4437, %v2866
  %v4439 = vpop.permute.xlu0 %4438
  %4442 = vset.pattern.permute.xlu0 0
  %4443 = vperm.xlu0 %4442, %v2881
  %v4444 = vpop.permute.xlu0 %4443
  %4447 = vset.pattern.permute.xlu0 0
  %4448 = vperm.xlu0 %4447, %v2896
  %v4449 = vpop.permute.xlu0 %4448
  %4452 = vset.pattern.permute.xlu0 0
  %4453 = vperm.xlu0 %4452, %v2911
  %v4454 = vpop.permute.xlu0 %4453
  %4457 = vset.pattern.permute.xlu0 0
  %4458 = vperm.xlu0 %4457, %v2926
  %v4459 = vpop.permute.xlu0 %4458
  %4462 = vset.pattern.permute.xlu0 0
  %4463 = vperm.xlu0 %4462, %v2941
  %v4464 = vpop.permute.xlu0 %4463
  %4467 = vset.pattern.permute.xlu0 0
  %4468 = vperm.xlu0 %4467, %v2956
  %v4469 = vpop.permute.xlu0 %4468
  %4472 = vset.pattern.permute.xlu0 0
  %4473 = vperm.xlu0 %4472, %v2971
  %v4474 = vpop.permute.xlu0 %4473
  %4477 = vset.pattern.permute.xlu0 0
  %4478 = vperm.xlu0 %4477, %v2986
  %v4479 = vpop.permute.xlu0 %4478
  %4482 = vset.pattern.permute.xlu0 0
  %4483 = vperm.xlu0 %4482, %v3001
  %v4484 = vpop.permute.xlu0 %4483
  %4487 = vset.pattern.permute.xlu0 0
  %4488 = vperm.xlu0 %4487, %v3016
  %v4489 = vpop.permute.xlu0 %4488
  %4492 = vset.pattern.permute.xlu0 0
  %4493 = vperm.xlu0 %4492, %v3031
  %v4494 = vpop.permute.xlu0 %4493
  %4497 = vset.pattern.permute.xlu0 0
  %4498 = vperm.xlu0 %4497, %v3046
  %v4499 = vpop.permute.xlu0 %4498
  %4502 = vset.pattern.permute.xlu0 0
  %4503 = vperm.xlu0 %4502, %v3061
  %v4504 = vpop.permute.xlu0 %4503
  %4507 = vset.pattern.permute.xlu0 0
  %4508 = vperm.xlu0 %4507, %v3076
  %v4509 = vpop.permute.xlu0 %4508
  %4512 = vset.pattern.permute.xlu0 0
  %4513 = vperm.xlu0 %4512, %v3091
  %v4514 = vpop.permute.xlu0 %4513
  %4517 = vset.pattern.permute.xlu0 0
  %4518 = vperm.xlu0 %4517, %v3106
  %v4519 = vpop.permute.xlu0 %4518
  %4522 = vset.pattern.permute.xlu0 0
  %4523 = vperm.xlu0 %4522, %v3121
  %v4524 = vpop.permute.xlu0 %4523
  %4527 = vset.pattern.permute.xlu0 0
  %4528 = vperm.xlu0 %4527, %v3136
  %v4529 = vpop.permute.xlu0 %4528
  %4532 = vset.pattern.permute.xlu0 0
  %4533 = vperm.xlu0 %4532, %v3151
  %v4534 = vpop.permute.xlu0 %4533
  %4537 = vset.pattern.permute.xlu0 0
  %4538 = vperm.xlu0 %4537, %v3166
  %v4539 = vpop.permute.xlu0 %4538
  %4542 = vset.pattern.permute.xlu0 0
  %4543 = vperm.xlu0 %4542, %v3181
  %v4544 = vpop.permute.xlu0 %4543
  %4547 = vset.pattern.permute.xlu0 0
  %4548 = vperm.xlu0 %4547, %v3196
  %v4549 = vpop.permute.xlu0 %4548
  %4552 = vset.pattern.permute.xlu0 0
  %4553 = vperm.xlu0 %4552, %v3211
  %v4554 = vpop.permute.xlu0 %4553
  %4557 = vset.pattern.permute.xlu0 0
  %4558 = vperm.xlu0 %4557, %v3226
  %v4559 = vpop.permute.xlu0 %4558
  %4562 = vset.pattern.permute.xlu0 0
  %4563 = vperm.xlu0 %4562, %v3241
  %v4564 = vpop.permute.xlu0 %4563
  %4567 = vset.pattern.permute.xlu0 0
  %4568 = vperm.xlu0 %4567, %v3256
  %v4569 = vpop.permute.xlu0 %4568
  %4572 = vset.pattern.permute.xlu0 0
  %4573 = vperm.xlu0 %4572, %v3271
  %v4574 = vpop.permute.xlu0 %4573
  %4577 = vset.pattern.permute.xlu0 0
  %4578 = vperm.xlu0 %4577, %v3286
  %v4579 = vpop.permute.xlu0 %4578
  %4582 = vset.pattern.permute.xlu0 0
  %4583 = vperm.xlu0 %4582, %v3301
  %v4584 = vpop.permute.xlu0 %4583
  %4587 = vset.pattern.permute.xlu0 0
  %4588 = vperm.xlu0 %4587, %v3316
  %v4589 = vpop.permute.xlu0 %4588
  %4592 = vset.pattern.permute.xlu0 0
  %4593 = vperm.xlu0 %4592, %v3331
  %v4594 = vpop.permute.xlu0 %4593
  %4597 = vset.pattern.permute.xlu0 0
  %4598 = vperm.xlu0 %4597, %v3346
  %v4599 = vpop.permute.xlu0 %4598
  %4602 = vset.pattern.permute.xlu0 0
  %4603 = vperm.xlu0 %4602, %v3361
  %v4604 = vpop.permute.xlu0 %4603
  %4607 = vset.pattern.permute.xlu0 0
  %4608 = vperm.xlu0 %4607, %v3376
  %v4609 = vpop.permute.xlu0 %4608
  %4612 = vset.pattern.permute.xlu0 0
  %4613 = vperm.xlu0 %4612, %v3391
  %v4614 = vpop.permute.xlu0 %4613
  %4617 = vset.pattern.permute.xlu0 0
  %4618 = vperm.xlu0 %4617, %v3406
  %v4619 = vpop.permute.xlu0 %4618
  %4622 = vset.pattern.permute.xlu0 0
  %4623 = vperm.xlu0 %4622, %v3421
  %v4624 = vpop.permute.xlu0 %4623
  %4627 = vset.pattern.permute.xlu0 0
  %4628 = vperm.xlu0 %4627, %v3436
  %v4629 = vpop.permute.xlu0 %4628
  %4632 = vset.pattern.permute.xlu0 0
  %4633 = vperm.xlu0 %4632, %v3451
  %v4634 = vpop.permute.xlu0 %4633
  %4637 = vset.pattern.permute.xlu0 0
  %4638 = vperm.xlu0 %4637, %v3466
  %v4639 = vpop.permute.xlu0 %4638
  %4642 = vset.pattern.permute.xlu0 0
  %4643 = vperm.xlu0 %4642, %v3481
  %v4644 = vpop.permute.xlu0 %4643
  %4647 = vset.pattern.permute.xlu0 0
  %4648 = vperm.xlu0 %4647, %v3496
  %v4649 = vpop.permute.xlu0 %4648
  %4652 = vset.pattern.permute.xlu0 0
  %4653 = vperm.xlu0 %4652, %v3511
  %v4654 = vpop.permute.xlu0 %4653
  %4657 = vset.pattern.permute.xlu0 0
  %4658 = vperm.xlu0 %4657, %v3526
  %v4659 = vpop.permute.xlu0 %4658
  %4662 = vset.pattern.permute.xlu0 0
  %4663 = vperm.xlu0 %4662, %v3541
  %v4664 = vpop.permute.xlu0 %4663
  %4667 = vset.pattern.permute.xlu0 0
  %4668 = vperm.xlu0 %4667, %v3556
  %v4669 = vpop.permute.xlu0 %4668
  %4672 = vset.pattern.permute.xlu0 0
  %4673 = vperm.xlu0 %4672, %v3571
  %v4674 = vpop.permute.xlu0 %4673
  %4677 = vset.pattern.permute.xlu0 0
  %4678 = vperm.xlu0 %4677, %v3586
  %v4679 = vpop.permute.xlu0 %4678
  %4682 = vset.pattern.permute.xlu0 0
  %4683 = vperm.xlu0 %4682, %v3601
  %v4684 = vpop.permute.xlu0 %4683
  %4687 = vset.pattern.permute.xlu0 0
  %4688 = vperm.xlu0 %4687, %v3616
  %v4689 = vpop.permute.xlu0 %4688
  %4692 = vset.pattern.permute.xlu0 0
  %4693 = vperm.xlu0 %4692, %v3631
  %v4694 = vpop.permute.xlu0 %4693
  %4697 = vset.pattern.permute.xlu0 0
  %4698 = vperm.xlu0 %4697, %v3646
  %v4699 = vpop.permute.xlu0 %4698
  %4702 = vset.pattern.permute.xlu0 0
  %4703 = vperm.xlu0 %4702, %v3661
  %v4704 = vpop.permute.xlu0 %4703
  %4707 = vset.pattern.permute.xlu0 0
  %4708 = vperm.xlu0 %4707, %v3676
  %v4709 = vpop.permute.xlu0 %4708
  %4712 = vset.pattern.permute.xlu0 0
  %4713 = vperm.xlu0 %4712, %v3691
  %v4714 = vpop.permute.xlu0 %4713
  %4717 = vset.pattern.permute.xlu0 0
  %4718 = vperm.xlu0 %4717, %v3706
  %v4719 = vpop.permute.xlu0 %4718
  %4722 = vset.pattern.permute.xlu0 0
  %4723 = vperm.xlu0 %4722, %v3721
  %v4724 = vpop.permute.xlu0 %4723
  %4727 = vset.pattern.permute.xlu0 0
  %4728 = vperm.xlu0 %4727, %v3736
  %v4729 = vpop.permute.xlu0 %4728
  %4732 = vset.pattern.permute.xlu0 0
  %4733 = vperm.xlu0 %4732, %v3751
  %v4734 = vpop.permute.xlu0 %4733
  %4737 = vset.pattern.permute.xlu0 0
  %4738 = vperm.xlu0 %4737, %v3766
  %v4739 = vpop.permute.xlu0 %4738
  %4742 = vset.pattern.permute.xlu0 0
  %4743 = vperm.xlu0 %4742, %v3781
  %v4744 = vpop.permute.xlu0 %4743
  %4747 = vset.pattern.permute.xlu0 0
  %4748 = vperm.xlu0 %4747, %v3796
  %v4749 = vpop.permute.xlu0 %4748
  %4752 = vset.pattern.permute.xlu0 0
  %4753 = vperm.xlu0 %4752, %v3811
  %v4754 = vpop.permute.xlu0 %4753
  %4757 = vset.pattern.permute.xlu0 0
  %4758 = vperm.xlu0 %4757, %v3826
  %v4759 = vpop.permute.xlu0 %4758
  %4762 = vset.pattern.permute.xlu0 0
  %4763 = vperm.xlu0 %4762, %v3841
  %v4764 = vpop.permute.xlu0 %4763
  %4767 = vset.pattern.permute.xlu0 0
  %4768 = vperm.xlu0 %4767, %v3856
  %v4769 = vpop.permute.xlu0 %4768
  %4772 = vset.pattern.permute.xlu0 0
  %4773 = vperm.xlu0 %4772, %v3871
  %v4774 = vpop.permute.xlu0 %4773
  %4777 = vset.pattern.permute.xlu0 0
  %4778 = vperm.xlu0 %4777, %v3886
  %v4779 = vpop.permute.xlu0 %4778
  %4782 = vset.pattern.permute.xlu0 0
  %4783 = vperm.xlu0 %4782, %v3901
  %v4784 = vpop.permute.xlu0 %4783
  %4787 = vset.pattern.permute.xlu0 0
  %4788 = vperm.xlu0 %4787, %v3916
  %v4789 = vpop.permute.xlu0 %4788
  %4792 = vset.pattern.permute.xlu0 0
  %4793 = vperm.xlu0 %4792, %v3931
  %v4794 = vpop.permute.xlu0 %4793
  %v4796 = vmul.f32 %v3932, %v4079
  %v4797 = vmul.f32 %v3933, %v4084
  %v4798 = vmul.f32 %v3934, %v4089
  %v4799 = vmul.f32 %v3935, %v4094
  %v4800 = vmul.f32 %v3936, %v4099
  %v4801 = vmul.f32 %v3937, %v4104
  %v4802 = vmul.f32 %v3938, %v4109
  %v4803 = vmul.f32 %v3939, %v4114
  %v4804 = vmul.f32 %v3940, %v4119
  %v4805 = vmul.f32 %v3941, %v4124
  %v4806 = vmul.f32 %v3942, %v4129
  %v4807 = vmul.f32 %v3943, %v4134
  %v4808 = vmul.f32 %v3944, %v4139
  %v4809 = vmul.f32 %v3945, %v4144
  %v4810 = vmul.f32 %v3946, %v4149
  %v4811 = vmul.f32 %v3947, %v4154
  %v4812 = vmul.f32 %v3948, %v4159
  %v4813 = vmul.f32 %v3949, %v4164
  %v4814 = vmul.f32 %v3950, %v4169
  %v4815 = vmul.f32 %v3951, %v4174
  %v4816 = vmul.f32 %v3952, %v4179
  %v4817 = vmul.f32 %v3953, %v4184
  %v4818 = vmul.f32 %v3954, %v4189
  %v4819 = vmul.f32 %v3955, %v4194
  %v4820 = vmul.f32 %v3956, %v4199
  %v4821 = vmul.f32 %v3957, %v4204
  %v4822 = vmul.f32 %v3958, %v4209
  %v4823 = vmul.f32 %v3959, %v4214
  %v4824 = vmul.f32 %v3960, %v4219
  %v4825 = vmul.f32 %v3961, %v4224
  %v4826 = vmul.f32 %v3962, %v4229
  %v4827 = vmul.f32 %v3963, %v4234
  %v4828 = vmul.f32 %v3964, %v4239
  %v4829 = vmul.f32 %v3965, %v4244
  %v4830 = vmul.f32 %v3966, %v4249
  %v4831 = vmul.f32 %v3967, %v4254
  %v4832 = vmul.f32 %v3968, %v4259
  %v4833 = vmul.f32 %v3969, %v4264
  %v4834 = vmul.f32 %v3970, %v4269
  %v4835 = vmul.f32 %v3971, %v4274
  %v4836 = vmul.f32 %v3972, %v4279
  %v4837 = vmul.f32 %v3973, %v4284
  %v4838 = vmul.f32 %v3974, %v4289
  %v4839 = vmul.f32 %v3975, %v4294
  %v4840 = vmul.f32 %v3976, %v4299
  %v4841 = vmul.f32 %v3977, %v4304
  %v4842 = vmul.f32 %v3978, %v4309
  %v4843 = vmul.f32 %v3979, %v4314
  %v4844 = vmul.f32 %v3980, %v4319
  %v4845 = vmul.f32 %v3981, %v4324
  %v4846 = vmul.f32 %v3982, %v4329
  %v4847 = vmul.f32 %v3983, %v4334
  %v4848 = vmul.f32 %v3984, %v4339
  %v4849 = vmul.f32 %v3985, %v4344
  %v4850 = vmul.f32 %v3986, %v4349
  %v4851 = vmul.f32 %v3987, %v4354
  %v4852 = vmul.f32 %v3988, %v4359
  %v4853 = vmul.f32 %v3989, %v4364
  %v4854 = vmul.f32 %v3990, %v4369
  %v4855 = vmul.f32 %v3991, %v4374
  %v4856 = vmul.f32 %v3992, %v4379
  %v4857 = vmul.f32 %v3993, %v4384
  %v4858 = vmul.f32 %v3994, %v4389
  %v4859 = vmul.f32 %v3995, %v4394
  %v4860 = vmul.f32 %v3996, %v4399
  %v4861 = vmul.f32 %v3997, %v4404
  %v4862 = vmul.f32 %v3998, %v4409
  %v4863 = vmul.f32 %v3999, %v4414
  %v4864 = vmul.f32 %v4000, %v4419
  %v4865 = vmul.f32 %v4001, %v4424
  %v4866 = vmul.f32 %v4002, %v4429
  %v4867 = vmul.f32 %v4003, %v4434
  %v4868 = vmul.f32 %v4004, %v4439
  %v4869 = vmul.f32 %v4005, %v4444
  %v4870 = vmul.f32 %v4006, %v4449
  %v4871 = vmul.f32 %v4007, %v4454
  %v4872 = vmul.f32 %v4008, %v4459
  %v4873 = vmul.f32 %v4009, %v4464
  %v4874 = vmul.f32 %v4010, %v4469
  %v4875 = vmul.f32 %v4011, %v4474
  %v4876 = vmul.f32 %v4012, %v4479
  %v4877 = vmul.f32 %v4013, %v4484
  %v4878 = vmul.f32 %v4014, %v4489
  %v4879 = vmul.f32 %v4015, %v4494
  %v4880 = vmul.f32 %v4016, %v4499
  %v4881 = vmul.f32 %v4017, %v4504
  %v4882 = vmul.f32 %v4018, %v4509
  %v4883 = vmul.f32 %v4019, %v4514
  %v4884 = vmul.f32 %v4020, %v4519
  %v4885 = vmul.f32 %v4021, %v4524
  %v4886 = vmul.f32 %v4022, %v4529
  %v4887 = vmul.f32 %v4023, %v4534
  %v4888 = vmul.f32 %v4024, %v4539
  %v4889 = vmul.f32 %v4025, %v4544
  %v4890 = vmul.f32 %v4026, %v4549
  %v4891 = vmul.f32 %v4027, %v4554
  %v4892 = vmul.f32 %v4028, %v4559
  %v4893 = vmul.f32 %v4029, %v4564
  %v4894 = vmul.f32 %v4030, %v4569
  %v4895 = vmul.f32 %v4031, %v4574
  %v4896 = vmul.f32 %v4032, %v4579
  %v4897 = vmul.f32 %v4033, %v4584
  %v4898 = vmul.f32 %v4034, %v4589
  %v4899 = vmul.f32 %v4035, %v4594
  %v4900 = vmul.f32 %v4036, %v4599
  %v4901 = vmul.f32 %v4037, %v4604
  %v4902 = vmul.f32 %v4038, %v4609
  %v4903 = vmul.f32 %v4039, %v4614
  %v4904 = vmul.f32 %v4040, %v4619
  %v4905 = vmul.f32 %v4041, %v4624
  %v4906 = vmul.f32 %v4042, %v4629
  %v4907 = vmul.f32 %v4043, %v4634
  %v4908 = vmul.f32 %v4044, %v4639
  %v4909 = vmul.f32 %v4045, %v4644
  %v4910 = vmul.f32 %v4046, %v4649
  %v4911 = vmul.f32 %v4047, %v4654
  %v4912 = vmul.f32 %v4048, %v4659
  %v4913 = vmul.f32 %v4049, %v4664
  %v4914 = vmul.f32 %v4050, %v4669
  %v4915 = vmul.f32 %v4051, %v4674
  %v4916 = vmul.f32 %v4052, %v4679
  %v4917 = vmul.f32 %v4053, %v4684
  %v4918 = vmul.f32 %v4054, %v4689
  %v4919 = vmul.f32 %v4055, %v4694
  %v4920 = vmul.f32 %v4056, %v4699
  %v4921 = vmul.f32 %v4057, %v4704
  %v4922 = vmul.f32 %v4058, %v4709
  %v4923 = vmul.f32 %v4059, %v4714
  %v4924 = vmul.f32 %v4060, %v4719
  %v4925 = vmul.f32 %v4061, %v4724
  %v4926 = vmul.f32 %v4062, %v4729
  %v4927 = vmul.f32 %v4063, %v4734
  %v4928 = vmul.f32 %v4064, %v4739
  %v4929 = vmul.f32 %v4065, %v4744
  %v4930 = vmul.f32 %v4066, %v4749
  %v4931 = vmul.f32 %v4067, %v4754
  %v4932 = vmul.f32 %v4068, %v4759
  %v4933 = vmul.f32 %v4069, %v4764
  %v4934 = vmul.f32 %v4070, %v4769
  %v4935 = vmul.f32 %v4071, %v4774
  %v4936 = vmul.f32 %v4072, %v4779
  %v4937 = vmul.f32 %v4073, %v4784
  %v4938 = vmul.f32 %v4074, %v4789
  %v4939 = vmul.f32 %v4075, %v4794
  %v4940 = vpack.c.bf16 %v4797, %v4796
  %v4941 = vpack.c.bf16 %v4799, %v4798
  %v4942 = vpack.c.bf16 %v4801, %v4800
  %v4943 = vpack.c.bf16 %v4803, %v4802
  %v4944 = vpack.c.bf16 %v4805, %v4804
  %v4945 = vpack.c.bf16 %v4807, %v4806
  %v4946 = vpack.c.bf16 %v4809, %v4808
  %v4947 = vpack.c.bf16 %v4811, %v4810
  %v4948 = vpack.c.bf16 %v4813, %v4812
  %v4949 = vpack.c.bf16 %v4815, %v4814
  %v4950 = vpack.c.bf16 %v4817, %v4816
  %v4951 = vpack.c.bf16 %v4819, %v4818
  %v4952 = vpack.c.bf16 %v4821, %v4820
  %v4953 = vpack.c.bf16 %v4823, %v4822
  %v4954 = vpack.c.bf16 %v4825, %v4824
  %v4955 = vpack.c.bf16 %v4827, %v4826
  %v4956 = vpack.c.bf16 %v4829, %v4828
  %v4957 = vpack.c.bf16 %v4831, %v4830
  %v4958 = vpack.c.bf16 %v4833, %v4832
  %v4959 = vpack.c.bf16 %v4835, %v4834
  %v4960 = vpack.c.bf16 %v4837, %v4836
  %v4961 = vpack.c.bf16 %v4839, %v4838
  %v4962 = vpack.c.bf16 %v4841, %v4840
  %v4963 = vpack.c.bf16 %v4843, %v4842
  %v4964 = vpack.c.bf16 %v4845, %v4844
  %v4965 = vpack.c.bf16 %v4847, %v4846
  %v4966 = vpack.c.bf16 %v4849, %v4848
  %v4967 = vpack.c.bf16 %v4851, %v4850
  %v4968 = vpack.c.bf16 %v4853, %v4852
  %v4969 = vpack.c.bf16 %v4855, %v4854
  %v4970 = vpack.c.bf16 %v4857, %v4856
  %v4971 = vpack.c.bf16 %v4859, %v4858
  %v4972 = vpack.c.bf16 %v4861, %v4860
  %v4973 = vpack.c.bf16 %v4863, %v4862
  %v4974 = vpack.c.bf16 %v4865, %v4864
  %v4975 = vpack.c.bf16 %v4867, %v4866
  %v4976 = vpack.c.bf16 %v4869, %v4868
  %v4977 = vpack.c.bf16 %v4871, %v4870
  %v4978 = vpack.c.bf16 %v4873, %v4872
  %v4979 = vpack.c.bf16 %v4875, %v4874
  %v4980 = vpack.c.bf16 %v4877, %v4876
  %v4981 = vpack.c.bf16 %v4879, %v4878
  %v4982 = vpack.c.bf16 %v4881, %v4880
  %v4983 = vpack.c.bf16 %v4883, %v4882
  %v4984 = vpack.c.bf16 %v4885, %v4884
  %v4985 = vpack.c.bf16 %v4887, %v4886
  %v4986 = vpack.c.bf16 %v4889, %v4888
  %v4987 = vpack.c.bf16 %v4891, %v4890
  %v4988 = vpack.c.bf16 %v4893, %v4892
  %v4989 = vpack.c.bf16 %v4895, %v4894
  %v4990 = vpack.c.bf16 %v4897, %v4896
  %v4991 = vpack.c.bf16 %v4899, %v4898
  %v4992 = vpack.c.bf16 %v4901, %v4900
  %v4993 = vpack.c.bf16 %v4903, %v4902
  %v4994 = vpack.c.bf16 %v4905, %v4904
  %v4995 = vpack.c.bf16 %v4907, %v4906
  %v4996 = vpack.c.bf16 %v4909, %v4908
  %v4997 = vpack.c.bf16 %v4911, %v4910
  %v4998 = vpack.c.bf16 %v4913, %v4912
  %v4999 = vpack.c.bf16 %v4915, %v4914
  %v5000 = vpack.c.bf16 %v4917, %v4916
  %v5001 = vpack.c.bf16 %v4919, %v4918
  %v5002 = vpack.c.bf16 %v4921, %v4920
  %v5003 = vpack.c.bf16 %v4923, %v4922
  %v5004 = vpack.c.bf16 %v4925, %v4924
  %v5005 = vpack.c.bf16 %v4927, %v4926
  %v5006 = vpack.c.bf16 %v4929, %v4928
  %v5007 = vpack.c.bf16 %v4931, %v4930
  %v5008 = vpack.c.bf16 %v4933, %v4932
  %v5009 = vpack.c.bf16 %v4935, %v4934
  %v5010 = vpack.c.bf16 %v4937, %v4936
  %v5011 = vpack.c.bf16 %v4939, %v4938
  %v5012 = vld [vmem:[%s4] sm:$0xff]
  %v5013 = vld [vmem:[%s4 + $0x8] sm:$0xff]
  %v5014 = vld [vmem:[%s4 + $0x10] sm:$0xff]
  %v5015 = vld [vmem:[%s4 + $0x18] sm:$0xff]
  %v5016 = vld [vmem:[%s4 + $0x20] sm:$0xf]
  %v5017 = vld [vmem:[%s4 + $0x24] sm:$0xff]
  %v5018 = vld [vmem:[%s4 + $0x2c] sm:$0xff]
  %v5019 = vld [vmem:[%s4 + $0x34] sm:$0xff]
  %v5020 = vld [vmem:[%s4 + $0x3c] sm:$0xff]
  %v5021 = vld [vmem:[%s4 + $0x44] sm:$0xf]
  %v5022 = vld [vmem:[%s4 + $0x48] sm:$0xff]
  %v5023 = vld [vmem:[%s4 + $0x50] sm:$0xff]
  %v5024 = vld [vmem:[%s4 + $0x58] sm:$0xff]
  %v5025 = vld [vmem:[%s4 + $0x60] sm:$0xff]
  %v5026 = vld [vmem:[%s4 + $0x68] sm:$0xf]
  %v5027 = vld [vmem:[%s4 + $0x6c] sm:$0xff]
  %v5028 = vld [vmem:[%s4 + $0x74] sm:$0xff]
  %v5029 = vld [vmem:[%s4 + $0x7c] sm:$0xff]
  %v5030 = vld [vmem:[%s4 + $0x84] sm:$0xff]
  %v5031 = vld [vmem:[%s4 + $0x8c] sm:$0xf]
  %v5032 = vld [vmem:[%s4 + $0x90] sm:$0xff]
  %v5033 = vld [vmem:[%s4 + $0x98] sm:$0xff]
  %v5034 = vld [vmem:[%s4 + $0xa0] sm:$0xff]
  %v5035 = vld [vmem:[%s4 + $0xa8] sm:$0xff]
  %v5036 = vld [vmem:[%s4 + $0xb0] sm:$0xf]
  %v5037 = vld [vmem:[%s4 + $0xb4] sm:$0xff]
  %v5038 = vld [vmem:[%s4 + $0xbc] sm:$0xff]
  %v5039 = vld [vmem:[%s4 + $0xc4] sm:$0xff]
  %v5040 = vld [vmem:[%s4 + $0xcc] sm:$0xff]
  %v5041 = vld [vmem:[%s4 + $0xd4] sm:$0xf]
  %v5042 = vld [vmem:[%s4 + $0xd8] sm:$0xff]
  %v5043 = vld [vmem:[%s4 + $0xe0] sm:$0xff]
  %v5044 = vld [vmem:[%s4 + $0xe8] sm:$0xff]
  %v5045 = vld [vmem:[%s4 + $0xf0] sm:$0xff]
  %v5046 = vld [vmem:[%s4 + $0xf8] sm:$0xf]
  %v5047 = vld [vmem:[%s4 + $0xfc] sm:$0xff]
  %v5048 = vld [vmem:[%s4 + $0x104] sm:$0xff]
  %v5049 = vld [vmem:[%s4 + $0x10c] sm:$0xff]
  %v5050 = vld [vmem:[%s4 + $0x114] sm:$0xff]
  %v5051 = vld [vmem:[%s4 + $0x11c] sm:$0xf]
  %v5052 = vld [vmem:[%s4 + $0x120] sm:$0xff]
  %v5053 = vld [vmem:[%s4 + $0x128] sm:$0xff]
  %v5054 = vld [vmem:[%s4 + $0x130] sm:$0xff]
  %v5055 = vld [vmem:[%s4 + $0x138] sm:$0xff]
  %v5056 = vld [vmem:[%s4 + $0x140] sm:$0xf]
  %v5057 = vld [vmem:[%s4 + $0x144] sm:$0xff]
  %v5058 = vld [vmem:[%s4 + $0x14c] sm:$0xff]
  %v5059 = vld [vmem:[%s4 + $0x154] sm:$0xff]
  %v5060 = vld [vmem:[%s4 + $0x15c] sm:$0xff]
  %v5061 = vld [vmem:[%s4 + $0x164] sm:$0xf]
  %v5062 = vld [vmem:[%s4 + $0x168] sm:$0xff]
  %v5063 = vld [vmem:[%s4 + $0x170] sm:$0xff]
  %v5064 = vld [vmem:[%s4 + $0x178] sm:$0xff]
  %v5065 = vld [vmem:[%s4 + $0x180] sm:$0xff]
  %v5066 = vld [vmem:[%s4 + $0x188] sm:$0xf]
  %v5067 = vld [vmem:[%s4 + $0x18c] sm:$0xff]
  %v5068 = vld [vmem:[%s4 + $0x194] sm:$0xff]
  %v5069 = vld [vmem:[%s4 + $0x19c] sm:$0xff]
  %v5070 = vld [vmem:[%s4 + $0x1a4] sm:$0xff]
  %v5071 = vld [vmem:[%s4 + $0x1ac] sm:$0xf]
  %v5072 = vld [vmem:[%s4 + $0x1b0] sm:$0xff]
  %v5073 = vld [vmem:[%s4 + $0x1b8] sm:$0xff]
  %v5074 = vld [vmem:[%s4 + $0x1c0] sm:$0xff]
  %v5075 = vld [vmem:[%s4 + $0x1c8] sm:$0xff]
  %v5076 = vld [vmem:[%s4 + $0x1d0] sm:$0xf]
  %v5077 = vld [vmem:[%s4 + $0x1d4] sm:$0xff]
  %v5078 = vld [vmem:[%s4 + $0x1dc] sm:$0xff]
  %v5079 = vld [vmem:[%s4 + $0x1e4] sm:$0xff]
  %v5080 = vld [vmem:[%s4 + $0x1ec] sm:$0xff]
  %v5081 = vld [vmem:[%s4 + $0x1f4] sm:$0xf]
  %v5082 = vld [vmem:[%s4 + $0x1f8] sm:$0xff]
  %v5083 = vld [vmem:[%s4 + $0x200] sm:$0xff]
  %v5084 = vld [vmem:[%s4 + $0x208] sm:$0xff]
  %v5085 = vld [vmem:[%s4 + $0x210] sm:$0xff]
  %v5086 = vld [vmem:[%s4 + $0x218] sm:$0xf]
  %v5087 = vld [vmem:[%s4 + $0x21c] sm:$0xff]
  %v5088 = vld [vmem:[%s4 + $0x224] sm:$0xff]
  %v5089 = vld [vmem:[%s4 + $0x22c] sm:$0xff]
  %v5090 = vld [vmem:[%s4 + $0x234] sm:$0xff]
  %v5091 = vld [vmem:[%s4 + $0x23c] sm:$0xf]
  %v5092 = vld [vmem:[%s4 + $0x240] sm:$0xff]
  %v5093 = vld [vmem:[%s4 + $0x248] sm:$0xff]
  %v5094 = vld [vmem:[%s4 + $0x250] sm:$0xff]
  %v5095 = vld [vmem:[%s4 + $0x258] sm:$0xff]
  %v5096 = vld [vmem:[%s4 + $0x260] sm:$0xf]
  %v5097 = vld [vmem:[%s4 + $0x264] sm:$0xff]
  %v5098 = vld [vmem:[%s4 + $0x26c] sm:$0xff]
  %v5099 = vld [vmem:[%s4 + $0x274] sm:$0xff]
  %v5100 = vld [vmem:[%s4 + $0x27c] sm:$0xff]
  %v5101 = vld [vmem:[%s4 + $0x284] sm:$0xf]
  %v5102 = vld [vmem:[%s4 + $0x288] sm:$0xff]
  %v5103 = vld [vmem:[%s4 + $0x290] sm:$0xff]
  %v5104 = vld [vmem:[%s4 + $0x298] sm:$0xff]
  %v5105 = vld [vmem:[%s4 + $0x2a0] sm:$0xff]
  %v5106 = vld [vmem:[%s4 + $0x2a8] sm:$0xf]
  %v5107 = vld [vmem:[%s4 + $0x2ac] sm:$0xff]
  %v5108 = vld [vmem:[%s4 + $0x2b4] sm:$0xff]
  %v5109 = vld [vmem:[%s4 + $0x2bc] sm:$0xff]
  %v5110 = vld [vmem:[%s4 + $0x2c4] sm:$0xff]
  %v5111 = vld [vmem:[%s4 + $0x2cc] sm:$0xf]
  %v5112 = vld [vmem:[%s4 + $0x2d0] sm:$0xff]
  %v5113 = vld [vmem:[%s4 + $0x2d8] sm:$0xff]
  %v5114 = vld [vmem:[%s4 + $0x2e0] sm:$0xff]
  %v5115 = vld [vmem:[%s4 + $0x2e8] sm:$0xff]
  %v5116 = vld [vmem:[%s4 + $0x2f0] sm:$0xf]
  %v5117 = vld [vmem:[%s4 + $0x2f4] sm:$0xff]
  %v5118 = vld [vmem:[%s4 + $0x2fc] sm:$0xff]
  %v5119 = vld [vmem:[%s4 + $0x304] sm:$0xff]
  %v5120 = vld [vmem:[%s4 + $0x30c] sm:$0xff]
  %v5121 = vld [vmem:[%s4 + $0x314] sm:$0xf]
  %v5122 = vld [vmem:[%s4 + $0x318] sm:$0xff]
  %v5123 = vld [vmem:[%s4 + $0x320] sm:$0xff]
  %v5124 = vld [vmem:[%s4 + $0x328] sm:$0xff]
  %v5125 = vld [vmem:[%s4 + $0x330] sm:$0xff]
  %v5126 = vld [vmem:[%s4 + $0x338] sm:$0xf]
  %v5127 = vld [vmem:[%s4 + $0x33c] sm:$0xff]
  %v5128 = vld [vmem:[%s4 + $0x344] sm:$0xff]
  %v5129 = vld [vmem:[%s4 + $0x34c] sm:$0xff]
  %v5130 = vld [vmem:[%s4 + $0x354] sm:$0xff]
  %v5131 = vld [vmem:[%s4 + $0x35c] sm:$0xf]
  %v5252 = vunpack.c.l.b16 %v5012
  %v5253 = vunpack.c.h.b16 %v5012
  %v5254 = vunpack.c.l.b16 %v5013
  %v5255 = vunpack.c.h.b16 %v5013
  %v5256 = vunpack.c.l.b16 %v5014
  %v5257 = vunpack.c.h.b16 %v5014
  %v5258 = vunpack.c.l.b16 %v5015
  %v5259 = vunpack.c.h.b16 %v5015
  %v5260 = vunpack.c.l.b16 %v5016
  %v5261 = vunpack.c.l.b16 %v5017
  %v5262 = vunpack.c.h.b16 %v5017
  %v5263 = vunpack.c.l.b16 %v5018
  %v5264 = vunpack.c.h.b16 %v5018
  %v5265 = vunpack.c.l.b16 %v5019
  %v5266 = vunpack.c.h.b16 %v5019
  %v5267 = vunpack.c.l.b16 %v5020
  %v5268 = vunpack.c.h.b16 %v5020
  %v5269 = vunpack.c.l.b16 %v5021
  %v5270 = vunpack.c.l.b16 %v5022
  %v5271 = vunpack.c.h.b16 %v5022
  %v5272 = vunpack.c.l.b16 %v5023
  %v5273 = vunpack.c.h.b16 %v5023
  %v5274 = vunpack.c.l.b16 %v5024
  %v5275 = vunpack.c.h.b16 %v5024
  %v5276 = vunpack.c.l.b16 %v5025
  %v5277 = vunpack.c.h.b16 %v5025
  %v5278 = vunpack.c.l.b16 %v5026
  %v5279 = vunpack.c.l.b16 %v5027
  %v5280 = vunpack.c.h.b16 %v5027
  %v5281 = vunpack.c.l.b16 %v5028
  %v5282 = vunpack.c.h.b16 %v5028
  %v5283 = vunpack.c.l.b16 %v5029
  %v5284 = vunpack.c.h.b16 %v5029
  %v5285 = vunpack.c.l.b16 %v5030
  %v5286 = vunpack.c.h.b16 %v5030
  %v5287 = vunpack.c.l.b16 %v5031
  %v5288 = vunpack.c.l.b16 %v5032
  %v5289 = vunpack.c.h.b16 %v5032
  %v5290 = vunpack.c.l.b16 %v5033
  %v5291 = vunpack.c.h.b16 %v5033
  %v5292 = vunpack.c.l.b16 %v5034
  %v5293 = vunpack.c.h.b16 %v5034
  %v5294 = vunpack.c.l.b16 %v5035
  %v5295 = vunpack.c.h.b16 %v5035
  %v5296 = vunpack.c.l.b16 %v5036
  %v5297 = vunpack.c.l.b16 %v5037
  %v5298 = vunpack.c.h.b16 %v5037
  %v5299 = vunpack.c.l.b16 %v5038
  %v5300 = vunpack.c.h.b16 %v5038
  %v5301 = vunpack.c.l.b16 %v5039
  %v5302 = vunpack.c.h.b16 %v5039
  %v5303 = vunpack.c.l.b16 %v5040
  %v5304 = vunpack.c.h.b16 %v5040
  %v5305 = vunpack.c.l.b16 %v5041
  %v5306 = vunpack.c.l.b16 %v5042
  %v5307 = vunpack.c.h.b16 %v5042
  %v5308 = vunpack.c.l.b16 %v5043
  %v5309 = vunpack.c.h.b16 %v5043
  %v5310 = vunpack.c.l.b16 %v5044
  %v5311 = vunpack.c.h.b16 %v5044
  %v5312 = vunpack.c.l.b16 %v5045
  %v5313 = vunpack.c.h.b16 %v5045
  %v5314 = vunpack.c.l.b16 %v5046
  %v5315 = vunpack.c.l.b16 %v5047
  %v5316 = vunpack.c.h.b16 %v5047
  %v5317 = vunpack.c.l.b16 %v5048
  %v5318 = vunpack.c.h.b16 %v5048
  %v5319 = vunpack.c.l.b16 %v5049
  %v5320 = vunpack.c.h.b16 %v5049
  %v5321 = vunpack.c.l.b16 %v5050
  %v5322 = vunpack.c.h.b16 %v5050
  %v5323 = vunpack.c.l.b16 %v5051
  %v5324 = vunpack.c.l.b16 %v5052
  %v5325 = vunpack.c.h.b16 %v5052
  %v5326 = vunpack.c.l.b16 %v5053
  %v5327 = vunpack.c.h.b16 %v5053
  %v5328 = vunpack.c.l.b16 %v5054
  %v5329 = vunpack.c.h.b16 %v5054
  %v5330 = vunpack.c.l.b16 %v5055
  %v5331 = vunpack.c.h.b16 %v5055
  %v5332 = vunpack.c.l.b16 %v5056
  %v5333 = vunpack.c.l.b16 %v5057
  %v5334 = vunpack.c.h.b16 %v5057
  %v5335 = vunpack.c.l.b16 %v5058
  %v5336 = vunpack.c.h.b16 %v5058
  %v5337 = vunpack.c.l.b16 %v5059
  %v5338 = vunpack.c.h.b16 %v5059
  %v5339 = vunpack.c.l.b16 %v5060
  %v5340 = vunpack.c.h.b16 %v5060
  %v5341 = vunpack.c.l.b16 %v5061
  %v5342 = vunpack.c.l.b16 %v5062
  %v5343 = vunpack.c.h.b16 %v5062
  %v5344 = vunpack.c.l.b16 %v5063
  %v5345 = vunpack.c.h.b16 %v5063
  %v5346 = vunpack.c.l.b16 %v5064
  %v5347 = vunpack.c.h.b16 %v5064
  %v5348 = vunpack.c.l.b16 %v5065
  %v5349 = vunpack.c.h.b16 %v5065
  %v5350 = vunpack.c.l.b16 %v5066
  %v5351 = vunpack.c.l.b16 %v5067
  %v5352 = vunpack.c.h.b16 %v5067
  %v5353 = vunpack.c.l.b16 %v5068
  %v5354 = vunpack.c.h.b16 %v5068
  %v5355 = vunpack.c.l.b16 %v5069
  %v5356 = vunpack.c.h.b16 %v5069
  %v5357 = vunpack.c.l.b16 %v5070
  %v5358 = vunpack.c.h.b16 %v5070
  %v5359 = vunpack.c.l.b16 %v5071
  %v5360 = vunpack.c.l.b16 %v5072
  %v5361 = vunpack.c.h.b16 %v5072
  %v5362 = vunpack.c.l.b16 %v5073
  %v5363 = vunpack.c.h.b16 %v5073
  %v5364 = vunpack.c.l.b16 %v5074
  %v5365 = vunpack.c.h.b16 %v5074
  %v5366 = vunpack.c.l.b16 %v5075
  %v5367 = vunpack.c.h.b16 %v5075
  %v5368 = vunpack.c.l.b16 %v5076
  %v5369 = vunpack.c.l.b16 %v5077
  %v5370 = vunpack.c.h.b16 %v5077
  %v5371 = vunpack.c.l.b16 %v5078
  %v5372 = vunpack.c.h.b16 %v5078
  %v5373 = vunpack.c.l.b16 %v5079
  %v5374 = vunpack.c.h.b16 %v5079
  %v5375 = vunpack.c.l.b16 %v5080
  %v5376 = vunpack.c.h.b16 %v5080
  %v5377 = vunpack.c.l.b16 %v5081
  %v5378 = vunpack.c.l.b16 %v5082
  %v5379 = vunpack.c.h.b16 %v5082
  %v5380 = vunpack.c.l.b16 %v5083
  %v5381 = vunpack.c.h.b16 %v5083
  %v5382 = vunpack.c.l.b16 %v5084
  %v5383 = vunpack.c.h.b16 %v5084
  %v5384 = vunpack.c.l.b16 %v5085
  %v5385 = vunpack.c.h.b16 %v5085
  %v5386 = vunpack.c.l.b16 %v5086
  %v5387 = vunpack.c.l.b16 %v5087
  %v5388 = vunpack.c.h.b16 %v5087
  %v5389 = vunpack.c.l.b16 %v5088
  %v5390 = vunpack.c.h.b16 %v5088
  %v5391 = vunpack.c.l.b16 %v5089
  %v5392 = vunpack.c.h.b16 %v5089
  %v5393 = vunpack.c.l.b16 %v5090
  %v5394 = vunpack.c.h.b16 %v5090
  %v5395 = vunpack.c.l.b16 %v5091
  %v5396 = vunpack.c.l.b16 %v5092
  %v5397 = vunpack.c.h.b16 %v5092
  %v5398 = vunpack.c.l.b16 %v5093
  %v5399 = vunpack.c.h.b16 %v5093
  %v5400 = vunpack.c.l.b16 %v5094
  %v5401 = vunpack.c.h.b16 %v5094
  %v5402 = vunpack.c.l.b16 %v5095
  %v5403 = vunpack.c.h.b16 %v5095
  %v5404 = vunpack.c.l.b16 %v5096
  %v5405 = vunpack.c.l.b16 %v5097
  %v5406 = vunpack.c.h.b16 %v5097
  %v5407 = vunpack.c.l.b16 %v5098
  %v5408 = vunpack.c.h.b16 %v5098
  %v5409 = vunpack.c.l.b16 %v5099
  %v5410 = vunpack.c.h.b16 %v5099
  %v5411 = vunpack.c.l.b16 %v5100
  %v5412 = vunpack.c.h.b16 %v5100
  %v5413 = vunpack.c.l.b16 %v5101
  %v5414 = vunpack.c.l.b16 %v5102
  %v5415 = vunpack.c.h.b16 %v5102
  %v5416 = vunpack.c.l.b16 %v5103
  %v5417 = vunpack.c.h.b16 %v5103
  %v5418 = vunpack.c.l.b16 %v5104
  %v5419 = vunpack.c.h.b16 %v5104
  %v5420 = vunpack.c.l.b16 %v5105
  %v5421 = vunpack.c.h.b16 %v5105
  %v5422 = vunpack.c.l.b16 %v5106
  %v5423 = vunpack.c.l.b16 %v5107
  %v5424 = vunpack.c.h.b16 %v5107
  %v5425 = vunpack.c.l.b16 %v5108
  %v5426 = vunpack.c.h.b16 %v5108
  %v5427 = vunpack.c.l.b16 %v5109
  %v5428 = vunpack.c.h.b16 %v5109
  %v5429 = vunpack.c.l.b16 %v5110
  %v5430 = vunpack.c.h.b16 %v5110
  %v5431 = vunpack.c.l.b16 %v5111
  %v5432 = vunpack.c.l.b16 %v5112
  %v5433 = vunpack.c.h.b16 %v5112
  %v5434 = vunpack.c.l.b16 %v5113
  %v5435 = vunpack.c.h.b16 %v5113
  %v5436 = vunpack.c.l.b16 %v5114
  %v5437 = vunpack.c.h.b16 %v5114
  %v5438 = vunpack.c.l.b16 %v5115
  %v5439 = vunpack.c.h.b16 %v5115
  %v5440 = vunpack.c.l.b16 %v5116
  %v5441 = vunpack.c.l.b16 %v5117
  %v5442 = vunpack.c.h.b16 %v5117
  %v5443 = vunpack.c.l.b16 %v5118
  %v5444 = vunpack.c.h.b16 %v5118
  %v5445 = vunpack.c.l.b16 %v5119
  %v5446 = vunpack.c.h.b16 %v5119
  %v5447 = vunpack.c.l.b16 %v5120
  %v5448 = vunpack.c.h.b16 %v5120
  %v5449 = vunpack.c.l.b16 %v5121
  %v5450 = vunpack.c.l.b16 %v5122
  %v5451 = vunpack.c.h.b16 %v5122
  %v5452 = vunpack.c.l.b16 %v5123
  %v5453 = vunpack.c.h.b16 %v5123
  %v5454 = vunpack.c.l.b16 %v5124
  %v5455 = vunpack.c.h.b16 %v5124
  %v5456 = vunpack.c.l.b16 %v5125
  %v5457 = vunpack.c.h.b16 %v5125
  %v5458 = vunpack.c.l.b16 %v5126
  %v5459 = vunpack.c.l.b16 %v5127
  %v5460 = vunpack.c.h.b16 %v5127
  %v5461 = vunpack.c.l.b16 %v5128
  %v5462 = vunpack.c.h.b16 %v5128
  %v5463 = vunpack.c.l.b16 %v5129
  %v5464 = vunpack.c.h.b16 %v5129
  %v5465 = vunpack.c.l.b16 %v5130
  %v5466 = vunpack.c.h.b16 %v5130
  %v5467 = vunpack.c.l.b16 %v5131
  %v5468 = vpack.c.b16 %v5261, %v5252
  %v5469 = vpack.c.b16 %v5262, %v5253
  %v5470 = vpack.c.b16 %v5263, %v5254
  %v5471 = vpack.c.b16 %v5264, %v5255
  %v5472 = vpack.c.b16 %v5265, %v5256
  %v5473 = vpack.c.b16 %v5266, %v5257
  %v5474 = vpack.c.b16 %v5267, %v5258
  %v5475 = vpack.c.b16 %v5268, %v5259
  %v5476 = vpack.c.b16 %v5269, %v5260
  %v5477 = vpack.c.b16 %v5279, %v5270
  %v5478 = vpack.c.b16 %v5280, %v5271
  %v5479 = vpack.c.b16 %v5281, %v5272
  %v5480 = vpack.c.b16 %v5282, %v5273
  %v5481 = vpack.c.b16 %v5283, %v5274
  %v5482 = vpack.c.b16 %v5284, %v5275
  %v5483 = vpack.c.b16 %v5285, %v5276
  %v5484 = vpack.c.b16 %v5286, %v5277
  %v5485 = vpack.c.b16 %v5287, %v5278
  %v5486 = vpack.c.b16 %v5297, %v5288
  %v5487 = vpack.c.b16 %v5298, %v5289
  %v5488 = vpack.c.b16 %v5299, %v5290
  %v5489 = vpack.c.b16 %v5300, %v5291
  %v5490 = vpack.c.b16 %v5301, %v5292
  %v5491 = vpack.c.b16 %v5302, %v5293
  %v5492 = vpack.c.b16 %v5303, %v5294
  %v5493 = vpack.c.b16 %v5304, %v5295
  %v5494 = vpack.c.b16 %v5305, %v5296
  %v5495 = vpack.c.b16 %v5315, %v5306
  %v5496 = vpack.c.b16 %v5316, %v5307
  %v5497 = vpack.c.b16 %v5317, %v5308
  %v5498 = vpack.c.b16 %v5318, %v5309
  %v5499 = vpack.c.b16 %v5319, %v5310
  %v5500 = vpack.c.b16 %v5320, %v5311
  %v5501 = vpack.c.b16 %v5321, %v5312
  %v5502 = vpack.c.b16 %v5322, %v5313
  %v5503 = vpack.c.b16 %v5323, %v5314
  %v5504 = vpack.c.b16 %v5333, %v5324
  %v5505 = vpack.c.b16 %v5334, %v5325
  %v5506 = vpack.c.b16 %v5335, %v5326
  %v5507 = vpack.c.b16 %v5336, %v5327
  %v5508 = vpack.c.b16 %v5337, %v5328
  %v5509 = vpack.c.b16 %v5338, %v5329
  %v5510 = vpack.c.b16 %v5339, %v5330
  %v5511 = vpack.c.b16 %v5340, %v5331
  %v5512 = vpack.c.b16 %v5341, %v5332
  %v5513 = vpack.c.b16 %v5351, %v5342
  %v5514 = vpack.c.b16 %v5352, %v5343
  %v5515 = vpack.c.b16 %v5353, %v5344
  %v5516 = vpack.c.b16 %v5354, %v5345
  %v5517 = vpack.c.b16 %v5355, %v5346
  %v5518 = vpack.c.b16 %v5356, %v5347
  %v5519 = vpack.c.b16 %v5357, %v5348
  %v5520 = vpack.c.b16 %v5358, %v5349
  %v5521 = vpack.c.b16 %v5359, %v5350
  %v5522 = vpack.c.b16 %v5369, %v5360
  %v5523 = vpack.c.b16 %v5370, %v5361
  %v5524 = vpack.c.b16 %v5371, %v5362
  %v5525 = vpack.c.b16 %v5372, %v5363
  %v5526 = vpack.c.b16 %v5373, %v5364
  %v5527 = vpack.c.b16 %v5374, %v5365
  %v5528 = vpack.c.b16 %v5375, %v5366
  %v5529 = vpack.c.b16 %v5376, %v5367
  %v5530 = vpack.c.b16 %v5377, %v5368
  %v5531 = vpack.c.b16 %v5387, %v5378
  %v5532 = vpack.c.b16 %v5388, %v5379
  %v5533 = vpack.c.b16 %v5389, %v5380
  %v5534 = vpack.c.b16 %v5390, %v5381
  %v5535 = vpack.c.b16 %v5391, %v5382
  %v5536 = vpack.c.b16 %v5392, %v5383
  %v5537 = vpack.c.b16 %v5393, %v5384
  %v5538 = vpack.c.b16 %v5394, %v5385
  %v5539 = vpack.c.b16 %v5395, %v5386
  %v5540 = vpack.c.b16 %v5405, %v5396
  %v5541 = vpack.c.b16 %v5406, %v5397
  %v5542 = vpack.c.b16 %v5407, %v5398
  %v5543 = vpack.c.b16 %v5408, %v5399
  %v5544 = vpack.c.b16 %v5409, %v5400
  %v5545 = vpack.c.b16 %v5410, %v5401
  %v5546 = vpack.c.b16 %v5411, %v5402
  %v5547 = vpack.c.b16 %v5412, %v5403
  %v5548 = vpack.c.b16 %v5413, %v5404
  %v5549 = vpack.c.b16 %v5423, %v5414
  %v5550 = vpack.c.b16 %v5424, %v5415
  %v5551 = vpack.c.b16 %v5425, %v5416
  %v5552 = vpack.c.b16 %v5426, %v5417
  %v5553 = vpack.c.b16 %v5427, %v5418
  %v5554 = vpack.c.b16 %v5428, %v5419
  %v5555 = vpack.c.b16 %v5429, %v5420
  %v5556 = vpack.c.b16 %v5430, %v5421
  %v5557 = vpack.c.b16 %v5431, %v5422
  %v5558 = vpack.c.b16 %v5441, %v5432
  %v5559 = vpack.c.b16 %v5442, %v5433
  %v5560 = vpack.c.b16 %v5443, %v5434
  %v5561 = vpack.c.b16 %v5444, %v5435
  %v5562 = vpack.c.b16 %v5445, %v5436
  %v5563 = vpack.c.b16 %v5446, %v5437
  %v5564 = vpack.c.b16 %v5447, %v5438
  %v5565 = vpack.c.b16 %v5448, %v5439
  %v5566 = vpack.c.b16 %v5449, %v5440
  %v5567 = vpack.c.b16 %v5459, %v5450
  %v5568 = vpack.c.b16 %v5460, %v5451
  %v5569 = vpack.c.b16 %v5461, %v5452
  %v5570 = vpack.c.b16 %v5462, %v5453
  %v5571 = vpack.c.b16 %v5463, %v5454
  %v5572 = vpack.c.b16 %v5464, %v5455
  %v5573 = vpack.c.b16 %v5465, %v5456
  %v5574 = vpack.c.b16 %v5466, %v5457
  %v5575 = vpack.c.b16 %v5467, %v5458
  %5684 = vmatpush.bf16.msra.mxu0 %v4947
  %5685 = vmatpush.bf16.msra.mxu0 %v4946
  %5686 = vmatpush.bf16.msra.mxu0 %v4945
  %5687 = vmatpush.bf16.msra.mxu0 %v4944
  %5688 = vmatpush.bf16.msra.mxu0 %v4943
  %5689 = vmatpush.bf16.msra.mxu0 %v4942
  %5690 = vmatpush.bf16.msra.mxu0 %v4941
  %5691 = vmatpush.bf16.msra.mxu0 %v4940
  %5692 = vmatmul.bf16.gmra.mxu0 %v5468
  %v5693 = vpop.f32.mrf.mxu0
  %v5694 = vadd.f32 0.0, %v5693
  %v5695 = vpop.f32.mrf.mxu0
  %v5696 = vadd.f32 0.0, %v5695
  %5697 = vmatmul.bf16.gmra.mxu0 %v5477
  %v5698 = vpop.f32.mrf.mxu0
  %v5699 = vadd.f32 0.0, %v5698
  %v5700 = vpop.f32.mrf.mxu0
  %v5701 = vadd.f32 0.0, %v5700
  %5702 = vmatmul.bf16.gmra.mxu0 %v5486
  %v5703 = vpop.f32.mrf.mxu0
  %v5704 = vadd.f32 0.0, %v5703
  %v5705 = vpop.f32.mrf.mxu0
  %v5706 = vadd.f32 0.0, %v5705
  %5707 = vmatmul.bf16.gmra.mxu0 %v5495
  %v5708 = vpop.f32.mrf.mxu0
  %v5709 = vadd.f32 0.0, %v5708
  %v5710 = vpop.f32.mrf.mxu0
  %v5711 = vadd.f32 0.0, %v5710
  %5712 = vmatmul.bf16.gmra.mxu0 %v5504
  %v5713 = vpop.f32.mrf.mxu0
  %v5714 = vadd.f32 0.0, %v5713
  %v5715 = vpop.f32.mrf.mxu0
  %v5716 = vadd.f32 0.0, %v5715
  %5717 = vmatmul.bf16.gmra.mxu0 %v5513
  %v5718 = vpop.f32.mrf.mxu0
  %v5719 = vadd.f32 0.0, %v5718
  %v5720 = vpop.f32.mrf.mxu0
  %v5721 = vadd.f32 0.0, %v5720
  %5722 = vmatmul.bf16.gmra.mxu0 %v5522
  %v5723 = vpop.f32.mrf.mxu0
  %v5724 = vadd.f32 0.0, %v5723
  %v5725 = vpop.f32.mrf.mxu0
  %v5726 = vadd.f32 0.0, %v5725
  %5727 = vmatmul.bf16.gmra.mxu0 %v5531
  %v5728 = vpop.f32.mrf.mxu0
  %v5729 = vadd.f32 0.0, %v5728
  %v5730 = vpop.f32.mrf.mxu0
  %v5731 = vadd.f32 0.0, %v5730
  %5732 = vmatmul.bf16.gmra.mxu0 %v5540
  %v5733 = vpop.f32.mrf.mxu0
  %v5734 = vadd.f32 0.0, %v5733
  %v5735 = vpop.f32.mrf.mxu0
  %v5736 = vadd.f32 0.0, %v5735
  %5737 = vmatmul.bf16.gmra.mxu0 %v5549
  %v5738 = vpop.f32.mrf.mxu0
  %v5739 = vadd.f32 0.0, %v5738
  %v5740 = vpop.f32.mrf.mxu0
  %v5741 = vadd.f32 0.0, %v5740
  %5742 = vmatmul.bf16.gmra.mxu0 %v5558
  %v5743 = vpop.f32.mrf.mxu0
  %v5744 = vadd.f32 0.0, %v5743
  %v5745 = vpop.f32.mrf.mxu0
  %v5746 = vadd.f32 0.0, %v5745
  %5747 = vmatmul.bf16.gmra.mxu0 %v5567
  %v5748 = vpop.f32.mrf.mxu0
  %v5749 = vadd.f32 0.0, %v5748
  %v5750 = vpop.f32.mrf.mxu0
  %v5751 = vadd.f32 0.0, %v5750
  %5752 = vdwg.mxu0
  %5753 = vmatpush.bf16.msra.mxu0 %v4955
  %5754 = vmatpush.bf16.msra.mxu0 %v4954
  %5755 = vmatpush.bf16.msra.mxu0 %v4953
  %5756 = vmatpush.bf16.msra.mxu0 %v4952
  %5757 = vmatpush.bf16.msra.mxu0 %v4951
  %5758 = vmatpush.bf16.msra.mxu0 %v4950
  %5759 = vmatpush.bf16.msra.mxu0 %v4949
  %5760 = vmatpush.bf16.msra.mxu0 %v4948
  %5761 = vmatmul.bf16.gmra.mxu0 %v5469
  %v5762 = vpop.f32.mrf.mxu0
  %v5763 = vadd.f32 %v5694, %v5762
  %v5764 = vpop.f32.mrf.mxu0
  %v5765 = vadd.f32 %v5696, %v5764
  %5766 = vmatmul.bf16.gmra.mxu0 %v5478
  %v5767 = vpop.f32.mrf.mxu0
  %v5768 = vadd.f32 %v5699, %v5767
  %v5769 = vpop.f32.mrf.mxu0
  %v5770 = vadd.f32 %v5701, %v5769
  %5771 = vmatmul.bf16.gmra.mxu0 %v5487
  %v5772 = vpop.f32.mrf.mxu0
  %v5773 = vadd.f32 %v5704, %v5772
  %v5774 = vpop.f32.mrf.mxu0
  %v5775 = vadd.f32 %v5706, %v5774
  %5776 = vmatmul.bf16.gmra.mxu0 %v5496
  %v5777 = vpop.f32.mrf.mxu0
  %v5778 = vadd.f32 %v5709, %v5777
  %v5779 = vpop.f32.mrf.mxu0
  %v5780 = vadd.f32 %v5711, %v5779
  %5781 = vmatmul.bf16.gmra.mxu0 %v5505
  %v5782 = vpop.f32.mrf.mxu0
  %v5783 = vadd.f32 %v5714, %v5782
  %v5784 = vpop.f32.mrf.mxu0
  %v5785 = vadd.f32 %v5716, %v5784
  %5786 = vmatmul.bf16.gmra.mxu0 %v5514
  %v5787 = vpop.f32.mrf.mxu0
  %v5788 = vadd.f32 %v5719, %v5787
  %v5789 = vpop.f32.mrf.mxu0
  %v5790 = vadd.f32 %v5721, %v5789
  %5791 = vmatmul.bf16.gmra.mxu0 %v5523
  %v5792 = vpop.f32.mrf.mxu0
  %v5793 = vadd.f32 %v5724, %v5792
  %v5794 = vpop.f32.mrf.mxu0
  %v5795 = vadd.f32 %v5726, %v5794
  %5796 = vmatmul.bf16.gmra.mxu0 %v5532
  %v5797 = vpop.f32.mrf.mxu0
  %v5798 = vadd.f32 %v5729, %v5797
  %v5799 = vpop.f32.mrf.mxu0
  %v5800 = vadd.f32 %v5731, %v5799
  %5801 = vmatmul.bf16.gmra.mxu0 %v5541
  %v5802 = vpop.f32.mrf.mxu0
  %v5803 = vadd.f32 %v5734, %v5802
  %v5804 = vpop.f32.mrf.mxu0
  %v5805 = vadd.f32 %v5736, %v5804
  %5806 = vmatmul.bf16.gmra.mxu0 %v5550
  %v5807 = vpop.f32.mrf.mxu0
  %v5808 = vadd.f32 %v5739, %v5807
  %v5809 = vpop.f32.mrf.mxu0
  %v5810 = vadd.f32 %v5741, %v5809
  %5811 = vmatmul.bf16.gmra.mxu0 %v5559
  %v5812 = vpop.f32.mrf.mxu0
  %v5813 = vadd.f32 %v5744, %v5812
  %v5814 = vpop.f32.mrf.mxu0
  %v5815 = vadd.f32 %v5746, %v5814
  %5816 = vmatmul.bf16.gmra.mxu0 %v5568
  %v5817 = vpop.f32.mrf.mxu0
  %v5818 = vadd.f32 %v5749, %v5817
  %v5819 = vpop.f32.mrf.mxu0
  %v5820 = vadd.f32 %v5751, %v5819
  %5821 = vdwg.mxu0
  %5822 = vmatpush.bf16.msra.mxu0 %v4963
  %5823 = vmatpush.bf16.msra.mxu0 %v4962
  %5824 = vmatpush.bf16.msra.mxu0 %v4961
  %5825 = vmatpush.bf16.msra.mxu0 %v4960
  %5826 = vmatpush.bf16.msra.mxu0 %v4959
  %5827 = vmatpush.bf16.msra.mxu0 %v4958
  %5828 = vmatpush.bf16.msra.mxu0 %v4957
  %5829 = vmatpush.bf16.msra.mxu0 %v4956
  %5830 = vmatmul.bf16.gmra.mxu0 %v5470
  %v5831 = vpop.f32.mrf.mxu0
  %v5832 = vadd.f32 %v5763, %v5831
  %v5833 = vpop.f32.mrf.mxu0
  %v5834 = vadd.f32 %v5765, %v5833
  %5835 = vmatmul.bf16.gmra.mxu0 %v5479
  %v5836 = vpop.f32.mrf.mxu0
  %v5837 = vadd.f32 %v5768, %v5836
  %v5838 = vpop.f32.mrf.mxu0
  %v5839 = vadd.f32 %v5770, %v5838
  %5840 = vmatmul.bf16.gmra.mxu0 %v5488
  %v5841 = vpop.f32.mrf.mxu0
  %v5842 = vadd.f32 %v5773, %v5841
  %v5843 = vpop.f32.mrf.mxu0
  %v5844 = vadd.f32 %v5775, %v5843
  %5845 = vmatmul.bf16.gmra.mxu0 %v5497
  %v5846 = vpop.f32.mrf.mxu0
  %v5847 = vadd.f32 %v5778, %v5846
  %v5848 = vpop.f32.mrf.mxu0
  %v5849 = vadd.f32 %v5780, %v5848
  %5850 = vmatmul.bf16.gmra.mxu0 %v5506
  %v5851 = vpop.f32.mrf.mxu0
  %v5852 = vadd.f32 %v5783, %v5851
  %v5853 = vpop.f32.mrf.mxu0
  %v5854 = vadd.f32 %v5785, %v5853
  %5855 = vmatmul.bf16.gmra.mxu0 %v5515
  %v5856 = vpop.f32.mrf.mxu0
  %v5857 = vadd.f32 %v5788, %v5856
  %v5858 = vpop.f32.mrf.mxu0
  %v5859 = vadd.f32 %v5790, %v5858
  %5860 = vmatmul.bf16.gmra.mxu0 %v5524
  %v5861 = vpop.f32.mrf.mxu0
  %v5862 = vadd.f32 %v5793, %v5861
  %v5863 = vpop.f32.mrf.mxu0
  %v5864 = vadd.f32 %v5795, %v5863
  %5865 = vmatmul.bf16.gmra.mxu0 %v5533
  %v5866 = vpop.f32.mrf.mxu0
  %v5867 = vadd.f32 %v5798, %v5866
  %v5868 = vpop.f32.mrf.mxu0
  %v5869 = vadd.f32 %v5800, %v5868
  %5870 = vmatmul.bf16.gmra.mxu0 %v5542
  %v5871 = vpop.f32.mrf.mxu0
  %v5872 = vadd.f32 %v5803, %v5871
  %v5873 = vpop.f32.mrf.mxu0
  %v5874 = vadd.f32 %v5805, %v5873
  %5875 = vmatmul.bf16.gmra.mxu0 %v5551
  %v5876 = vpop.f32.mrf.mxu0
  %v5877 = vadd.f32 %v5808, %v5876
  %v5878 = vpop.f32.mrf.mxu0
  %v5879 = vadd.f32 %v5810, %v5878
  %5880 = vmatmul.bf16.gmra.mxu0 %v5560
  %v5881 = vpop.f32.mrf.mxu0
  %v5882 = vadd.f32 %v5813, %v5881
  %v5883 = vpop.f32.mrf.mxu0
  %v5884 = vadd.f32 %v5815, %v5883
  %5885 = vmatmul.bf16.gmra.mxu0 %v5569
  %v5886 = vpop.f32.mrf.mxu0
  %v5887 = vadd.f32 %v5818, %v5886
  %v5888 = vpop.f32.mrf.mxu0
  %v5889 = vadd.f32 %v5820, %v5888
  %5890 = vdwg.mxu0
  %5891 = vmatpush.bf16.msra.mxu0 %v4971
  %5892 = vmatpush.bf16.msra.mxu0 %v4970
  %5893 = vmatpush.bf16.msra.mxu0 %v4969
  %5894 = vmatpush.bf16.msra.mxu0 %v4968
  %5895 = vmatpush.bf16.msra.mxu0 %v4967
  %5896 = vmatpush.bf16.msra.mxu0 %v4966
  %5897 = vmatpush.bf16.msra.mxu0 %v4965
  %5898 = vmatpush.bf16.msra.mxu0 %v4964
  %5899 = vmatmul.bf16.gmra.mxu0 %v5471
  %v5900 = vpop.f32.mrf.mxu0
  %v5901 = vadd.f32 %v5832, %v5900
  %v5902 = vpop.f32.mrf.mxu0
  %v5903 = vadd.f32 %v5834, %v5902
  %5904 = vmatmul.bf16.gmra.mxu0 %v5480
  %v5905 = vpop.f32.mrf.mxu0
  %v5906 = vadd.f32 %v5837, %v5905
  %v5907 = vpop.f32.mrf.mxu0
  %v5908 = vadd.f32 %v5839, %v5907
  %5909 = vmatmul.bf16.gmra.mxu0 %v5489
  %v5910 = vpop.f32.mrf.mxu0
  %v5911 = vadd.f32 %v5842, %v5910
  %v5912 = vpop.f32.mrf.mxu0
  %v5913 = vadd.f32 %v5844, %v5912
  %5914 = vmatmul.bf16.gmra.mxu0 %v5498
  %v5915 = vpop.f32.mrf.mxu0
  %v5916 = vadd.f32 %v5847, %v5915
  %v5917 = vpop.f32.mrf.mxu0
  %v5918 = vadd.f32 %v5849, %v5917
  %5919 = vmatmul.bf16.gmra.mxu0 %v5507
  %v5920 = vpop.f32.mrf.mxu0
  %v5921 = vadd.f32 %v5852, %v5920
  %v5922 = vpop.f32.mrf.mxu0
  %v5923 = vadd.f32 %v5854, %v5922
  %5924 = vmatmul.bf16.gmra.mxu0 %v5516
  %v5925 = vpop.f32.mrf.mxu0
  %v5926 = vadd.f32 %v5857, %v5925
  %v5927 = vpop.f32.mrf.mxu0
  %v5928 = vadd.f32 %v5859, %v5927
  %5929 = vmatmul.bf16.gmra.mxu0 %v5525
  %v5930 = vpop.f32.mrf.mxu0
  %v5931 = vadd.f32 %v5862, %v5930
  %v5932 = vpop.f32.mrf.mxu0
  %v5933 = vadd.f32 %v5864, %v5932
  %5934 = vmatmul.bf16.gmra.mxu0 %v5534
  %v5935 = vpop.f32.mrf.mxu0
  %v5936 = vadd.f32 %v5867, %v5935
  %v5937 = vpop.f32.mrf.mxu0
  %v5938 = vadd.f32 %v5869, %v5937
  %5939 = vmatmul.bf16.gmra.mxu0 %v5543
  %v5940 = vpop.f32.mrf.mxu0
  %v5941 = vadd.f32 %v5872, %v5940
  %v5942 = vpop.f32.mrf.mxu0
  %v5943 = vadd.f32 %v5874, %v5942
  %5944 = vmatmul.bf16.gmra.mxu0 %v5552
  %v5945 = vpop.f32.mrf.mxu0
  %v5946 = vadd.f32 %v5877, %v5945
  %v5947 = vpop.f32.mrf.mxu0
  %v5948 = vadd.f32 %v5879, %v5947
  %5949 = vmatmul.bf16.gmra.mxu0 %v5561
  %v5950 = vpop.f32.mrf.mxu0
  %v5951 = vadd.f32 %v5882, %v5950
  %v5952 = vpop.f32.mrf.mxu0
  %v5953 = vadd.f32 %v5884, %v5952
  %5954 = vmatmul.bf16.gmra.mxu0 %v5570
  %v5955 = vpop.f32.mrf.mxu0
  %v5956 = vadd.f32 %v5887, %v5955
  %v5957 = vpop.f32.mrf.mxu0
  %v5958 = vadd.f32 %v5889, %v5957
  %5959 = vdwg.mxu0
  %5960 = vmatpush.bf16.msra.mxu0 %v4979
  %5961 = vmatpush.bf16.msra.mxu0 %v4978
  %5962 = vmatpush.bf16.msra.mxu0 %v4977
  %5963 = vmatpush.bf16.msra.mxu0 %v4976
  %5964 = vmatpush.bf16.msra.mxu0 %v4975
  %5965 = vmatpush.bf16.msra.mxu0 %v4974
  %5966 = vmatpush.bf16.msra.mxu0 %v4973
  %5967 = vmatpush.bf16.msra.mxu0 %v4972
  %5968 = vmatmul.bf16.gmra.mxu0 %v5472
  %v5969 = vpop.f32.mrf.mxu0
  %v5970 = vadd.f32 %v5901, %v5969
  %v5971 = vpop.f32.mrf.mxu0
  %v5972 = vadd.f32 %v5903, %v5971
  %5973 = vmatmul.bf16.gmra.mxu0 %v5481
  %v5974 = vpop.f32.mrf.mxu0
  %v5975 = vadd.f32 %v5906, %v5974
  %v5976 = vpop.f32.mrf.mxu0
  %v5977 = vadd.f32 %v5908, %v5976
  %5978 = vmatmul.bf16.gmra.mxu0 %v5490
  %v5979 = vpop.f32.mrf.mxu0
  %v5980 = vadd.f32 %v5911, %v5979
  %v5981 = vpop.f32.mrf.mxu0
  %v5982 = vadd.f32 %v5913, %v5981
  %5983 = vmatmul.bf16.gmra.mxu0 %v5499
  %v5984 = vpop.f32.mrf.mxu0
  %v5985 = vadd.f32 %v5916, %v5984
  %v5986 = vpop.f32.mrf.mxu0
  %v5987 = vadd.f32 %v5918, %v5986
  %5988 = vmatmul.bf16.gmra.mxu0 %v5508
  %v5989 = vpop.f32.mrf.mxu0
  %v5990 = vadd.f32 %v5921, %v5989
  %v5991 = vpop.f32.mrf.mxu0
  %v5992 = vadd.f32 %v5923, %v5991
  %5993 = vmatmul.bf16.gmra.mxu0 %v5517
  %v5994 = vpop.f32.mrf.mxu0
  %v5995 = vadd.f32 %v5926, %v5994
  %v5996 = vpop.f32.mrf.mxu0
  %v5997 = vadd.f32 %v5928, %v5996
  %5998 = vmatmul.bf16.gmra.mxu0 %v5526
  %v5999 = vpop.f32.mrf.mxu0
  %v6000 = vadd.f32 %v5931, %v5999
  %v6001 = vpop.f32.mrf.mxu0
  %v6002 = vadd.f32 %v5933, %v6001
  %6003 = vmatmul.bf16.gmra.mxu0 %v5535
  %v6004 = vpop.f32.mrf.mxu0
  %v6005 = vadd.f32 %v5936, %v6004
  %v6006 = vpop.f32.mrf.mxu0
  %v6007 = vadd.f32 %v5938, %v6006
  %6008 = vmatmul.bf16.gmra.mxu0 %v5544
  %v6009 = vpop.f32.mrf.mxu0
  %v6010 = vadd.f32 %v5941, %v6009
  %v6011 = vpop.f32.mrf.mxu0
  %v6012 = vadd.f32 %v5943, %v6011
  %6013 = vmatmul.bf16.gmra.mxu0 %v5553
  %v6014 = vpop.f32.mrf.mxu0
  %v6015 = vadd.f32 %v5946, %v6014
  %v6016 = vpop.f32.mrf.mxu0
  %v6017 = vadd.f32 %v5948, %v6016
  %6018 = vmatmul.bf16.gmra.mxu0 %v5562
  %v6019 = vpop.f32.mrf.mxu0
  %v6020 = vadd.f32 %v5951, %v6019
  %v6021 = vpop.f32.mrf.mxu0
  %v6022 = vadd.f32 %v5953, %v6021
  %6023 = vmatmul.bf16.gmra.mxu0 %v5571
  %v6024 = vpop.f32.mrf.mxu0
  %v6025 = vadd.f32 %v5956, %v6024
  %v6026 = vpop.f32.mrf.mxu0
  %v6027 = vadd.f32 %v5958, %v6026
  %6028 = vdwg.mxu0
  %6029 = vmatpush.bf16.msra.mxu0 %v4987
  %6030 = vmatpush.bf16.msra.mxu0 %v4986
  %6031 = vmatpush.bf16.msra.mxu0 %v4985
  %6032 = vmatpush.bf16.msra.mxu0 %v4984
  %6033 = vmatpush.bf16.msra.mxu0 %v4983
  %6034 = vmatpush.bf16.msra.mxu0 %v4982
  %6035 = vmatpush.bf16.msra.mxu0 %v4981
  %6036 = vmatpush.bf16.msra.mxu0 %v4980
  %6037 = vmatmul.bf16.gmra.mxu0 %v5473
  %v6038 = vpop.f32.mrf.mxu0
  %v6039 = vadd.f32 %v5970, %v6038
  %v6040 = vpop.f32.mrf.mxu0
  %v6041 = vadd.f32 %v5972, %v6040
  %6042 = vmatmul.bf16.gmra.mxu0 %v5482
  %v6043 = vpop.f32.mrf.mxu0
  %v6044 = vadd.f32 %v5975, %v6043
  %v6045 = vpop.f32.mrf.mxu0
  %v6046 = vadd.f32 %v5977, %v6045
  %6047 = vmatmul.bf16.gmra.mxu0 %v5491
  %v6048 = vpop.f32.mrf.mxu0
  %v6049 = vadd.f32 %v5980, %v6048
  %v6050 = vpop.f32.mrf.mxu0
  %v6051 = vadd.f32 %v5982, %v6050
  %6052 = vmatmul.bf16.gmra.mxu0 %v5500
  %v6053 = vpop.f32.mrf.mxu0
  %v6054 = vadd.f32 %v5985, %v6053
  %v6055 = vpop.f32.mrf.mxu0
  %v6056 = vadd.f32 %v5987, %v6055
  %6057 = vmatmul.bf16.gmra.mxu0 %v5509
  %v6058 = vpop.f32.mrf.mxu0
  %v6059 = vadd.f32 %v5990, %v6058
  %v6060 = vpop.f32.mrf.mxu0
  %v6061 = vadd.f32 %v5992, %v6060
  %6062 = vmatmul.bf16.gmra.mxu0 %v5518
  %v6063 = vpop.f32.mrf.mxu0
  %v6064 = vadd.f32 %v5995, %v6063
  %v6065 = vpop.f32.mrf.mxu0
  %v6066 = vadd.f32 %v5997, %v6065
  %6067 = vmatmul.bf16.gmra.mxu0 %v5527
  %v6068 = vpop.f32.mrf.mxu0
  %v6069 = vadd.f32 %v6000, %v6068
  %v6070 = vpop.f32.mrf.mxu0
  %v6071 = vadd.f32 %v6002, %v6070
  %6072 = vmatmul.bf16.gmra.mxu0 %v5536
  %v6073 = vpop.f32.mrf.mxu0
  %v6074 = vadd.f32 %v6005, %v6073
  %v6075 = vpop.f32.mrf.mxu0
  %v6076 = vadd.f32 %v6007, %v6075
  %6077 = vmatmul.bf16.gmra.mxu0 %v5545
  %v6078 = vpop.f32.mrf.mxu0
  %v6079 = vadd.f32 %v6010, %v6078
  %v6080 = vpop.f32.mrf.mxu0
  %v6081 = vadd.f32 %v6012, %v6080
  %6082 = vmatmul.bf16.gmra.mxu0 %v5554
  %v6083 = vpop.f32.mrf.mxu0
  %v6084 = vadd.f32 %v6015, %v6083
  %v6085 = vpop.f32.mrf.mxu0
  %v6086 = vadd.f32 %v6017, %v6085
  %6087 = vmatmul.bf16.gmra.mxu0 %v5563
  %v6088 = vpop.f32.mrf.mxu0
  %v6089 = vadd.f32 %v6020, %v6088
  %v6090 = vpop.f32.mrf.mxu0
  %v6091 = vadd.f32 %v6022, %v6090
  %6092 = vmatmul.bf16.gmra.mxu0 %v5572
  %v6093 = vpop.f32.mrf.mxu0
  %v6094 = vadd.f32 %v6025, %v6093
  %v6095 = vpop.f32.mrf.mxu0
  %v6096 = vadd.f32 %v6027, %v6095
  %6097 = vdwg.mxu0
  %6098 = vmatpush.bf16.msra.mxu0 %v4995
  %6099 = vmatpush.bf16.msra.mxu0 %v4994
  %6100 = vmatpush.bf16.msra.mxu0 %v4993
  %6101 = vmatpush.bf16.msra.mxu0 %v4992
  %6102 = vmatpush.bf16.msra.mxu0 %v4991
  %6103 = vmatpush.bf16.msra.mxu0 %v4990
  %6104 = vmatpush.bf16.msra.mxu0 %v4989
  %6105 = vmatpush.bf16.msra.mxu0 %v4988
  %6106 = vmatmul.bf16.gmra.mxu0 %v5474
  %v6107 = vpop.f32.mrf.mxu0
  %v6108 = vadd.f32 %v6039, %v6107
  %v6109 = vpop.f32.mrf.mxu0
  %v6110 = vadd.f32 %v6041, %v6109
  %6111 = vmatmul.bf16.gmra.mxu0 %v5483
  %v6112 = vpop.f32.mrf.mxu0
  %v6113 = vadd.f32 %v6044, %v6112
  %v6114 = vpop.f32.mrf.mxu0
  %v6115 = vadd.f32 %v6046, %v6114
  %6116 = vmatmul.bf16.gmra.mxu0 %v5492
  %v6117 = vpop.f32.mrf.mxu0
  %v6118 = vadd.f32 %v6049, %v6117
  %v6119 = vpop.f32.mrf.mxu0
  %v6120 = vadd.f32 %v6051, %v6119
  %6121 = vmatmul.bf16.gmra.mxu0 %v5501
  %v6122 = vpop.f32.mrf.mxu0
  %v6123 = vadd.f32 %v6054, %v6122
  %v6124 = vpop.f32.mrf.mxu0
  %v6125 = vadd.f32 %v6056, %v6124
  %6126 = vmatmul.bf16.gmra.mxu0 %v5510
  %v6127 = vpop.f32.mrf.mxu0
  %v6128 = vadd.f32 %v6059, %v6127
  %v6129 = vpop.f32.mrf.mxu0
  %v6130 = vadd.f32 %v6061, %v6129
  %6131 = vmatmul.bf16.gmra.mxu0 %v5519
  %v6132 = vpop.f32.mrf.mxu0
  %v6133 = vadd.f32 %v6064, %v6132
  %v6134 = vpop.f32.mrf.mxu0
  %v6135 = vadd.f32 %v6066, %v6134
  %6136 = vmatmul.bf16.gmra.mxu0 %v5528
  %v6137 = vpop.f32.mrf.mxu0
  %v6138 = vadd.f32 %v6069, %v6137
  %v6139 = vpop.f32.mrf.mxu0
  %v6140 = vadd.f32 %v6071, %v6139
  %6141 = vmatmul.bf16.gmra.mxu0 %v5537
  %v6142 = vpop.f32.mrf.mxu0
  %v6143 = vadd.f32 %v6074, %v6142
  %v6144 = vpop.f32.mrf.mxu0
  %v6145 = vadd.f32 %v6076, %v6144
  %6146 = vmatmul.bf16.gmra.mxu0 %v5546
  %v6147 = vpop.f32.mrf.mxu0
  %v6148 = vadd.f32 %v6079, %v6147
  %v6149 = vpop.f32.mrf.mxu0
  %v6150 = vadd.f32 %v6081, %v6149
  %6151 = vmatmul.bf16.gmra.mxu0 %v5555
  %v6152 = vpop.f32.mrf.mxu0
  %v6153 = vadd.f32 %v6084, %v6152
  %v6154 = vpop.f32.mrf.mxu0
  %v6155 = vadd.f32 %v6086, %v6154
  %6156 = vmatmul.bf16.gmra.mxu0 %v5564
  %v6157 = vpop.f32.mrf.mxu0
  %v6158 = vadd.f32 %v6089, %v6157
  %v6159 = vpop.f32.mrf.mxu0
  %v6160 = vadd.f32 %v6091, %v6159
  %6161 = vmatmul.bf16.gmra.mxu0 %v5573
  %v6162 = vpop.f32.mrf.mxu0
  %v6163 = vadd.f32 %v6094, %v6162
  %v6164 = vpop.f32.mrf.mxu0
  %v6165 = vadd.f32 %v6096, %v6164
  %6166 = vdwg.mxu0
  %6167 = vmatpush.bf16.msra.mxu0 %v5003
  %6168 = vmatpush.bf16.msra.mxu0 %v5002
  %6169 = vmatpush.bf16.msra.mxu0 %v5001
  %6170 = vmatpush.bf16.msra.mxu0 %v5000
  %6171 = vmatpush.bf16.msra.mxu0 %v4999
  %6172 = vmatpush.bf16.msra.mxu0 %v4998
  %6173 = vmatpush.bf16.msra.mxu0 %v4997
  %6174 = vmatpush.bf16.msra.mxu0 %v4996
  %6175 = vmatmul.bf16.gmra.mxu0 %v5475
  %v6176 = vpop.f32.mrf.mxu0
  %v6177 = vadd.f32 %v6108, %v6176
  %v6178 = vpop.f32.mrf.mxu0
  %v6179 = vadd.f32 %v6110, %v6178
  %6180 = vmatmul.bf16.gmra.mxu0 %v5484
  %v6181 = vpop.f32.mrf.mxu0
  %v6182 = vadd.f32 %v6113, %v6181
  %v6183 = vpop.f32.mrf.mxu0
  %v6184 = vadd.f32 %v6115, %v6183
  %6185 = vmatmul.bf16.gmra.mxu0 %v5493
  %v6186 = vpop.f32.mrf.mxu0
  %v6187 = vadd.f32 %v6118, %v6186
  %v6188 = vpop.f32.mrf.mxu0
  %v6189 = vadd.f32 %v6120, %v6188
  %6190 = vmatmul.bf16.gmra.mxu0 %v5502
  %v6191 = vpop.f32.mrf.mxu0
  %v6192 = vadd.f32 %v6123, %v6191
  %v6193 = vpop.f32.mrf.mxu0
  %v6194 = vadd.f32 %v6125, %v6193
  %6195 = vmatmul.bf16.gmra.mxu0 %v5511
  %v6196 = vpop.f32.mrf.mxu0
  %v6197 = vadd.f32 %v6128, %v6196
  %v6198 = vpop.f32.mrf.mxu0
  %v6199 = vadd.f32 %v6130, %v6198
  %6200 = vmatmul.bf16.gmra.mxu0 %v5520
  %v6201 = vpop.f32.mrf.mxu0
  %v6202 = vadd.f32 %v6133, %v6201
  %v6203 = vpop.f32.mrf.mxu0
  %v6204 = vadd.f32 %v6135, %v6203
  %6205 = vmatmul.bf16.gmra.mxu0 %v5529
  %v6206 = vpop.f32.mrf.mxu0
  %v6207 = vadd.f32 %v6138, %v6206
  %v6208 = vpop.f32.mrf.mxu0
  %v6209 = vadd.f32 %v6140, %v6208
  %6210 = vmatmul.bf16.gmra.mxu0 %v5538
  %v6211 = vpop.f32.mrf.mxu0
  %v6212 = vadd.f32 %v6143, %v6211
  %v6213 = vpop.f32.mrf.mxu0
  %v6214 = vadd.f32 %v6145, %v6213
  %6215 = vmatmul.bf16.gmra.mxu0 %v5547
  %v6216 = vpop.f32.mrf.mxu0
  %v6217 = vadd.f32 %v6148, %v6216
  %v6218 = vpop.f32.mrf.mxu0
  %v6219 = vadd.f32 %v6150, %v6218
  %6220 = vmatmul.bf16.gmra.mxu0 %v5556
  %v6221 = vpop.f32.mrf.mxu0
  %v6222 = vadd.f32 %v6153, %v6221
  %v6223 = vpop.f32.mrf.mxu0
  %v6224 = vadd.f32 %v6155, %v6223
  %6225 = vmatmul.bf16.gmra.mxu0 %v5565
  %v6226 = vpop.f32.mrf.mxu0
  %v6227 = vadd.f32 %v6158, %v6226
  %v6228 = vpop.f32.mrf.mxu0
  %v6229 = vadd.f32 %v6160, %v6228
  %6230 = vmatmul.bf16.gmra.mxu0 %v5574
  %v6231 = vpop.f32.mrf.mxu0
  %v6232 = vadd.f32 %v6163, %v6231
  %v6233 = vpop.f32.mrf.mxu0
  %v6234 = vadd.f32 %v6165, %v6233
  %6235 = vdwg.mxu0
  %6236 = vmatpush.bf16.msra.mxu0 %v5011
  %6237 = vmatpush.bf16.msra.mxu0 %v5010
  %6238 = vmatpush.bf16.msra.mxu0 %v5009
  %6239 = vmatpush.bf16.msra.mxu0 %v5008
  %6240 = vmatpush.bf16.msra.mxu0 %v5007
  %6241 = vmatpush.bf16.msra.mxu0 %v5006
  %6242 = vmatpush.bf16.msra.mxu0 %v5005
  %6243 = vmatpush.bf16.msra.mxu0 %v5004
  %6244 = vmatmul.bf16.gmra.mxu0 %v5476
  %v6245 = vpop.f32.mrf.mxu0
  %v6246 = vadd.f32 %v6177, %v6245
  %v6247 = vpop.f32.mrf.mxu0
  %v6248 = vadd.f32 %v6179, %v6247
  %6249 = vmatmul.bf16.gmra.mxu0 %v5485
  %v6250 = vpop.f32.mrf.mxu0
  %v6251 = vadd.f32 %v6182, %v6250
  %v6252 = vpop.f32.mrf.mxu0
  %v6253 = vadd.f32 %v6184, %v6252
  %6254 = vmatmul.bf16.gmra.mxu0 %v5494
  %v6255 = vpop.f32.mrf.mxu0
  %v6256 = vadd.f32 %v6187, %v6255
  %v6257 = vpop.f32.mrf.mxu0
  %v6258 = vadd.f32 %v6189, %v6257
  %6259 = vmatmul.bf16.gmra.mxu0 %v5503
  %v6260 = vpop.f32.mrf.mxu0
  %v6261 = vadd.f32 %v6192, %v6260
  %v6262 = vpop.f32.mrf.mxu0
  %v6263 = vadd.f32 %v6194, %v6262
  %6264 = vmatmul.bf16.gmra.mxu0 %v5512
  %v6265 = vpop.f32.mrf.mxu0
  %v6266 = vadd.f32 %v6197, %v6265
  %v6267 = vpop.f32.mrf.mxu0
  %v6268 = vadd.f32 %v6199, %v6267
  %6269 = vmatmul.bf16.gmra.mxu0 %v5521
  %v6270 = vpop.f32.mrf.mxu0
  %v6271 = vadd.f32 %v6202, %v6270
  %v6272 = vpop.f32.mrf.mxu0
  %v6273 = vadd.f32 %v6204, %v6272
  %6274 = vmatmul.bf16.gmra.mxu0 %v5530
  %v6275 = vpop.f32.mrf.mxu0
  %v6276 = vadd.f32 %v6207, %v6275
  %v6277 = vpop.f32.mrf.mxu0
  %v6278 = vadd.f32 %v6209, %v6277
  %6279 = vmatmul.bf16.gmra.mxu0 %v5539
  %v6280 = vpop.f32.mrf.mxu0
  %v6281 = vadd.f32 %v6212, %v6280
  %v6282 = vpop.f32.mrf.mxu0
  %v6283 = vadd.f32 %v6214, %v6282
  %6284 = vmatmul.bf16.gmra.mxu0 %v5548
  %v6285 = vpop.f32.mrf.mxu0
  %v6286 = vadd.f32 %v6217, %v6285
  %v6287 = vpop.f32.mrf.mxu0
  %v6288 = vadd.f32 %v6219, %v6287
  %6289 = vmatmul.bf16.gmra.mxu0 %v5557
  %v6290 = vpop.f32.mrf.mxu0
  %v6291 = vadd.f32 %v6222, %v6290
  %v6292 = vpop.f32.mrf.mxu0
  %v6293 = vadd.f32 %v6224, %v6292
  %6294 = vmatmul.bf16.gmra.mxu0 %v5566
  %v6295 = vpop.f32.mrf.mxu0
  %v6296 = vadd.f32 %v6227, %v6295
  %v6297 = vpop.f32.mrf.mxu0
  %v6298 = vadd.f32 %v6229, %v6297
  %6299 = vmatmul.bf16.gmra.mxu0 %v5575
  %v6300 = vpop.f32.mrf.mxu0
  %v6301 = vadd.f32 %v6232, %v6300
  %v6302 = vpop.f32.mrf.mxu0
  %v6303 = vadd.f32 %v6234, %v6302
  %6304 = vdwg.mxu0
  %vm6305 = vcmask 400384
  %6306 = vst.msk [vmem:[%s5] sm:$0xff] %vm6305, %v6246
  %6307 = vst.msk [vmem:[%s5 + $0x8] sm:$0xff] %vm6305, %v6248
  %6308 = vst.msk [vmem:[%s5 + $0x10] sm:$0xff] %vm6305, %v6251
  %6309 = vst.msk [vmem:[%s5 + $0x18] sm:$0xff] %vm6305, %v6253
  %6310 = vst.msk [vmem:[%s5 + $0x20] sm:$0xff] %vm6305, %v6256
  %6311 = vst.msk [vmem:[%s5 + $0x28] sm:$0xff] %vm6305, %v6258
  %6312 = vst.msk [vmem:[%s5 + $0x30] sm:$0xff] %vm6305, %v6261
  %6313 = vst.msk [vmem:[%s5 + $0x38] sm:$0xff] %vm6305, %v6263
  %6314 = vst.msk [vmem:[%s5 + $0x40] sm:$0xff] %vm6305, %v6266
  %6315 = vst.msk [vmem:[%s5 + $0x48] sm:$0xff] %vm6305, %v6268
  %6316 = vst.msk [vmem:[%s5 + $0x50] sm:$0xff] %vm6305, %v6271
  %6317 = vst.msk [vmem:[%s5 + $0x58] sm:$0xff] %vm6305, %v6273
  %6318 = vst.msk [vmem:[%s5 + $0x60] sm:$0xff] %vm6305, %v6276
  %6319 = vst.msk [vmem:[%s5 + $0x68] sm:$0xff] %vm6305, %v6278
  %6320 = vst.msk [vmem:[%s5 + $0x70] sm:$0xff] %vm6305, %v6281
  %6321 = vst.msk [vmem:[%s5 + $0x78] sm:$0xff] %vm6305, %v6283
  %6322 = vst.msk [vmem:[%s5 + $0x80] sm:$0xff] %vm6305, %v6286
  %6323 = vst.msk [vmem:[%s5 + $0x88] sm:$0xff] %vm6305, %v6288
  %6324 = vst.msk [vmem:[%s5 + $0x90] sm:$0xff] %vm6305, %v6291
  %6325 = vst.msk [vmem:[%s5 + $0x98] sm:$0xff] %vm6305, %v6293
  %6326 = vst.msk [vmem:[%s5 + $0xa0] sm:$0xff] %vm6305, %v6296
  %6327 = vst.msk [vmem:[%s5 + $0xa8] sm:$0xff] %vm6305, %v6298
  %6328 = vst.msk [vmem:[%s5 + $0xb0] sm:$0xff] %vm6305, %v6301
  %6329 = vst.msk [vmem:[%s5 + $0xb8] sm:$0xff] %vm6305, %v6303
  // Predicated region
  $region22: #{module_forward.1} parent=0 // pred_check
    _
  $region23: #{module_forward.1} parent=0 // pred_check_branch
    %6331 = sbr.rel (0) target = $region25
  $region24: #{module_forward.1} parent=0 // pred_region
    _
  $region25: #{module_forward.1} parent=0 // pred_fallthru
    _
  // Predicated region
  $region26: #{module_forward.1} parent=0 // pred_check
    _
  $region27: #{module_forward.1} parent=0 // pred_check_branch
    %6333 = sbr.rel (0) target = $region29
  $region28: #{module_forward.1} parent=0 // pred_region
    _
  $region29: #{module_forward.1} parent=0 // pred_fallthru
    _

</llo_original>
